<compile_context>
chip_gen: v6e
topology: v6e:2x2x1
jax: 0.10.0
libtpu: 0.0.40
codegen_flags: <defaults>
</compile_context>

<pallas_src>
import functools

import jax
import jax.numpy as jnp
import numpy as np
from jax.experimental import pallas as pl
from jax.experimental.pallas import tpu as pltpu

# ----------------------------- model config ---------------------------------
MAX_LEN = 60                    # self.max_len
L_PAD = 64                      # max_len padded up to a sublane multiple (8)
WORD_EMBED = 50                 # self.word_embed_size
POS_EMBED = 5                   # self.pos_embed_size
FEATURES = WORD_EMBED + 2 * POS_EMBED     # 60 (position_embedding=True)
K_IM2COL = 3 * FEATURES                   # 180
OUT_C = 230                     # self.out_c
OUT_PAD = 256                   # lane-dense padded channel count
VALID_T = MAX_LEN - 2           # 58 valid conv positions == max_pool1d window
N_REL = 53                      # self.n_rel
VOCAB = 200                     # small vocab for the synthetic demo
SENTS_PER_BLOCK = 32            # sentences per grid step (16-64 recommended)


# ----------------------------- Pallas kernel --------------------------------
def _make_conv_pool_kernel(sents_per_block):
    def kernel(x_ref, w_ref, b_ref, o_ref, y_ref):
        # x_ref: (S*L_PAD, 180) bf16 im2col rows   w_ref: (180, 256) bf16
        # b_ref: (1, 256) f32                      o_ref: (S, 256) f32
        # y_ref: (S*L_PAD, 256) f32 VMEM scratch (full conv output)
        y_ref[...] = jnp.dot(x_ref[...], w_ref[...],
                             preferred_element_type=jnp.float32)
        # Per-sentence max over the 58 valid conv positions.  Each chunk is an
        # aligned (start % 8 == 0) static slice of the scratch; the invalid /
        # cross-sentence rows (t >= 58) are simply never read.
        rows = []
        for s in range(sents_per_block):
            start = s * L_PAD
            chunk = y_ref[start:start + VALID_T, :]          # (58, 256) f32
            rows.append(jnp.max(chunk, axis=0, keepdims=True))
        pooled = jnp.concatenate(rows, axis=0)               # (S, 256) f32
        # bias + ReLU after the max == max(ReLU(conv + b)) exactly.
        # NOTE: like the original module, zero-padded sentence rows still
        # participate in the pool (they contribute ReLU(bias)).
        o_ref[...] = jnp.maximum(pooled + b_ref[...], 0.0)

    return kernel


def _conv_relu_maxpool(x_cat, w_cat, b_pad, n_pad, sents_per_block):
    m_rows = sents_per_block * L_PAD
    grid = n_pad // sents_per_block
    return pl.pallas_call(
        _make_conv_pool_kernel(sents_per_block),
        out_shape=jax.ShapeDtypeStruct((n_pad, OUT_PAD), jnp.float32),
        grid_spec=pltpu.PrefetchScalarGridSpec(
            num_scalar_prefetch=0,
            grid=(grid,),
            in_specs=[
                pl.BlockSpec((m_rows, K_IM2COL), lambda i: (i, 0)),
                pl.BlockSpec((K_IM2COL, OUT_PAD), lambda i: (0, 0)),
                pl.BlockSpec((1, OUT_PAD), lambda i: (0, 0)),
            ],
            out_specs=pl.BlockSpec((sents_per_block, OUT_PAD),
                                   lambda i: (i, 0)),
            scratch_shapes=[pltpu.VMEM((m_rows, OUT_PAD), jnp.float32)],
        ),
        compiler_params=pltpu.CompilerParams(
            dimension_semantics=("parallel",)),
    )(x_cat, w_cat, b_pad)


# ----------------------------- feature building ------------------------------
def build_features(word_embed, pos_embed, ids, lengths, pos1, pos2):
    """Vectorized embedding lookup.  ids: (N, L_PAD) int32 -> (N, L_PAD, 60) f32
    with rows >= length zeroed (matches the original F.pad of the features)."""
    idx = jnp.arange(L_PAD, dtype=jnp.int32)
    we = jnp.take(word_embed, ids, axis=0)                        # (N, L, 50)
    pf1_ix = jnp.clip(idx[None, :] - pos1[:, None], -MAX_LEN, MAX_LEN) + MAX_LEN
    pf2_ix = jnp.clip(idx[None, :] - pos2[:, None], -MAX_LEN, MAX_LEN) + MAX_LEN
    pf1 = jnp.take(pos_embed, pf1_ix, axis=0)                     # (N, L, 5)
    pf2 = jnp.take(pos_embed, pf2_ix, axis=0)                     # (N, L, 5)
    feat = jnp.concatenate([we, pf1, pf2], axis=-1)               # (N, L, 60)
    mask = (idx[None, :] < lengths[:, None])[..., None]
    return jnp.where(mask, feat, 0.0).astype(jnp.float32)


@functools.partial(jax.jit, static_argnames=("sents_per_block",))
def featurize_and_pool(word_embed, pos_embed, conv_w, conv_b,
                       ids, lengths, pos1, pos2, *, sents_per_block):
    n_pad = ids.shape[0]
    feat = build_features(word_embed, pos_embed, ids, lengths, pos1, pos2)
    x = feat.astype(jnp.bfloat16).reshape(n_pad * L_PAD, FEATURES)
    # im2col along the sequence: row r holds features of rows r, r+1, r+2.
    # Wrap-around / cross-sentence rows only feed conv positions t >= 58,
    # which the kernel never reads.
    x_cat = jnp.concatenate(
        [x, jnp.roll(x, -1, axis=0), jnp.roll(x, -2, axis=0)], axis=1)
    w_cat = jnp.pad(conv_w.reshape(K_IM2COL, OUT_C),
                    ((0, 0), (0, OUT_PAD - OUT_C))).astype(jnp.bfloat16)
    b_pad = jnp.pad(conv_b, ((0, 0), (0, OUT_PAD - OUT_C)))
    pooled = _conv_relu_maxpool(x_cat, w_cat, b_pad, n_pad, sents_per_block)
    return pooled[:, :OUT_C]


# ----------------------------- host-side glue --------------------------------
def _pack_sentences(sents, multiple):
    """Pack (token_ids, pos1, pos2) tuples into padded arrays; bucket N."""
    n = len(sents)
    n_pad = max(multiple, ((n + multiple - 1) // multiple) * multiple)
    ids = np.zeros((n_pad, L_PAD), np.int32)
    lengths = np.zeros((n_pad,), np.int32)
    pos1 = np.zeros((n_pad,), np.int32)
    pos2 = np.zeros((n_pad,), np.int32)
    for i, (tok, p1, p2) in enumerate(sents):
        t = np.asarray(tok, np.int32)[:MAX_LEN]
        ids[i, :t.shape[0]] = t
        lengths[i] = t.shape[0]
        pos1[i] = p1
        pos2[i] = p2
    return (jnp.asarray(ids), jnp.asarray(lengths),
            jnp.asarray(pos1), jnp.asarray(pos2), n)


def create_features_for_bag(params, bags, labels):
    """Mirrors Lstm_crf_att._create_features_for_bag (pe=True, with labels)."""
    word_embed, pos_embed, r_embed, conv_w, conv_b = params
    max_bag_len = max(len(bag) for bag in bags)
    r_embeds = r_embed[jnp.asarray(labels, jnp.int32)]            # (B, 230)

    sents = [item for bag in bags for item in bag]
    ids, lengths, pos1, pos2, n_real = _pack_sentences(sents, SENTS_PER_BLOCK)
    pooled = featurize_and_pool(word_embed, pos_embed, conv_w, conv_b,
                                ids, lengths, pos1, pos2,
                                sents_per_block=SENTS_PER_BLOCK)
    pooled = pooled[:n_real]

    # split back per bag; pad the bag dimension to max_bag_len
    # TODO(synk): original F.pad indexes dim 2 of a 2-D tensor (upstream bug);
    # we pad the bag dimension as intended.
    batch_features = []
    off = 0
    for bag in bags:
        nb = len(bag)
        bag_feat = jnp.pad(pooled[off:off + nb],
                           ((0, max_bag_len - nb), (0, 0)))
        batch_features.append(bag_feat)
        off += nb
    return jnp.stack(batch_features, axis=0), r_embeds


def init_params(key):
    ks = jax.random.split(key, 5)
    word_embed = 0.1 * jax.random.normal(ks[0], (VOCAB, WORD_EMBED), jnp.float32)
    pos_embed = 0.1 * jax.random.normal(ks[1], (2 * MAX_LEN + 1, POS_EMBED),
                                        jnp.float32)
    r_embed = 0.1 * jax.random.normal(ks[2], (N_REL, OUT_C), jnp.float32)
    # conv weight stored tap-major: conv_w[k, f, c] == torch_w[c, 0, k, f]
    conv_w = 0.05 * jax.random.normal(ks[3], (3, FEATURES, OUT_C), jnp.float32)
    conv_b = 0.05 * jax.random.normal(ks[4], (1, OUT_C), jnp.float32)
    return word_embed, pos_embed, r_embed, conv_w, conv_b


def _reference_conv_relu_maxpool(feat, conv_w, conv_b):
    """Plain-JAX reference on bf16-rounded inputs (same cast as the kernel)."""
    x = feat[:, :MAX_LEN, :].astype(jnp.bfloat16).astype(jnp.float32)
    w = conv_w.astype(jnp.bfloat16).astype(jnp.float32)
    hp = jax.lax.Precision.HIGHEST
    t = VALID_T
    acc = (jnp.einsum("nlf,fc->nlc", x[:, 0:t], w[0], precision=hp) +
           jnp.einsum("nlf,fc->nlc", x[:, 1:t + 1], w[1], precision=hp) +
           jnp.einsum("nlf,fc->nlc", x[:, 2:t + 2], w[2], precision=hp))
    return jnp.max(jnp.maximum(acc + conv_b[None], 0.0), axis=1)


if __name__ == "__main__":
    key = jax.random.PRNGKey(0)
    params = init_params(key)
    word_embed, pos_embed, r_embed, conv_w, conv_b = params

    rng = np.random.RandomState(0)

    def make_sent(length):
        tok = rng.randint(0, VOCAB, size=(length,)).astype(np.int32)
        p1, p2 = sorted(rng.randint(0, length, size=2).tolist())
        return tok, int(p1), int(p2)

    bags = [
        [make_sent(12), make_sent(20)],
        [make_sent(8), make_sent(15), make_sent(30)],
    ]
    labels = [3, 17]

    batch_features, r_embeds = create_features_for_bag(params, bags, labels)
    batch_features = jax.block_until_ready(batch_features)
    r_embeds = jax.block_until_ready(r_embeds)
    assert batch_features.shape == (2, 3, OUT_C)
    assert r_embeds.shape == (2, OUT_C)

    # correctness of the Pallas hot path against a plain-JAX reference
    sents = [item for bag in bags for item in bag]
    ids, lengths, pos1, pos2, n_real = _pack_sentences(sents, SENTS_PER_BLOCK)
    got = featurize_and_pool(word_embed, pos_embed, conv_w, conv_b,
                             ids, lengths, pos1, pos2,
                             sents_per_block=SENTS_PER_BLOCK)[:n_real]
    got = jax.block_until_ready(got)
    feat = build_features(word_embed, pos_embed, ids, lengths, pos1, pos2)
    ref = _reference_conv_relu_maxpool(feat[:n_real], conv_w, conv_b)
    np.testing.assert_allclose(np.asarray(got), np.asarray(ref),
                               rtol=5e-3, atol=5e-4)
    print("KERNEL_OK")
</pallas_src>

<mosaic_0001>
module attributes {stable_mosaic.version = 11 : i64} {
  func.func @kernel(%arg0: i32, %arg1: memref<2048x180xbf16, #tpu.memory_space<vmem>>, %arg2: memref<180x256xbf16, #tpu.memory_space<vmem>>, %arg3: memref<1x256xf32, #tpu.memory_space<vmem>>, %arg4: memref<32x256xf32, #tpu.memory_space<vmem>>, %arg5: memref<2048x256xf32, #tpu.memory_space<vmem>>) attributes {dimension_semantics = [#tpu.dimension_semantics<parallel>], iteration_bounds = array<i64: 1>, scalar_prefetch = 0 : i64, scratch_operands = 1 : i64, tpu.core_type = #tpu.core_type<tc>, window_params = [{transform_indices = @transform_0, window_bounds = array<i64: 2048, 180>}, {pipeline_mode = #tpu.pipeline_mode<synchronous>, transform_indices = @transform_1, window_bounds = array<i64: 180, 256>}, {pipeline_mode = #tpu.pipeline_mode<synchronous>, transform_indices = @transform_2, window_bounds = array<i64: 1, 256>}, {transform_indices = @transform_3, window_bounds = array<i64: 32, 256>}]} {
    %c0 = arith.constant 0 : index
    %c0_0 = arith.constant 0 : index
    %0 = vector.load %arg1[%c0, %c0_0] : memref<2048x180xbf16, #tpu.memory_space<vmem>>, vector<2048x180xbf16>
    %c0_1 = arith.constant 0 : index
    %c0_2 = arith.constant 0 : index
    %1 = vector.load %arg2[%c0_1, %c0_2] : memref<180x256xbf16, #tpu.memory_space<vmem>>, vector<180x256xbf16>
    %cst = arith.constant dense<0.000000e+00> : vector<2048x256xf32>
    %2 = tpu.matmul %0, %1, %cst {dimension_numbers = #tpu.dot_dimension_numbers<[1], [0], [0], [1], [0, 0, 1, 1], [], []>} : vector<2048x180xbf16>, vector<180x256xbf16>, vector<2048x256xf32> -> vector<2048x256xf32>
    %c0_3 = arith.constant 0 : index
    %c0_4 = arith.constant 0 : index
    %3 = vector.load %arg5[%c0_3, %c0_4] : memref<2048x256xf32, #tpu.memory_space<vmem>>, vector<2048x256xf32>
    tpu.vector_store %arg5[%c0_3, %c0_4], %2 {strides = array<i32>} : memref<2048x256xf32, #tpu.memory_space<vmem>>, vector<2048x256xf32>,
    %c0_5 = arith.constant 0 : index
    %c0_6 = arith.constant 0 : index
    %4 = vector.load %arg5[%c0_5, %c0_6] : memref<2048x256xf32, #tpu.memory_space<vmem>>, vector<58x256xf32>
    %cst_7 = arith.constant dense<0xFF800000> : vector<256xf32>
    %5 = vector.multi_reduction <maximumf>, %4, %cst_7 [0] : vector<58x256xf32> to vector<256xf32>
    %6 = vector.shape_cast %5 : vector<256xf32> to vector<1x256xf32>
    %c64 = arith.constant 64 : index
    %c0_8 = arith.constant 0 : index
    %7 = vector.load %arg5[%c64, %c0_8] : memref<2048x256xf32, #tpu.memory_space<vmem>>, vector<58x256xf32>
    %cst_9 = arith.constant dense<0xFF800000> : vector<256xf32>
    %8 = vector.multi_reduction <maximumf>, %7, %cst_9 [0] : vector<58x256xf32> to vector<256xf32>
    %9 = vector.shape_cast %8 : vector<256xf32> to vector<1x256xf32>
    %c128 = arith.constant 128 : index
    %c0_10 = arith.constant 0 : index
    %10 = vector.load %arg5[%c128, %c0_10] : memref<2048x256xf32, #tpu.memory_space<vmem>>, vector<58x256xf32>
    %cst_11 = arith.constant dense<0xFF800000> : vector<256xf32>
    %11 = vector.multi_reduction <maximumf>, %10, %cst_11 [0] : vector<58x256xf32> to vector<256xf32>
    %12 = vector.shape_cast %11 : vector<256xf32> to vector<1x256xf32>
    %c192 = arith.constant 192 : index
    %c0_12 = arith.constant 0 : index
    %13 = vector.load %arg5[%c192, %c0_12] : memref<2048x256xf32, #tpu.memory_space<vmem>>, vector<58x256xf32>
    %cst_13 = arith.constant dense<0xFF800000> : vector<256xf32>
    %14 = vector.multi_reduction <maximumf>, %13, %cst_13 [0] : vector<58x256xf32> to vector<256xf32>
    %15 = vector.shape_cast %14 : vector<256xf32> to vector<1x256xf32>
    %c256 = arith.constant 256 : index
    %c0_14 = arith.constant 0 : index
    %16 = vector.load %arg5[%c256, %c0_14] : memref<2048x256xf32, #tpu.memory_space<vmem>>, vector<58x256xf32>
    %cst_15 = arith.constant dense<0xFF800000> : vector<256xf32>
    %17 = vector.multi_reduction <maximumf>, %16, %cst_15 [0] : vector<58x256xf32> to vector<256xf32>
    %18 = vector.shape_cast %17 : vector<256xf32> to vector<1x256xf32>
    %c320 = arith.constant 320 : index
    %c0_16 = arith.constant 0 : index
    %19 = vector.load %arg5[%c320, %c0_16] : memref<2048x256xf32, #tpu.memory_space<vmem>>, vector<58x256xf32>
    %cst_17 = arith.constant dense<0xFF800000> : vector<256xf32>
    %20 = vector.multi_reduction <maximumf>, %19, %cst_17 [0] : vector<58x256xf32> to vector<256xf32>
    %21 = vector.shape_cast %20 : vector<256xf32> to vector<1x256xf32>
    %c384 = arith.constant 384 : index
    %c0_18 = arith.constant 0 : index
    %22 = vector.load %arg5[%c384, %c0_18] : memref<2048x256xf32, #tpu.memory_space<vmem>>, vector<58x256xf32>
    %cst_19 = arith.constant dense<0xFF800000> : vector<256xf32>
    %23 = vector.multi_reduction <maximumf>, %22, %cst_19 [0] : vector<58x256xf32> to vector<256xf32>
    %24 = vector.shape_cast %23 : vector<256xf32> to vector<1x256xf32>
    %c448 = arith.constant 448 : index
    %c0_20 = arith.constant 0 : index
    %25 = vector.load %arg5[%c448, %c0_20] : memref<2048x256xf32, #tpu.memory_space<vmem>>, vector<58x256xf32>
    %cst_21 = arith.constant dense<0xFF800000> : vector<256xf32>
    %26 = vector.multi_reduction <maximumf>, %25, %cst_21 [0] : vector<58x256xf32> to vector<256xf32>
    %27 = vector.shape_cast %26 : vector<256xf32> to vector<1x256xf32>
    %c512 = arith.constant 512 : index
    %c0_22 = arith.constant 0 : index
    %28 = vector.load %arg5[%c512, %c0_22] : memref<2048x256xf32, #tpu.memory_space<vmem>>, vector<58x256xf32>
    %cst_23 = arith.constant dense<0xFF800000> : vector<256xf32>
    %29 = vector.multi_reduction <maximumf>, %28, %cst_23 [0] : vector<58x256xf32> to vector<256xf32>
    %30 = vector.shape_cast %29 : vector<256xf32> to vector<1x256xf32>
    %c576 = arith.constant 576 : index
    %c0_24 = arith.constant 0 : index
    %31 = vector.load %arg5[%c576, %c0_24] : memref<2048x256xf32, #tpu.memory_space<vmem>>, vector<58x256xf32>
    %cst_25 = arith.constant dense<0xFF800000> : vector<256xf32>
    %32 = vector.multi_reduction <maximumf>, %31, %cst_25 [0] : vector<58x256xf32> to vector<256xf32>
    %33 = vector.shape_cast %32 : vector<256xf32> to vector<1x256xf32>
    %c640 = arith.constant 640 : index
    %c0_26 = arith.constant 0 : index
    %34 = vector.load %arg5[%c640, %c0_26] : memref<2048x256xf32, #tpu.memory_space<vmem>>, vector<58x256xf32>
    %cst_27 = arith.constant dense<0xFF800000> : vector<256xf32>
    %35 = vector.multi_reduction <maximumf>, %34, %cst_27 [0] : vector<58x256xf32> to vector<256xf32>
    %36 = vector.shape_cast %35 : vector<256xf32> to vector<1x256xf32>
    %c704 = arith.constant 704 : index
    %c0_28 = arith.constant 0 : index
    %37 = vector.load %arg5[%c704, %c0_28] : memref<2048x256xf32, #tpu.memory_space<vmem>>, vector<58x256xf32>
    %cst_29 = arith.constant dense<0xFF800000> : vector<256xf32>
    %38 = vector.multi_reduction <maximumf>, %37, %cst_29 [0] : vector<58x256xf32> to vector<256xf32>
    %39 = vector.shape_cast %38 : vector<256xf32> to vector<1x256xf32>
    %c768 = arith.constant 768 : index
    %c0_30 = arith.constant 0 : index
    %40 = vector.load %arg5[%c768, %c0_30] : memref<2048x256xf32, #tpu.memory_space<vmem>>, vector<58x256xf32>
    %cst_31 = arith.constant dense<0xFF800000> : vector<256xf32>
    %41 = vector.multi_reduction <maximumf>, %40, %cst_31 [0] : vector<58x256xf32> to vector<256xf32>
    %42 = vector.shape_cast %41 : vector<256xf32> to vector<1x256xf32>
    %c832 = arith.constant 832 : index
    %c0_32 = arith.constant 0 : index
    %43 = vector.load %arg5[%c832, %c0_32] : memref<2048x256xf32, #tpu.memory_space<vmem>>, vector<58x256xf32>
    %cst_33 = arith.constant dense<0xFF800000> : vector<256xf32>
    %44 = vector.multi_reduction <maximumf>, %43, %cst_33 [0] : vector<58x256xf32> to vector<256xf32>
    %45 = vector.shape_cast %44 : vector<256xf32> to vector<1x256xf32>
    %c896 = arith.constant 896 : index
    %c0_34 = arith.constant 0 : index
    %46 = vector.load %arg5[%c896, %c0_34] : memref<2048x256xf32, #tpu.memory_space<vmem>>, vector<58x256xf32>
    %cst_35 = arith.constant dense<0xFF800000> : vector<256xf32>
    %47 = vector.multi_reduction <maximumf>, %46, %cst_35 [0] : vector<58x256xf32> to vector<256xf32>
    %48 = vector.shape_cast %47 : vector<256xf32> to vector<1x256xf32>
    %c960 = arith.constant 960 : index
    %c0_36 = arith.constant 0 : index
    %49 = vector.load %arg5[%c960, %c0_36] : memref<2048x256xf32, #tpu.memory_space<vmem>>, vector<58x256xf32>
    %cst_37 = arith.constant dense<0xFF800000> : vector<256xf32>
    %50 = vector.multi_reduction <maximumf>, %49, %cst_37 [0] : vector<58x256xf32> to vector<256xf32>
    %51 = vector.shape_cast %50 : vector<256xf32> to vector<1x256xf32>
    %c1024 = arith.constant 1024 : index
    %c0_38 = arith.constant 0 : index
    %52 = vector.load %arg5[%c1024, %c0_38] : memref<2048x256xf32, #tpu.memory_space<vmem>>, vector<58x256xf32>
    %cst_39 = arith.constant dense<0xFF800000> : vector<256xf32>
    %53 = vector.multi_reduction <maximumf>, %52, %cst_39 [0] : vector<58x256xf32> to vector<256xf32>
    %54 = vector.shape_cast %53 : vector<256xf32> to vector<1x256xf32>
    %c1088 = arith.constant 1088 : index
    %c0_40 = arith.constant 0 : index
    %55 = vector.load %arg5[%c1088, %c0_40] : memref<2048x256xf32, #tpu.memory_space<vmem>>, vector<58x256xf32>
    %cst_41 = arith.constant dense<0xFF800000> : vector<256xf32>
    %56 = vector.multi_reduction <maximumf>, %55, %cst_41 [0] : vector<58x256xf32> to vector<256xf32>
    %57 = vector.shape_cast %56 : vector<256xf32> to vector<1x256xf32>
    %c1152 = arith.constant 1152 : index
    %c0_42 = arith.constant 0 : index
    %58 = vector.load %arg5[%c1152, %c0_42] : memref<2048x256xf32, #tpu.memory_space<vmem>>, vector<58x256xf32>
    %cst_43 = arith.constant dense<0xFF800000> : vector<256xf32>
    %59 = vector.multi_reduction <maximumf>, %58, %cst_43 [0] : vector<58x256xf32> to vector<256xf32>
    %60 = vector.shape_cast %59 : vector<256xf32> to vector<1x256xf32>
    %c1216 = arith.constant 1216 : index
    %c0_44 = arith.constant 0 : index
    %61 = vector.load %arg5[%c1216, %c0_44] : memref<2048x256xf32, #tpu.memory_space<vmem>>, vector<58x256xf32>
    %cst_45 = arith.constant dense<0xFF800000> : vector<256xf32>
    %62 = vector.multi_reduction <maximumf>, %61, %cst_45 [0] : vector<58x256xf32> to vector<256xf32>
    %63 = vector.shape_cast %62 : vector<256xf32> to vector<1x256xf32>
    %c1280 = arith.constant 1280 : index
    %c0_46 = arith.constant 0 : index
    %64 = vector.load %arg5[%c1280, %c0_46] : memref<2048x256xf32, #tpu.memory_space<vmem>>, vector<58x256xf32>
    %cst_47 = arith.constant dense<0xFF800000> : vector<256xf32>
    %65 = vector.multi_reduction <maximumf>, %64, %cst_47 [0] : vector<58x256xf32> to vector<256xf32>
    %66 = vector.shape_cast %65 : vector<256xf32> to vector<1x256xf32>
    %c1344 = arith.constant 1344 : index
    %c0_48 = arith.constant 0 : index
    %67 = vector.load %arg5[%c1344, %c0_48] : memref<2048x256xf32, #tpu.memory_space<vmem>>, vector<58x256xf32>
    %cst_49 = arith.constant dense<0xFF800000> : vector<256xf32>
    %68 = vector.multi_reduction <maximumf>, %67, %cst_49 [0] : vector<58x256xf32> to vector<256xf32>
    %69 = vector.shape_cast %68 : vector<256xf32> to vector<1x256xf32>
    %c1408 = arith.constant 1408 : index
    %c0_50 = arith.constant 0 : index
    %70 = vector.load %arg5[%c1408, %c0_50] : memref<2048x256xf32, #tpu.memory_space<vmem>>, vector<58x256xf32>
    %cst_51 = arith.constant dense<0xFF800000> : vector<256xf32>
    %71 = vector.multi_reduction <maximumf>, %70, %cst_51 [0] : vector<58x256xf32> to vector<256xf32>
    %72 = vector.shape_cast %71 : vector<256xf32> to vector<1x256xf32>
    %c1472 = arith.constant 1472 : index
    %c0_52 = arith.constant 0 : index
    %73 = vector.load %arg5[%c1472, %c0_52] : memref<2048x256xf32, #tpu.memory_space<vmem>>, vector<58x256xf32>
    %cst_53 = arith.constant dense<0xFF800000> : vector<256xf32>
    %74 = vector.multi_reduction <maximumf>, %73, %cst_53 [0] : vector<58x256xf32> to vector<256xf32>
    %75 = vector.shape_cast %74 : vector<256xf32> to vector<1x256xf32>
    %c1536 = arith.constant 1536 : index
    %c0_54 = arith.constant 0 : index
    %76 = vector.load %arg5[%c1536, %c0_54] : memref<2048x256xf32, #tpu.memory_space<vmem>>, vector<58x256xf32>
    %cst_55 = arith.constant dense<0xFF800000> : vector<256xf32>
    %77 = vector.multi_reduction <maximumf>, %76, %cst_55 [0] : vector<58x256xf32> to vector<256xf32>
    %78 = vector.shape_cast %77 : vector<256xf32> to vector<1x256xf32>
    %c1600 = arith.constant 1600 : index
    %c0_56 = arith.constant 0 : index
    %79 = vector.load %arg5[%c1600, %c0_56] : memref<2048x256xf32, #tpu.memory_space<vmem>>, vector<58x256xf32>
    %cst_57 = arith.constant dense<0xFF800000> : vector<256xf32>
    %80 = vector.multi_reduction <maximumf>, %79, %cst_57 [0] : vector<58x256xf32> to vector<256xf32>
    %81 = vector.shape_cast %80 : vector<256xf32> to vector<1x256xf32>
    %c1664 = arith.constant 1664 : index
    %c0_58 = arith.constant 0 : index
    %82 = vector.load %arg5[%c1664, %c0_58] : memref<2048x256xf32, #tpu.memory_space<vmem>>, vector<58x256xf32>
    %cst_59 = arith.constant dense<0xFF800000> : vector<256xf32>
    %83 = vector.multi_reduction <maximumf>, %82, %cst_59 [0] : vector<58x256xf32> to vector<256xf32>
    %84 = vector.shape_cast %83 : vector<256xf32> to vector<1x256xf32>
    %c1728 = arith.constant 1728 : index
    %c0_60 = arith.constant 0 : index
    %85 = vector.load %arg5[%c1728, %c0_60] : memref<2048x256xf32, #tpu.memory_space<vmem>>, vector<58x256xf32>
    %cst_61 = arith.constant dense<0xFF800000> : vector<256xf32>
    %86 = vector.multi_reduction <maximumf>, %85, %cst_61 [0] : vector<58x256xf32> to vector<256xf32>
    %87 = vector.shape_cast %86 : vector<256xf32> to vector<1x256xf32>
    %c1792 = arith.constant 1792 : index
    %c0_62 = arith.constant 0 : index
    %88 = vector.load %arg5[%c1792, %c0_62] : memref<2048x256xf32, #tpu.memory_space<vmem>>, vector<58x256xf32>
    %cst_63 = arith.constant dense<0xFF800000> : vector<256xf32>
    %89 = vector.multi_reduction <maximumf>, %88, %cst_63 [0] : vector<58x256xf32> to vector<256xf32>
    %90 = vector.shape_cast %89 : vector<256xf32> to vector<1x256xf32>
    %c1856 = arith.constant 1856 : index
    %c0_64 = arith.constant 0 : index
    %91 = vector.load %arg5[%c1856, %c0_64] : memref<2048x256xf32, #tpu.memory_space<vmem>>, vector<58x256xf32>
    %cst_65 = arith.constant dense<0xFF800000> : vector<256xf32>
    %92 = vector.multi_reduction <maximumf>, %91, %cst_65 [0] : vector<58x256xf32> to vector<256xf32>
    %93 = vector.shape_cast %92 : vector<256xf32> to vector<1x256xf32>
    %c1920 = arith.constant 1920 : index
    %c0_66 = arith.constant 0 : index
    %94 = vector.load %arg5[%c1920, %c0_66] : memref<2048x256xf32, #tpu.memory_space<vmem>>, vector<58x256xf32>
    %cst_67 = arith.constant dense<0xFF800000> : vector<256xf32>
    %95 = vector.multi_reduction <maximumf>, %94, %cst_67 [0] : vector<58x256xf32> to vector<256xf32>
    %96 = vector.shape_cast %95 : vector<256xf32> to vector<1x256xf32>
    %c1984 = arith.constant 1984 : index
    %c0_68 = arith.constant 0 : index
    %97 = vector.load %arg5[%c1984, %c0_68] : memref<2048x256xf32, #tpu.memory_space<vmem>>, vector<58x256xf32>
    %cst_69 = arith.constant dense<0xFF800000> : vector<256xf32>
    %98 = vector.multi_reduction <maximumf>, %97, %cst_69 [0] : vector<58x256xf32> to vector<256xf32>
    %99 = vector.shape_cast %98 : vector<256xf32> to vector<1x256xf32>
    %100 = tpu.concatenate %6, %9, %12, %15, %18, %21, %24, %27, %30, %33, %36, %39, %42, %45, %48, %51 in 0 : vector<1x256xf32>, vector<1x256xf32>, vector<1x256xf32>, vector<1x256xf32>, vector<1x256xf32>, vector<1x256xf32>, vector<1x256xf32>, vector<1x256xf32>, vector<1x256xf32>, vector<1x256xf32>, vector<1x256xf32>, vector<1x256xf32>, vector<1x256xf32>, vector<1x256xf32>, vector<1x256xf32>, vector<1x256xf32> -> vector<16x256xf32>
    %101 = tpu.concatenate %54, %57, %60, %63, %66, %69, %72, %75, %78, %81, %84, %87, %90, %93, %96, %99 in 0 : vector<1x256xf32>, vector<1x256xf32>, vector<1x256xf32>, vector<1x256xf32>, vector<1x256xf32>, vector<1x256xf32>, vector<1x256xf32>, vector<1x256xf32>, vector<1x256xf32>, vector<1x256xf32>, vector<1x256xf32>, vector<1x256xf32>, vector<1x256xf32>, vector<1x256xf32>, vector<1x256xf32>, vector<1x256xf32> -> vector<16x256xf32>
    %102 = tpu.concatenate %100, %101 in 0 : vector<16x256xf32>, vector<16x256xf32> -> vector<32x256xf32>
    %c0_70 = arith.constant 0 : index
    %c0_71 = arith.constant 0 : index
    %103 = vector.load %arg3[%c0_70, %c0_71] : memref<1x256xf32, #tpu.memory_space<vmem>>, vector<1x256xf32>
    %104 = vector.broadcast %103 : vector<1x256xf32> to vector<32x256xf32>
    %105 = arith.addf %102, %104 : vector<32x256xf32>
    %cst_72 = arith.constant 0.000000e+00 : f32
    %106 = vector.broadcast %cst_72 : f32 to vector<32x256xf32>
    %107 = arith.maximumf %105, %106 : vector<32x256xf32>
    %c0_73 = arith.constant 0 : index
    %c0_74 = arith.constant 0 : index
    %108 = vector.load %arg4[%c0_73, %c0_74] : memref<32x256xf32, #tpu.memory_space<vmem>>, vector<32x256xf32>
    tpu.vector_store %arg4[%c0_73, %c0_74], %107 {strides = array<i32>} : memref<32x256xf32, #tpu.memory_space<vmem>>, vector<32x256xf32>,
    return
  }
  func.func @transform_0(%arg0: i32) -> (i32, i32) {
    %c0_i32 = arith.constant 0 : i32
    %c0_i32_0 = arith.constant 0 : i32
    return %arg0, %c0_i32 : i32, i32
  }
  func.func @transform_1(%arg0: i32) -> (i32, i32) {
    %c0_i32 = arith.constant 0 : i32
    %c0_i32_0 = arith.constant 0 : i32
    %c0_i32_1 = arith.constant 0 : i32
    return %c0_i32, %c0_i32_0 : i32, i32
  }
  func.func @transform_2(%arg0: i32) -> (i32, i32) {
    %c0_i32 = arith.constant 0 : i32
    %c0_i32_0 = arith.constant 0 : i32
    %c0_i32_1 = arith.constant 0 : i32
    return %c0_i32, %c0_i32_0 : i32, i32
  }
  func.func @transform_3(%arg0: i32) -> (i32, i32) {
    %c0_i32 = arith.constant 0 : i32
    %c0_i32_0 = arith.constant 0 : i32
    return %arg0, %c0_i32 : i32, i32
  }
}

</mosaic_0001>

<llo_original>
// kernel: featurize_and_pool.1
$region0: #{featurize_and_pool.1}
  #allocation0 [shape = 'u32[]', space=smem, size = 0x4, offset = 0x4, fixed_abs, tag = 'smem constant byte address 0x4 - core index']
  #allocation1 [shape = 'u32[144,128]{1,0:T(1,128)}', space=vmem, size = 0x12000, scoped, tag = 'internal scratch']
  #allocation2 [shape = 'f32[2048,256]{1,0:T(8,128)}', space=vmem, size = 0x200000, scoped, tag = 'scratch operand']
  %s0 = inlined_call_operand.vmem [shape: bf16[2048,180], index: 0, kind: input, shape index: {}]
  %s1 = inlined_call_operand.vmem [shape: bf16[180,256], index: 1, kind: input, shape index: {}]
  %s2 = inlined_call_operand.vmem [shape: f32[1,256], index: 2, kind: input, shape index: {}]
  %s3 = inlined_call_operand.hbm [shape: f32[32,256], index: 3, kind: output, shape index: {}]
  %s4 = sld [smem:[#allocation0]]
  $region22: #{featurize_and_pool.1} parent=0
    _
  %s6 = ssub.s32 1, %s4
  %s7 = scalar_select 0, %s6, %s4
  $region1: #{featurize_and_pool.1} parent=0
    #allocation3 [shape = 'u8[32768]{0}', space=vmem, size = 0x8000, scoped, tag = 'output window, operand 0, single buffered']
    #allocation4 [shape = 's32[1]{0}', space=sflag, size = 0x4, scoped, tag = 'scoped memory for featurize_and_pool.1']
    %8 = vsyncpa [#allocation4], 0
    // Predicated region
    $region2: #{featurize_and_pool.1} parent=1 // pred_check
      _
    $region3: #{featurize_and_pool.1} parent=1 // pred_check_branch
      %10 = sbr.rel (0) target = $region5
    $region4: #{featurize_and_pool.1} parent=1 // pred_region
      _
    $region5: #{featurize_and_pool.1} parent=1 // pred_fallthru
      _
    // Predicated region
    $region6: #{featurize_and_pool.1} parent=1 // pred_check
      _
    $region7: #{featurize_and_pool.1} parent=1 // pred_check_branch
      %12 = sbr.rel (0) target = $region9
    $region8: #{featurize_and_pool.1} parent=1 // pred_region
      _
    $region9: #{featurize_and_pool.1} parent=1 // pred_fallthru
      _
    // Predicated region
    $region10: #{featurize_and_pool.1} parent=1 // pred_check
      _
    $region11: #{featurize_and_pool.1} parent=1 // pred_check_branch
      %14 = sbr.rel (0) target = $region13
    $region12: #{featurize_and_pool.1} parent=1 // pred_region
      _
    $region13: #{featurize_and_pool.1} parent=1 // pred_fallthru
      _
    %v16 = vld [vmem:[%s0] sm:$0xff]
    %v17 = vld [vmem:[%s0 + $0x8] sm:$0xff]
    %v18 = vld [vmem:[%s0 + $0x10] sm:$0xff]
    %v19 = vld [vmem:[%s0 + $0x18] sm:$0xff]
    %v20 = vld [vmem:[%s0 + $0x20] sm:$0xff]
    %v21 = vld [vmem:[%s0 + $0x28] sm:$0xff]
    %v22 = vld [vmem:[%s0 + $0x30] sm:$0xff]
    %v23 = vld [vmem:[%s0 + $0x38] sm:$0xff]
    %v24 = vld [vmem:[%s0 + $0x40] sm:$0xff]
    %v25 = vld [vmem:[%s0 + $0x48] sm:$0xff]
    %v26 = vld [vmem:[%s0 + $0x50] sm:$0xff]
    %v27 = vld [vmem:[%s0 + $0x58] sm:$0xff]
    %v28 = vld [vmem:[%s0 + $0x60] sm:$0xff]
    %v29 = vld [vmem:[%s0 + $0x68] sm:$0xff]
    %v30 = vld [vmem:[%s0 + $0x70] sm:$0xff]
    %v31 = vld [vmem:[%s0 + $0x78] sm:$0xff]
    %v32 = vld [vmem:[%s0 + $0x80] sm:$0xff]
    %v33 = vld [vmem:[%s0 + $0x88] sm:$0xff]
    %v34 = vld [vmem:[%s0 + $0x90] sm:$0xff]
    %v35 = vld [vmem:[%s0 + $0x98] sm:$0xff]
    %v36 = vld [vmem:[%s0 + $0xa0] sm:$0xff]
    %v37 = vld [vmem:[%s0 + $0xa8] sm:$0xff]
    %v38 = vld [vmem:[%s0 + $0xb0] sm:$0xff]
    %v39 = vld [vmem:[%s0 + $0xb8] sm:$0xff]
    %v40 = vld [vmem:[%s0 + $0xc0] sm:$0xff]
    %v41 = vld [vmem:[%s0 + $0xc8] sm:$0xff]
    %v42 = vld [vmem:[%s0 + $0xd0] sm:$0xff]
    %v43 = vld [vmem:[%s0 + $0xd8] sm:$0xff]
    %v44 = vld [vmem:[%s0 + $0xe0] sm:$0xff]
    %v45 = vld [vmem:[%s0 + $0xe8] sm:$0xff]
    %v46 = vld [vmem:[%s0 + $0xf0] sm:$0xff]
    %v47 = vld [vmem:[%s0 + $0xf8] sm:$0xff]
    %v48 = vld [vmem:[%s0 + $0x100] sm:$0xff]
    %v49 = vld [vmem:[%s0 + $0x108] sm:$0xff]
    %v50 = vld [vmem:[%s0 + $0x110] sm:$0xff]
    %v51 = vld [vmem:[%s0 + $0x118] sm:$0xff]
    %v52 = vld [vmem:[%s0 + $0x120] sm:$0xff]
    %v53 = vld [vmem:[%s0 + $0x128] sm:$0xff]
    %v54 = vld [vmem:[%s0 + $0x130] sm:$0xff]
    %v55 = vld [vmem:[%s0 + $0x138] sm:$0xff]
    %v56 = vld [vmem:[%s0 + $0x140] sm:$0xff]
    %v57 = vld [vmem:[%s0 + $0x148] sm:$0xff]
    %v58 = vld [vmem:[%s0 + $0x150] sm:$0xff]
    %v59 = vld [vmem:[%s0 + $0x158] sm:$0xff]
    %v60 = vld [vmem:[%s0 + $0x160] sm:$0xff]
    %v61 = vld [vmem:[%s0 + $0x168] sm:$0xff]
    %v62 = vld [vmem:[%s0 + $0x170] sm:$0xff]
    %v63 = vld [vmem:[%s0 + $0x178] sm:$0xff]
    %v64 = vld [vmem:[%s0 + $0x180] sm:$0xff]
    %v65 = vld [vmem:[%s0 + $0x188] sm:$0xff]
    %v66 = vld [vmem:[%s0 + $0x190] sm:$0xff]
    %v67 = vld [vmem:[%s0 + $0x198] sm:$0xff]
    %v68 = vld [vmem:[%s0 + $0x1a0] sm:$0xff]
    %v69 = vld [vmem:[%s0 + $0x1a8] sm:$0xff]
    %v70 = vld [vmem:[%s0 + $0x1b0] sm:$0xff]
    %v71 = vld [vmem:[%s0 + $0x1b8] sm:$0xff]
    %v72 = vld [vmem:[%s0 + $0x1c0] sm:$0xff]
    %v73 = vld [vmem:[%s0 + $0x1c8] sm:$0xff]
    %v74 = vld [vmem:[%s0 + $0x1d0] sm:$0xff]
    %v75 = vld [vmem:[%s0 + $0x1d8] sm:$0xff]
    %v76 = vld [vmem:[%s0 + $0x1e0] sm:$0xff]
    %v77 = vld [vmem:[%s0 + $0x1e8] sm:$0xff]
    %v78 = vld [vmem:[%s0 + $0x1f0] sm:$0xff]
    %v79 = vld [vmem:[%s0 + $0x1f8] sm:$0xff]
    %v80 = vld [vmem:[%s0 + $0x200] sm:$0xff]
    %v81 = vld [vmem:[%s0 + $0x208] sm:$0xff]
    %v82 = vld [vmem:[%s0 + $0x210] sm:$0xff]
    %v83 = vld [vmem:[%s0 + $0x218] sm:$0xff]
    %v84 = vld [vmem:[%s0 + $0x220] sm:$0xff]
    %v85 = vld [vmem:[%s0 + $0x228] sm:$0xff]
    %v86 = vld [vmem:[%s0 + $0x230] sm:$0xff]
    %v87 = vld [vmem:[%s0 + $0x238] sm:$0xff]
    %v88 = vld [vmem:[%s0 + $0x240] sm:$0xff]
    %v89 = vld [vmem:[%s0 + $0x248] sm:$0xff]
    %v90 = vld [vmem:[%s0 + $0x250] sm:$0xff]
    %v91 = vld [vmem:[%s0 + $0x258] sm:$0xff]
    %v92 = vld [vmem:[%s0 + $0x260] sm:$0xff]
    %v93 = vld [vmem:[%s0 + $0x268] sm:$0xff]
    %v94 = vld [vmem:[%s0 + $0x270] sm:$0xff]
    %v95 = vld [vmem:[%s0 + $0x278] sm:$0xff]
    %v96 = vld [vmem:[%s0 + $0x280] sm:$0xff]
    %v97 = vld [vmem:[%s0 + $0x288] sm:$0xff]
    %v98 = vld [vmem:[%s0 + $0x290] sm:$0xff]
    %v99 = vld [vmem:[%s0 + $0x298] sm:$0xff]
    %v100 = vld [vmem:[%s0 + $0x2a0] sm:$0xff]
    %v101 = vld [vmem:[%s0 + $0x2a8] sm:$0xff]
    %v102 = vld [vmem:[%s0 + $0x2b0] sm:$0xff]
    %v103 = vld [vmem:[%s0 + $0x2b8] sm:$0xff]
    %v104 = vld [vmem:[%s0 + $0x2c0] sm:$0xff]
    %v105 = vld [vmem:[%s0 + $0x2c8] sm:$0xff]
    %v106 = vld [vmem:[%s0 + $0x2d0] sm:$0xff]
    %v107 = vld [vmem:[%s0 + $0x2d8] sm:$0xff]
    %v108 = vld [vmem:[%s0 + $0x2e0] sm:$0xff]
    %v109 = vld [vmem:[%s0 + $0x2e8] sm:$0xff]
    %v110 = vld [vmem:[%s0 + $0x2f0] sm:$0xff]
    %v111 = vld [vmem:[%s0 + $0x2f8] sm:$0xff]
    %v112 = vld [vmem:[%s0 + $0x300] sm:$0xff]
    %v113 = vld [vmem:[%s0 + $0x308] sm:$0xff]
    %v114 = vld [vmem:[%s0 + $0x310] sm:$0xff]
    %v115 = vld [vmem:[%s0 + $0x318] sm:$0xff]
    %v116 = vld [vmem:[%s0 + $0x320] sm:$0xff]
    %v117 = vld [vmem:[%s0 + $0x328] sm:$0xff]
    %v118 = vld [vmem:[%s0 + $0x330] sm:$0xff]
    %v119 = vld [vmem:[%s0 + $0x338] sm:$0xff]
    %v120 = vld [vmem:[%s0 + $0x340] sm:$0xff]
    %v121 = vld [vmem:[%s0 + $0x348] sm:$0xff]
    %v122 = vld [vmem:[%s0 + $0x350] sm:$0xff]
    %v123 = vld [vmem:[%s0 + $0x358] sm:$0xff]
    %v124 = vld [vmem:[%s0 + $0x360] sm:$0xff]
    %v125 = vld [vmem:[%s0 + $0x368] sm:$0xff]
    %v126 = vld [vmem:[%s0 + $0x370] sm:$0xff]
    %v127 = vld [vmem:[%s0 + $0x378] sm:$0xff]
    %v128 = vld [vmem:[%s0 + $0x380] sm:$0xff]
    %v129 = vld [vmem:[%s0 + $0x388] sm:$0xff]
    %v130 = vld [vmem:[%s0 + $0x390] sm:$0xff]
    %v131 = vld [vmem:[%s0 + $0x398] sm:$0xff]
    %v132 = vld [vmem:[%s0 + $0x3a0] sm:$0xff]
    %v133 = vld [vmem:[%s0 + $0x3a8] sm:$0xff]
    %v134 = vld [vmem:[%s0 + $0x3b0] sm:$0xff]
    %v135 = vld [vmem:[%s0 + $0x3b8] sm:$0xff]
    %v136 = vld [vmem:[%s0 + $0x3c0] sm:$0xff]
    %v137 = vld [vmem:[%s0 + $0x3c8] sm:$0xff]
    %v138 = vld [vmem:[%s0 + $0x3d0] sm:$0xff]
    %v139 = vld [vmem:[%s0 + $0x3d8] sm:$0xff]
    %v140 = vld [vmem:[%s0 + $0x3e0] sm:$0xff]
    %v141 = vld [vmem:[%s0 + $0x3e8] sm:$0xff]
    %v142 = vld [vmem:[%s0 + $0x3f0] sm:$0xff]
    %v143 = vld [vmem:[%s0 + $0x3f8] sm:$0xff]
    %v144 = vld [vmem:[%s0 + $0x400] sm:$0xff]
    %v145 = vld [vmem:[%s0 + $0x408] sm:$0xff]
    %v146 = vld [vmem:[%s0 + $0x410] sm:$0xff]
    %v147 = vld [vmem:[%s0 + $0x418] sm:$0xff]
    %v148 = vld [vmem:[%s0 + $0x420] sm:$0xff]
    %v149 = vld [vmem:[%s0 + $0x428] sm:$0xff]
    %v150 = vld [vmem:[%s0 + $0x430] sm:$0xff]
    %v151 = vld [vmem:[%s0 + $0x438] sm:$0xff]
    %v152 = vld [vmem:[%s0 + $0x440] sm:$0xff]
    %v153 = vld [vmem:[%s0 + $0x448] sm:$0xff]
    %v154 = vld [vmem:[%s0 + $0x450] sm:$0xff]
    %v155 = vld [vmem:[%s0 + $0x458] sm:$0xff]
    %v156 = vld [vmem:[%s0 + $0x460] sm:$0xff]
    %v157 = vld [vmem:[%s0 + $0x468] sm:$0xff]
    %v158 = vld [vmem:[%s0 + $0x470] sm:$0xff]
    %v159 = vld [vmem:[%s0 + $0x478] sm:$0xff]
    %v160 = vld [vmem:[%s0 + $0x480] sm:$0xff]
    %v161 = vld [vmem:[%s0 + $0x488] sm:$0xff]
    %v162 = vld [vmem:[%s0 + $0x490] sm:$0xff]
    %v163 = vld [vmem:[%s0 + $0x498] sm:$0xff]
    %v164 = vld [vmem:[%s0 + $0x4a0] sm:$0xff]
    %v165 = vld [vmem:[%s0 + $0x4a8] sm:$0xff]
    %v166 = vld [vmem:[%s0 + $0x4b0] sm:$0xff]
    %v167 = vld [vmem:[%s0 + $0x4b8] sm:$0xff]
    %v168 = vld [vmem:[%s0 + $0x4c0] sm:$0xff]
    %v169 = vld [vmem:[%s0 + $0x4c8] sm:$0xff]
    %v170 = vld [vmem:[%s0 + $0x4d0] sm:$0xff]
    %v171 = vld [vmem:[%s0 + $0x4d8] sm:$0xff]
    %v172 = vld [vmem:[%s0 + $0x4e0] sm:$0xff]
    %v173 = vld [vmem:[%s0 + $0x4e8] sm:$0xff]
    %v174 = vld [vmem:[%s0 + $0x4f0] sm:$0xff]
    %v175 = vld [vmem:[%s0 + $0x4f8] sm:$0xff]
    %v176 = vld [vmem:[%s0 + $0x500] sm:$0xff]
    %v177 = vld [vmem:[%s0 + $0x508] sm:$0xff]
    %v178 = vld [vmem:[%s0 + $0x510] sm:$0xff]
    %v179 = vld [vmem:[%s0 + $0x518] sm:$0xff]
    %v180 = vld [vmem:[%s0 + $0x520] sm:$0xff]
    %v181 = vld [vmem:[%s0 + $0x528] sm:$0xff]
    %v182 = vld [vmem:[%s0 + $0x530] sm:$0xff]
    %v183 = vld [vmem:[%s0 + $0x538] sm:$0xff]
    %v184 = vld [vmem:[%s0 + $0x540] sm:$0xff]
    %v185 = vld [vmem:[%s0 + $0x548] sm:$0xff]
    %v186 = vld [vmem:[%s0 + $0x550] sm:$0xff]
    %v187 = vld [vmem:[%s0 + $0x558] sm:$0xff]
    %v188 = vld [vmem:[%s0 + $0x560] sm:$0xff]
    %v189 = vld [vmem:[%s0 + $0x568] sm:$0xff]
    %v190 = vld [vmem:[%s0 + $0x570] sm:$0xff]
    %v191 = vld [vmem:[%s0 + $0x578] sm:$0xff]
    %v192 = vld [vmem:[%s0 + $0x580] sm:$0xff]
    %v193 = vld [vmem:[%s0 + $0x588] sm:$0xff]
    %v194 = vld [vmem:[%s0 + $0x590] sm:$0xff]
    %v195 = vld [vmem:[%s0 + $0x598] sm:$0xff]
    %v196 = vld [vmem:[%s0 + $0x5a0] sm:$0xff]
    %v197 = vld [vmem:[%s0 + $0x5a8] sm:$0xff]
    %v198 = vld [vmem:[%s0 + $0x5b0] sm:$0xff]
    %v199 = vld [vmem:[%s0 + $0x5b8] sm:$0xff]
    %v200 = vld [vmem:[%s0 + $0x5c0] sm:$0xff]
    %v201 = vld [vmem:[%s0 + $0x5c8] sm:$0xff]
    %v202 = vld [vmem:[%s0 + $0x5d0] sm:$0xff]
    %v203 = vld [vmem:[%s0 + $0x5d8] sm:$0xff]
    %v204 = vld [vmem:[%s0 + $0x5e0] sm:$0xff]
    %v205 = vld [vmem:[%s0 + $0x5e8] sm:$0xff]
    %v206 = vld [vmem:[%s0 + $0x5f0] sm:$0xff]
    %v207 = vld [vmem:[%s0 + $0x5f8] sm:$0xff]
    %v208 = vld [vmem:[%s0 + $0x600] sm:$0xff]
    %v209 = vld [vmem:[%s0 + $0x608] sm:$0xff]
    %v210 = vld [vmem:[%s0 + $0x610] sm:$0xff]
    %v211 = vld [vmem:[%s0 + $0x618] sm:$0xff]
    %v212 = vld [vmem:[%s0 + $0x620] sm:$0xff]
    %v213 = vld [vmem:[%s0 + $0x628] sm:$0xff]
    %v214 = vld [vmem:[%s0 + $0x630] sm:$0xff]
    %v215 = vld [vmem:[%s0 + $0x638] sm:$0xff]
    %v216 = vld [vmem:[%s0 + $0x640] sm:$0xff]
    %v217 = vld [vmem:[%s0 + $0x648] sm:$0xff]
    %v218 = vld [vmem:[%s0 + $0x650] sm:$0xff]
    %v219 = vld [vmem:[%s0 + $0x658] sm:$0xff]
    %v220 = vld [vmem:[%s0 + $0x660] sm:$0xff]
    %v221 = vld [vmem:[%s0 + $0x668] sm:$0xff]
    %v222 = vld [vmem:[%s0 + $0x670] sm:$0xff]
    %v223 = vld [vmem:[%s0 + $0x678] sm:$0xff]
    %v224 = vld [vmem:[%s0 + $0x680] sm:$0xff]
    %v225 = vld [vmem:[%s0 + $0x688] sm:$0xff]
    %v226 = vld [vmem:[%s0 + $0x690] sm:$0xff]
    %v227 = vld [vmem:[%s0 + $0x698] sm:$0xff]
    %v228 = vld [vmem:[%s0 + $0x6a0] sm:$0xff]
    %v229 = vld [vmem:[%s0 + $0x6a8] sm:$0xff]
    %v230 = vld [vmem:[%s0 + $0x6b0] sm:$0xff]
    %v231 = vld [vmem:[%s0 + $0x6b8] sm:$0xff]
    %v232 = vld [vmem:[%s0 + $0x6c0] sm:$0xff]
    %v233 = vld [vmem:[%s0 + $0x6c8] sm:$0xff]
    %v234 = vld [vmem:[%s0 + $0x6d0] sm:$0xff]
    %v235 = vld [vmem:[%s0 + $0x6d8] sm:$0xff]
    %v236 = vld [vmem:[%s0 + $0x6e0] sm:$0xff]
    %v237 = vld [vmem:[%s0 + $0x6e8] sm:$0xff]
    %v238 = vld [vmem:[%s0 + $0x6f0] sm:$0xff]
    %v239 = vld [vmem:[%s0 + $0x6f8] sm:$0xff]
    %v240 = vld [vmem:[%s0 + $0x700] sm:$0xff]
    %v241 = vld [vmem:[%s0 + $0x708] sm:$0xff]
    %v242 = vld [vmem:[%s0 + $0x710] sm:$0xff]
    %v243 = vld [vmem:[%s0 + $0x718] sm:$0xff]
    %v244 = vld [vmem:[%s0 + $0x720] sm:$0xff]
    %v245 = vld [vmem:[%s0 + $0x728] sm:$0xff]
    %v246 = vld [vmem:[%s0 + $0x730] sm:$0xff]
    %v247 = vld [vmem:[%s0 + $0x738] sm:$0xff]
    %v248 = vld [vmem:[%s0 + $0x740] sm:$0xff]
    %v249 = vld [vmem:[%s0 + $0x748] sm:$0xff]
    %v250 = vld [vmem:[%s0 + $0x750] sm:$0xff]
    %v251 = vld [vmem:[%s0 + $0x758] sm:$0xff]
    %v252 = vld [vmem:[%s0 + $0x760] sm:$0xff]
    %v253 = vld [vmem:[%s0 + $0x768] sm:$0xff]
    %v254 = vld [vmem:[%s0 + $0x770] sm:$0xff]
    %v255 = vld [vmem:[%s0 + $0x778] sm:$0xff]
    %v256 = vld [vmem:[%s0 + $0x780] sm:$0xff]
    %v257 = vld [vmem:[%s0 + $0x788] sm:$0xff]
    %v258 = vld [vmem:[%s0 + $0x790] sm:$0xff]
    %v259 = vld [vmem:[%s0 + $0x798] sm:$0xff]
    %v260 = vld [vmem:[%s0 + $0x7a0] sm:$0xff]
    %v261 = vld [vmem:[%s0 + $0x7a8] sm:$0xff]
    %v262 = vld [vmem:[%s0 + $0x7b0] sm:$0xff]
    %v263 = vld [vmem:[%s0 + $0x7b8] sm:$0xff]
    %v264 = vld [vmem:[%s0 + $0x7c0] sm:$0xff]
    %v265 = vld [vmem:[%s0 + $0x7c8] sm:$0xff]
    %v266 = vld [vmem:[%s0 + $0x7d0] sm:$0xff]
    %v267 = vld [vmem:[%s0 + $0x7d8] sm:$0xff]
    %v268 = vld [vmem:[%s0 + $0x7e0] sm:$0xff]
    %v269 = vld [vmem:[%s0 + $0x7e8] sm:$0xff]
    %v270 = vld [vmem:[%s0 + $0x7f0] sm:$0xff]
    %v271 = vld [vmem:[%s0 + $0x7f8] sm:$0xff]
    %v272 = vld [vmem:[%s1] sm:$0xff]
    %v273 = vld [vmem:[%s1 + $0x8] sm:$0xff]
    %v274 = vld [vmem:[%s1 + $0x10] sm:$0xff]
    %v275 = vld [vmem:[%s1 + $0x18] sm:$0xff]
    %v276 = vld [vmem:[%s1 + $0x20] sm:$0xff]
    %v277 = vld [vmem:[%s1 + $0x28] sm:$0xff]
    %v278 = vld [vmem:[%s1 + $0x30] sm:$0xff]
    %v279 = vld [vmem:[%s1 + $0x38] sm:$0xff]
    %v280 = vld [vmem:[%s1 + $0x40] sm:$0xff]
    %v281 = vld [vmem:[%s1 + $0x48] sm:$0xff]
    %v282 = vld [vmem:[%s1 + $0x50] sm:$0xff]
    %v283 = vld [vmem:[%s1 + $0x58] sm:$0xff]
    %v284 = vld [vmem:[%s1 + $0x60] sm:$0xff]
    %v285 = vld [vmem:[%s1 + $0x68] sm:$0xff]
    %v286 = vld [vmem:[%s1 + $0x70] sm:$0xff]
    %v287 = vld [vmem:[%s1 + $0x78] sm:$0xff]
    %v288 = vld [vmem:[%s1 + $0x80] sm:$0xff]
    %v289 = vld [vmem:[%s1 + $0x88] sm:$0xff]
    %v290 = vld [vmem:[%s1 + $0x90] sm:$0xff]
    %v291 = vld [vmem:[%s1 + $0x98] sm:$0xff]
    %v292 = vld [vmem:[%s1 + $0xa0] sm:$0xff]
    %v293 = vld [vmem:[%s1 + $0xa8] sm:$0xff]
    %v294 = vld [vmem:[%s1 + $0xb0] sm:$0x33]
    %v551 = vunpack.c.l.b16 %v16
    %v552 = vunpack.c.h.b16 %v16
    %v553 = vunpack.c.l.b16 %v17
    %v554 = vunpack.c.h.b16 %v17
    %v555 = vunpack.c.l.b16 %v18
    %v556 = vunpack.c.h.b16 %v18
    %v557 = vunpack.c.l.b16 %v19
    %v558 = vunpack.c.h.b16 %v19
    %v559 = vunpack.c.l.b16 %v20
    %v560 = vunpack.c.h.b16 %v20
    %v561 = vunpack.c.l.b16 %v21
    %v562 = vunpack.c.h.b16 %v21
    %v563 = vunpack.c.l.b16 %v22
    %v564 = vunpack.c.h.b16 %v22
    %v565 = vunpack.c.l.b16 %v23
    %v566 = vunpack.c.h.b16 %v23
    %v567 = vunpack.c.l.b16 %v24
    %v568 = vunpack.c.h.b16 %v24
    %v569 = vunpack.c.l.b16 %v25
    %v570 = vunpack.c.h.b16 %v25
    %v571 = vunpack.c.l.b16 %v26
    %v572 = vunpack.c.h.b16 %v26
    %v573 = vunpack.c.l.b16 %v27
    %v574 = vunpack.c.h.b16 %v27
    %v575 = vunpack.c.l.b16 %v28
    %v576 = vunpack.c.h.b16 %v28
    %v577 = vunpack.c.l.b16 %v29
    %v578 = vunpack.c.h.b16 %v29
    %v579 = vunpack.c.l.b16 %v30
    %v580 = vunpack.c.h.b16 %v30
    %v581 = vunpack.c.l.b16 %v31
    %v582 = vunpack.c.h.b16 %v31
    %v583 = vunpack.c.l.b16 %v32
    %v584 = vunpack.c.h.b16 %v32
    %v585 = vunpack.c.l.b16 %v33
    %v586 = vunpack.c.h.b16 %v33
    %v587 = vunpack.c.l.b16 %v34
    %v588 = vunpack.c.h.b16 %v34
    %v589 = vunpack.c.l.b16 %v35
    %v590 = vunpack.c.h.b16 %v35
    %v591 = vunpack.c.l.b16 %v36
    %v592 = vunpack.c.h.b16 %v36
    %v593 = vunpack.c.l.b16 %v37
    %v594 = vunpack.c.h.b16 %v37
    %v595 = vunpack.c.l.b16 %v38
    %v596 = vunpack.c.h.b16 %v38
    %v597 = vunpack.c.l.b16 %v39
    %v598 = vunpack.c.h.b16 %v39
    %v599 = vunpack.c.l.b16 %v40
    %v600 = vunpack.c.h.b16 %v40
    %v601 = vunpack.c.l.b16 %v41
    %v602 = vunpack.c.h.b16 %v41
    %v603 = vunpack.c.l.b16 %v42
    %v604 = vunpack.c.h.b16 %v42
    %v605 = vunpack.c.l.b16 %v43
    %v606 = vunpack.c.h.b16 %v43
    %v607 = vunpack.c.l.b16 %v44
    %v608 = vunpack.c.h.b16 %v44
    %v609 = vunpack.c.l.b16 %v45
    %v610 = vunpack.c.h.b16 %v45
    %v611 = vunpack.c.l.b16 %v46
    %v612 = vunpack.c.h.b16 %v46
    %v613 = vunpack.c.l.b16 %v47
    %v614 = vunpack.c.h.b16 %v47
    %v615 = vunpack.c.l.b16 %v48
    %v616 = vunpack.c.h.b16 %v48
    %v617 = vunpack.c.l.b16 %v49
    %v618 = vunpack.c.h.b16 %v49
    %v619 = vunpack.c.l.b16 %v50
    %v620 = vunpack.c.h.b16 %v50
    %v621 = vunpack.c.l.b16 %v51
    %v622 = vunpack.c.h.b16 %v51
    %v623 = vunpack.c.l.b16 %v52
    %v624 = vunpack.c.h.b16 %v52
    %v625 = vunpack.c.l.b16 %v53
    %v626 = vunpack.c.h.b16 %v53
    %v627 = vunpack.c.l.b16 %v54
    %v628 = vunpack.c.h.b16 %v54
    %v629 = vunpack.c.l.b16 %v55
    %v630 = vunpack.c.h.b16 %v55
    %v631 = vunpack.c.l.b16 %v56
    %v632 = vunpack.c.h.b16 %v56
    %v633 = vunpack.c.l.b16 %v57
    %v634 = vunpack.c.h.b16 %v57
    %v635 = vunpack.c.l.b16 %v58
    %v636 = vunpack.c.h.b16 %v58
    %v637 = vunpack.c.l.b16 %v59
    %v638 = vunpack.c.h.b16 %v59
    %v639 = vunpack.c.l.b16 %v60
    %v640 = vunpack.c.h.b16 %v60
    %v641 = vunpack.c.l.b16 %v61
    %v642 = vunpack.c.h.b16 %v61
    %v643 = vunpack.c.l.b16 %v62
    %v644 = vunpack.c.h.b16 %v62
    %v645 = vunpack.c.l.b16 %v63
    %v646 = vunpack.c.h.b16 %v63
    %v647 = vunpack.c.l.b16 %v64
    %v648 = vunpack.c.h.b16 %v64
    %v649 = vunpack.c.l.b16 %v65
    %v650 = vunpack.c.h.b16 %v65
    %v651 = vunpack.c.l.b16 %v66
    %v652 = vunpack.c.h.b16 %v66
    %v653 = vunpack.c.l.b16 %v67
    %v654 = vunpack.c.h.b16 %v67
    %v655 = vunpack.c.l.b16 %v68
    %v656 = vunpack.c.h.b16 %v68
    %v657 = vunpack.c.l.b16 %v69
    %v658 = vunpack.c.h.b16 %v69
    %v659 = vunpack.c.l.b16 %v70
    %v660 = vunpack.c.h.b16 %v70
    %v661 = vunpack.c.l.b16 %v71
    %v662 = vunpack.c.h.b16 %v71
    %v663 = vunpack.c.l.b16 %v72
    %v664 = vunpack.c.h.b16 %v72
    %v665 = vunpack.c.l.b16 %v73
    %v666 = vunpack.c.h.b16 %v73
    %v667 = vunpack.c.l.b16 %v74
    %v668 = vunpack.c.h.b16 %v74
    %v669 = vunpack.c.l.b16 %v75
    %v670 = vunpack.c.h.b16 %v75
    %v671 = vunpack.c.l.b16 %v76
    %v672 = vunpack.c.h.b16 %v76
    %v673 = vunpack.c.l.b16 %v77
    %v674 = vunpack.c.h.b16 %v77
    %v675 = vunpack.c.l.b16 %v78
    %v676 = vunpack.c.h.b16 %v78
    %v677 = vunpack.c.l.b16 %v79
    %v678 = vunpack.c.h.b16 %v79
    %v679 = vunpack.c.l.b16 %v80
    %v680 = vunpack.c.h.b16 %v80
    %v681 = vunpack.c.l.b16 %v81
    %v682 = vunpack.c.h.b16 %v81
    %v683 = vunpack.c.l.b16 %v82
    %v684 = vunpack.c.h.b16 %v82
    %v685 = vunpack.c.l.b16 %v83
    %v686 = vunpack.c.h.b16 %v83
    %v687 = vunpack.c.l.b16 %v84
    %v688 = vunpack.c.h.b16 %v84
    %v689 = vunpack.c.l.b16 %v85
    %v690 = vunpack.c.h.b16 %v85
    %v691 = vunpack.c.l.b16 %v86
    %v692 = vunpack.c.h.b16 %v86
    %v693 = vunpack.c.l.b16 %v87
    %v694 = vunpack.c.h.b16 %v87
    %v695 = vunpack.c.l.b16 %v88
    %v696 = vunpack.c.h.b16 %v88
    %v697 = vunpack.c.l.b16 %v89
    %v698 = vunpack.c.h.b16 %v89
    %v699 = vunpack.c.l.b16 %v90
    %v700 = vunpack.c.h.b16 %v90
    %v701 = vunpack.c.l.b16 %v91
    %v702 = vunpack.c.h.b16 %v91
    %v703 = vunpack.c.l.b16 %v92
    %v704 = vunpack.c.h.b16 %v92
    %v705 = vunpack.c.l.b16 %v93
    %v706 = vunpack.c.h.b16 %v93
    %v707 = vunpack.c.l.b16 %v94
    %v708 = vunpack.c.h.b16 %v94
    %v709 = vunpack.c.l.b16 %v95
    %v710 = vunpack.c.h.b16 %v95
    %v711 = vunpack.c.l.b16 %v96
    %v712 = vunpack.c.h.b16 %v96
    %v713 = vunpack.c.l.b16 %v97
    %v714 = vunpack.c.h.b16 %v97
    %v715 = vunpack.c.l.b16 %v98
    %v716 = vunpack.c.h.b16 %v98
    %v717 = vunpack.c.l.b16 %v99
    %v718 = vunpack.c.h.b16 %v99
    %v719 = vunpack.c.l.b16 %v100
    %v720 = vunpack.c.h.b16 %v100
    %v721 = vunpack.c.l.b16 %v101
    %v722 = vunpack.c.h.b16 %v101
    %v723 = vunpack.c.l.b16 %v102
    %v724 = vunpack.c.h.b16 %v102
    %v725 = vunpack.c.l.b16 %v103
    %v726 = vunpack.c.h.b16 %v103
    %v727 = vunpack.c.l.b16 %v104
    %v728 = vunpack.c.h.b16 %v104
    %v729 = vunpack.c.l.b16 %v105
    %v730 = vunpack.c.h.b16 %v105
    %v731 = vunpack.c.l.b16 %v106
    %v732 = vunpack.c.h.b16 %v106
    %v733 = vunpack.c.l.b16 %v107
    %v734 = vunpack.c.h.b16 %v107
    %v735 = vunpack.c.l.b16 %v108
    %v736 = vunpack.c.h.b16 %v108
    %v737 = vunpack.c.l.b16 %v109
    %v738 = vunpack.c.h.b16 %v109
    %v739 = vunpack.c.l.b16 %v110
    %v740 = vunpack.c.h.b16 %v110
    %v741 = vunpack.c.l.b16 %v111
    %v742 = vunpack.c.h.b16 %v111
    %v743 = vunpack.c.l.b16 %v112
    %v744 = vunpack.c.h.b16 %v112
    %v745 = vunpack.c.l.b16 %v113
    %v746 = vunpack.c.h.b16 %v113
    %v747 = vunpack.c.l.b16 %v114
    %v748 = vunpack.c.h.b16 %v114
    %v749 = vunpack.c.l.b16 %v115
    %v750 = vunpack.c.h.b16 %v115
    %v751 = vunpack.c.l.b16 %v116
    %v752 = vunpack.c.h.b16 %v116
    %v753 = vunpack.c.l.b16 %v117
    %v754 = vunpack.c.h.b16 %v117
    %v755 = vunpack.c.l.b16 %v118
    %v756 = vunpack.c.h.b16 %v118
    %v757 = vunpack.c.l.b16 %v119
    %v758 = vunpack.c.h.b16 %v119
    %v759 = vunpack.c.l.b16 %v120
    %v760 = vunpack.c.h.b16 %v120
    %v761 = vunpack.c.l.b16 %v121
    %v762 = vunpack.c.h.b16 %v121
    %v763 = vunpack.c.l.b16 %v122
    %v764 = vunpack.c.h.b16 %v122
    %v765 = vunpack.c.l.b16 %v123
    %v766 = vunpack.c.h.b16 %v123
    %v767 = vunpack.c.l.b16 %v124
    %v768 = vunpack.c.h.b16 %v124
    %v769 = vunpack.c.l.b16 %v125
    %v770 = vunpack.c.h.b16 %v125
    %v771 = vunpack.c.l.b16 %v126
    %v772 = vunpack.c.h.b16 %v126
    %v773 = vunpack.c.l.b16 %v127
    %v774 = vunpack.c.h.b16 %v127
    %v775 = vunpack.c.l.b16 %v128
    %v776 = vunpack.c.h.b16 %v128
    %v777 = vunpack.c.l.b16 %v129
    %v778 = vunpack.c.h.b16 %v129
    %v779 = vunpack.c.l.b16 %v130
    %v780 = vunpack.c.h.b16 %v130
    %v781 = vunpack.c.l.b16 %v131
    %v782 = vunpack.c.h.b16 %v131
    %v783 = vunpack.c.l.b16 %v132
    %v784 = vunpack.c.h.b16 %v132
    %v785 = vunpack.c.l.b16 %v133
    %v786 = vunpack.c.h.b16 %v133
    %v787 = vunpack.c.l.b16 %v134
    %v788 = vunpack.c.h.b16 %v134
    %v789 = vunpack.c.l.b16 %v135
    %v790 = vunpack.c.h.b16 %v135
    %v791 = vunpack.c.l.b16 %v136
    %v792 = vunpack.c.h.b16 %v136
    %v793 = vunpack.c.l.b16 %v137
    %v794 = vunpack.c.h.b16 %v137
    %v795 = vunpack.c.l.b16 %v138
    %v796 = vunpack.c.h.b16 %v138
    %v797 = vunpack.c.l.b16 %v139
    %v798 = vunpack.c.h.b16 %v139
    %v799 = vunpack.c.l.b16 %v140
    %v800 = vunpack.c.h.b16 %v140
    %v801 = vunpack.c.l.b16 %v141
    %v802 = vunpack.c.h.b16 %v141
    %v803 = vunpack.c.l.b16 %v142
    %v804 = vunpack.c.h.b16 %v142
    %v805 = vunpack.c.l.b16 %v143
    %v806 = vunpack.c.h.b16 %v143
    %v807 = vunpack.c.l.b16 %v144
    %v808 = vunpack.c.h.b16 %v144
    %v809 = vunpack.c.l.b16 %v145
    %v810 = vunpack.c.h.b16 %v145
    %v811 = vunpack.c.l.b16 %v146
    %v812 = vunpack.c.h.b16 %v146
    %v813 = vunpack.c.l.b16 %v147
    %v814 = vunpack.c.h.b16 %v147
    %v815 = vunpack.c.l.b16 %v148
    %v816 = vunpack.c.h.b16 %v148
    %v817 = vunpack.c.l.b16 %v149
    %v818 = vunpack.c.h.b16 %v149
    %v819 = vunpack.c.l.b16 %v150
    %v820 = vunpack.c.h.b16 %v150
    %v821 = vunpack.c.l.b16 %v151
    %v822 = vunpack.c.h.b16 %v151
    %v823 = vunpack.c.l.b16 %v152
    %v824 = vunpack.c.h.b16 %v152
    %v825 = vunpack.c.l.b16 %v153
    %v826 = vunpack.c.h.b16 %v153
    %v827 = vunpack.c.l.b16 %v154
    %v828 = vunpack.c.h.b16 %v154
    %v829 = vunpack.c.l.b16 %v155
    %v830 = vunpack.c.h.b16 %v155
    %v831 = vunpack.c.l.b16 %v156
    %v832 = vunpack.c.h.b16 %v156
    %v833 = vunpack.c.l.b16 %v157
    %v834 = vunpack.c.h.b16 %v157
    %v835 = vunpack.c.l.b16 %v158
    %v836 = vunpack.c.h.b16 %v158
    %v837 = vunpack.c.l.b16 %v159
    %v838 = vunpack.c.h.b16 %v159
    %v839 = vunpack.c.l.b16 %v160
    %v840 = vunpack.c.h.b16 %v160
    %v841 = vunpack.c.l.b16 %v161
    %v842 = vunpack.c.h.b16 %v161
    %v843 = vunpack.c.l.b16 %v162
    %v844 = vunpack.c.h.b16 %v162
    %v845 = vunpack.c.l.b16 %v163
    %v846 = vunpack.c.h.b16 %v163
    %v847 = vunpack.c.l.b16 %v164
    %v848 = vunpack.c.h.b16 %v164
    %v849 = vunpack.c.l.b16 %v165
    %v850 = vunpack.c.h.b16 %v165
    %v851 = vunpack.c.l.b16 %v166
    %v852 = vunpack.c.h.b16 %v166
    %v853 = vunpack.c.l.b16 %v167
    %v854 = vunpack.c.h.b16 %v167
    %v855 = vunpack.c.l.b16 %v168
    %v856 = vunpack.c.h.b16 %v168
    %v857 = vunpack.c.l.b16 %v169
    %v858 = vunpack.c.h.b16 %v169
    %v859 = vunpack.c.l.b16 %v170
    %v860 = vunpack.c.h.b16 %v170
    %v861 = vunpack.c.l.b16 %v171
    %v862 = vunpack.c.h.b16 %v171
    %v863 = vunpack.c.l.b16 %v172
    %v864 = vunpack.c.h.b16 %v172
    %v865 = vunpack.c.l.b16 %v173
    %v866 = vunpack.c.h.b16 %v173
    %v867 = vunpack.c.l.b16 %v174
    %v868 = vunpack.c.h.b16 %v174
    %v869 = vunpack.c.l.b16 %v175
    %v870 = vunpack.c.h.b16 %v175
    %v871 = vunpack.c.l.b16 %v176
    %v872 = vunpack.c.h.b16 %v176
    %v873 = vunpack.c.l.b16 %v177
    %v874 = vunpack.c.h.b16 %v177
    %v875 = vunpack.c.l.b16 %v178
    %v876 = vunpack.c.h.b16 %v178
    %v877 = vunpack.c.l.b16 %v179
    %v878 = vunpack.c.h.b16 %v179
    %v879 = vunpack.c.l.b16 %v180
    %v880 = vunpack.c.h.b16 %v180
    %v881 = vunpack.c.l.b16 %v181
    %v882 = vunpack.c.h.b16 %v181
    %v883 = vunpack.c.l.b16 %v182
    %v884 = vunpack.c.h.b16 %v182
    %v885 = vunpack.c.l.b16 %v183
    %v886 = vunpack.c.h.b16 %v183
    %v887 = vunpack.c.l.b16 %v184
    %v888 = vunpack.c.h.b16 %v184
    %v889 = vunpack.c.l.b16 %v185
    %v890 = vunpack.c.h.b16 %v185
    %v891 = vunpack.c.l.b16 %v186
    %v892 = vunpack.c.h.b16 %v186
    %v893 = vunpack.c.l.b16 %v187
    %v894 = vunpack.c.h.b16 %v187
    %v895 = vunpack.c.l.b16 %v188
    %v896 = vunpack.c.h.b16 %v188
    %v897 = vunpack.c.l.b16 %v189
    %v898 = vunpack.c.h.b16 %v189
    %v899 = vunpack.c.l.b16 %v190
    %v900 = vunpack.c.h.b16 %v190
    %v901 = vunpack.c.l.b16 %v191
    %v902 = vunpack.c.h.b16 %v191
    %v903 = vunpack.c.l.b16 %v192
    %v904 = vunpack.c.h.b16 %v192
    %v905 = vunpack.c.l.b16 %v193
    %v906 = vunpack.c.h.b16 %v193
    %v907 = vunpack.c.l.b16 %v194
    %v908 = vunpack.c.h.b16 %v194
    %v909 = vunpack.c.l.b16 %v195
    %v910 = vunpack.c.h.b16 %v195
    %v911 = vunpack.c.l.b16 %v196
    %v912 = vunpack.c.h.b16 %v196
    %v913 = vunpack.c.l.b16 %v197
    %v914 = vunpack.c.h.b16 %v197
    %v915 = vunpack.c.l.b16 %v198
    %v916 = vunpack.c.h.b16 %v198
    %v917 = vunpack.c.l.b16 %v199
    %v918 = vunpack.c.h.b16 %v199
    %v919 = vunpack.c.l.b16 %v200
    %v920 = vunpack.c.h.b16 %v200
    %v921 = vunpack.c.l.b16 %v201
    %v922 = vunpack.c.h.b16 %v201
    %v923 = vunpack.c.l.b16 %v202
    %v924 = vunpack.c.h.b16 %v202
    %v925 = vunpack.c.l.b16 %v203
    %v926 = vunpack.c.h.b16 %v203
    %v927 = vunpack.c.l.b16 %v204
    %v928 = vunpack.c.h.b16 %v204
    %v929 = vunpack.c.l.b16 %v205
    %v930 = vunpack.c.h.b16 %v205
    %v931 = vunpack.c.l.b16 %v206
    %v932 = vunpack.c.h.b16 %v206
    %v933 = vunpack.c.l.b16 %v207
    %v934 = vunpack.c.h.b16 %v207
    %v935 = vunpack.c.l.b16 %v208
    %v936 = vunpack.c.h.b16 %v208
    %v937 = vunpack.c.l.b16 %v209
    %v938 = vunpack.c.h.b16 %v209
    %v939 = vunpack.c.l.b16 %v210
    %v940 = vunpack.c.h.b16 %v210
    %v941 = vunpack.c.l.b16 %v211
    %v942 = vunpack.c.h.b16 %v211
    %v943 = vunpack.c.l.b16 %v212
    %v944 = vunpack.c.h.b16 %v212
    %v945 = vunpack.c.l.b16 %v213
    %v946 = vunpack.c.h.b16 %v213
    %v947 = vunpack.c.l.b16 %v214
    %v948 = vunpack.c.h.b16 %v214
    %v949 = vunpack.c.l.b16 %v215
    %v950 = vunpack.c.h.b16 %v215
    %v951 = vunpack.c.l.b16 %v216
    %v952 = vunpack.c.h.b16 %v216
    %v953 = vunpack.c.l.b16 %v217
    %v954 = vunpack.c.h.b16 %v217
    %v955 = vunpack.c.l.b16 %v218
    %v956 = vunpack.c.h.b16 %v218
    %v957 = vunpack.c.l.b16 %v219
    %v958 = vunpack.c.h.b16 %v219
    %v959 = vunpack.c.l.b16 %v220
    %v960 = vunpack.c.h.b16 %v220
    %v961 = vunpack.c.l.b16 %v221
    %v962 = vunpack.c.h.b16 %v221
    %v963 = vunpack.c.l.b16 %v222
    %v964 = vunpack.c.h.b16 %v222
    %v965 = vunpack.c.l.b16 %v223
    %v966 = vunpack.c.h.b16 %v223
    %v967 = vunpack.c.l.b16 %v224
    %v968 = vunpack.c.h.b16 %v224
    %v969 = vunpack.c.l.b16 %v225
    %v970 = vunpack.c.h.b16 %v225
    %v971 = vunpack.c.l.b16 %v226
    %v972 = vunpack.c.h.b16 %v226
    %v973 = vunpack.c.l.b16 %v227
    %v974 = vunpack.c.h.b16 %v227
    %v975 = vunpack.c.l.b16 %v228
    %v976 = vunpack.c.h.b16 %v228
    %v977 = vunpack.c.l.b16 %v229
    %v978 = vunpack.c.h.b16 %v229
    %v979 = vunpack.c.l.b16 %v230
    %v980 = vunpack.c.h.b16 %v230
    %v981 = vunpack.c.l.b16 %v231
    %v982 = vunpack.c.h.b16 %v231
    %v983 = vunpack.c.l.b16 %v232
    %v984 = vunpack.c.h.b16 %v232
    %v985 = vunpack.c.l.b16 %v233
    %v986 = vunpack.c.h.b16 %v233
    %v987 = vunpack.c.l.b16 %v234
    %v988 = vunpack.c.h.b16 %v234
    %v989 = vunpack.c.l.b16 %v235
    %v990 = vunpack.c.h.b16 %v235
    %v991 = vunpack.c.l.b16 %v236
    %v992 = vunpack.c.h.b16 %v236
    %v993 = vunpack.c.l.b16 %v237
    %v994 = vunpack.c.h.b16 %v237
    %v995 = vunpack.c.l.b16 %v238
    %v996 = vunpack.c.h.b16 %v238
    %v997 = vunpack.c.l.b16 %v239
    %v998 = vunpack.c.h.b16 %v239
    %v999 = vunpack.c.l.b16 %v240
    %v1000 = vunpack.c.h.b16 %v240
    %v1001 = vunpack.c.l.b16 %v241
    %v1002 = vunpack.c.h.b16 %v241
    %v1003 = vunpack.c.l.b16 %v242
    %v1004 = vunpack.c.h.b16 %v242
    %v1005 = vunpack.c.l.b16 %v243
    %v1006 = vunpack.c.h.b16 %v243
    %v1007 = vunpack.c.l.b16 %v244
    %v1008 = vunpack.c.h.b16 %v244
    %v1009 = vunpack.c.l.b16 %v245
    %v1010 = vunpack.c.h.b16 %v245
    %v1011 = vunpack.c.l.b16 %v246
    %v1012 = vunpack.c.h.b16 %v246
    %v1013 = vunpack.c.l.b16 %v247
    %v1014 = vunpack.c.h.b16 %v247
    %v1015 = vunpack.c.l.b16 %v248
    %v1016 = vunpack.c.h.b16 %v248
    %v1017 = vunpack.c.l.b16 %v249
    %v1018 = vunpack.c.h.b16 %v249
    %v1019 = vunpack.c.l.b16 %v250
    %v1020 = vunpack.c.h.b16 %v250
    %v1021 = vunpack.c.l.b16 %v251
    %v1022 = vunpack.c.h.b16 %v251
    %v1023 = vunpack.c.l.b16 %v252
    %v1024 = vunpack.c.h.b16 %v252
    %v1025 = vunpack.c.l.b16 %v253
    %v1026 = vunpack.c.h.b16 %v253
    %v1027 = vunpack.c.l.b16 %v254
    %v1028 = vunpack.c.h.b16 %v254
    %v1029 = vunpack.c.l.b16 %v255
    %v1030 = vunpack.c.h.b16 %v255
    %v1031 = vunpack.c.l.b16 %v256
    %v1032 = vunpack.c.h.b16 %v256
    %v1033 = vunpack.c.l.b16 %v257
    %v1034 = vunpack.c.h.b16 %v257
    %v1035 = vunpack.c.l.b16 %v258
    %v1036 = vunpack.c.h.b16 %v258
    %v1037 = vunpack.c.l.b16 %v259
    %v1038 = vunpack.c.h.b16 %v259
    %v1039 = vunpack.c.l.b16 %v260
    %v1040 = vunpack.c.h.b16 %v260
    %v1041 = vunpack.c.l.b16 %v261
    %v1042 = vunpack.c.h.b16 %v261
    %v1043 = vunpack.c.l.b16 %v262
    %v1044 = vunpack.c.h.b16 %v262
    %v1045 = vunpack.c.l.b16 %v263
    %v1046 = vunpack.c.h.b16 %v263
    %v1047 = vunpack.c.l.b16 %v264
    %v1048 = vunpack.c.h.b16 %v264
    %v1049 = vunpack.c.l.b16 %v265
    %v1050 = vunpack.c.h.b16 %v265
    %v1051 = vunpack.c.l.b16 %v266
    %v1052 = vunpack.c.h.b16 %v266
    %v1053 = vunpack.c.l.b16 %v267
    %v1054 = vunpack.c.h.b16 %v267
    %v1055 = vunpack.c.l.b16 %v268
    %v1056 = vunpack.c.h.b16 %v268
    %v1057 = vunpack.c.l.b16 %v269
    %v1058 = vunpack.c.h.b16 %v269
    %v1059 = vunpack.c.l.b16 %v270
    %v1060 = vunpack.c.h.b16 %v270
    %v1061 = vunpack.c.l.b16 %v271
    %v1062 = vunpack.c.h.b16 %v271
    %v1063 = vpack.c.b16 %v553, %v551
    %v1064 = vpack.c.b16 %v554, %v552
    %v1065 = vpack.c.b16 %v557, %v555
    %v1066 = vpack.c.b16 %v558, %v556
    %v1067 = vpack.c.b16 %v561, %v559
    %v1068 = vpack.c.b16 %v562, %v560
    %v1069 = vpack.c.b16 %v565, %v563
    %v1070 = vpack.c.b16 %v566, %v564
    %v1071 = vpack.c.b16 %v569, %v567
    %v1072 = vpack.c.b16 %v570, %v568
    %v1073 = vpack.c.b16 %v573, %v571
    %v1074 = vpack.c.b16 %v574, %v572
    %v1075 = vpack.c.b16 %v577, %v575
    %v1076 = vpack.c.b16 %v578, %v576
    %v1077 = vpack.c.b16 %v581, %v579
    %v1078 = vpack.c.b16 %v582, %v580
    %v1079 = vpack.c.b16 %v585, %v583
    %v1080 = vpack.c.b16 %v586, %v584
    %v1081 = vpack.c.b16 %v589, %v587
    %v1082 = vpack.c.b16 %v590, %v588
    %v1083 = vpack.c.b16 %v593, %v591
    %v1084 = vpack.c.b16 %v594, %v592
    %v1085 = vpack.c.b16 %v597, %v595
    %v1086 = vpack.c.b16 %v598, %v596
    %v1087 = vpack.c.b16 %v601, %v599
    %v1088 = vpack.c.b16 %v602, %v600
    %v1089 = vpack.c.b16 %v605, %v603
    %v1090 = vpack.c.b16 %v606, %v604
    %v1091 = vpack.c.b16 %v609, %v607
    %v1092 = vpack.c.b16 %v610, %v608
    %v1093 = vpack.c.b16 %v613, %v611
    %v1094 = vpack.c.b16 %v614, %v612
    %v1095 = vpack.c.b16 %v617, %v615
    %v1096 = vpack.c.b16 %v618, %v616
    %v1097 = vpack.c.b16 %v621, %v619
    %v1098 = vpack.c.b16 %v622, %v620
    %v1099 = vpack.c.b16 %v625, %v623
    %v1100 = vpack.c.b16 %v626, %v624
    %v1101 = vpack.c.b16 %v629, %v627
    %v1102 = vpack.c.b16 %v630, %v628
    %v1103 = vpack.c.b16 %v633, %v631
    %v1104 = vpack.c.b16 %v634, %v632
    %v1105 = vpack.c.b16 %v637, %v635
    %v1106 = vpack.c.b16 %v638, %v636
    %v1107 = vpack.c.b16 %v641, %v639
    %v1108 = vpack.c.b16 %v642, %v640
    %v1109 = vpack.c.b16 %v645, %v643
    %v1110 = vpack.c.b16 %v646, %v644
    %v1111 = vpack.c.b16 %v649, %v647
    %v1112 = vpack.c.b16 %v650, %v648
    %v1113 = vpack.c.b16 %v653, %v651
    %v1114 = vpack.c.b16 %v654, %v652
    %v1115 = vpack.c.b16 %v657, %v655
    %v1116 = vpack.c.b16 %v658, %v656
    %v1117 = vpack.c.b16 %v661, %v659
    %v1118 = vpack.c.b16 %v662, %v660
    %v1119 = vpack.c.b16 %v665, %v663
    %v1120 = vpack.c.b16 %v666, %v664
    %v1121 = vpack.c.b16 %v669, %v667
    %v1122 = vpack.c.b16 %v670, %v668
    %v1123 = vpack.c.b16 %v673, %v671
    %v1124 = vpack.c.b16 %v674, %v672
    %v1125 = vpack.c.b16 %v677, %v675
    %v1126 = vpack.c.b16 %v678, %v676
    %v1127 = vpack.c.b16 %v681, %v679
    %v1128 = vpack.c.b16 %v682, %v680
    %v1129 = vpack.c.b16 %v685, %v683
    %v1130 = vpack.c.b16 %v686, %v684
    %v1131 = vpack.c.b16 %v689, %v687
    %v1132 = vpack.c.b16 %v690, %v688
    %v1133 = vpack.c.b16 %v693, %v691
    %v1134 = vpack.c.b16 %v694, %v692
    %v1135 = vpack.c.b16 %v697, %v695
    %v1136 = vpack.c.b16 %v698, %v696
    %v1137 = vpack.c.b16 %v701, %v699
    %v1138 = vpack.c.b16 %v702, %v700
    %v1139 = vpack.c.b16 %v705, %v703
    %v1140 = vpack.c.b16 %v706, %v704
    %v1141 = vpack.c.b16 %v709, %v707
    %v1142 = vpack.c.b16 %v710, %v708
    %v1143 = vpack.c.b16 %v713, %v711
    %v1144 = vpack.c.b16 %v714, %v712
    %v1145 = vpack.c.b16 %v717, %v715
    %v1146 = vpack.c.b16 %v718, %v716
    %v1147 = vpack.c.b16 %v721, %v719
    %v1148 = vpack.c.b16 %v722, %v720
    %v1149 = vpack.c.b16 %v725, %v723
    %v1150 = vpack.c.b16 %v726, %v724
    %v1151 = vpack.c.b16 %v729, %v727
    %v1152 = vpack.c.b16 %v730, %v728
    %v1153 = vpack.c.b16 %v733, %v731
    %v1154 = vpack.c.b16 %v734, %v732
    %v1155 = vpack.c.b16 %v737, %v735
    %v1156 = vpack.c.b16 %v738, %v736
    %v1157 = vpack.c.b16 %v741, %v739
    %v1158 = vpack.c.b16 %v742, %v740
    %v1159 = vpack.c.b16 %v745, %v743
    %v1160 = vpack.c.b16 %v746, %v744
    %v1161 = vpack.c.b16 %v749, %v747
    %v1162 = vpack.c.b16 %v750, %v748
    %v1163 = vpack.c.b16 %v753, %v751
    %v1164 = vpack.c.b16 %v754, %v752
    %v1165 = vpack.c.b16 %v757, %v755
    %v1166 = vpack.c.b16 %v758, %v756
    %v1167 = vpack.c.b16 %v761, %v759
    %v1168 = vpack.c.b16 %v762, %v760
    %v1169 = vpack.c.b16 %v765, %v763
    %v1170 = vpack.c.b16 %v766, %v764
    %v1171 = vpack.c.b16 %v769, %v767
    %v1172 = vpack.c.b16 %v770, %v768
    %v1173 = vpack.c.b16 %v773, %v771
    %v1174 = vpack.c.b16 %v774, %v772
    %v1175 = vpack.c.b16 %v777, %v775
    %v1176 = vpack.c.b16 %v778, %v776
    %v1177 = vpack.c.b16 %v781, %v779
    %v1178 = vpack.c.b16 %v782, %v780
    %v1179 = vpack.c.b16 %v785, %v783
    %v1180 = vpack.c.b16 %v786, %v784
    %v1181 = vpack.c.b16 %v789, %v787
    %v1182 = vpack.c.b16 %v790, %v788
    %v1183 = vpack.c.b16 %v793, %v791
    %v1184 = vpack.c.b16 %v794, %v792
    %v1185 = vpack.c.b16 %v797, %v795
    %v1186 = vpack.c.b16 %v798, %v796
    %v1187 = vpack.c.b16 %v801, %v799
    %v1188 = vpack.c.b16 %v802, %v800
    %v1189 = vpack.c.b16 %v805, %v803
    %v1190 = vpack.c.b16 %v806, %v804
    %v1191 = vpack.c.b16 %v809, %v807
    %v1192 = vpack.c.b16 %v810, %v808
    %v1193 = vpack.c.b16 %v813, %v811
    %v1194 = vpack.c.b16 %v814, %v812
    %v1195 = vpack.c.b16 %v817, %v815
    %v1196 = vpack.c.b16 %v818, %v816
    %v1197 = vpack.c.b16 %v821, %v819
    %v1198 = vpack.c.b16 %v822, %v820
    %v1199 = vpack.c.b16 %v825, %v823
    %v1200 = vpack.c.b16 %v826, %v824
    %v1201 = vpack.c.b16 %v829, %v827
    %v1202 = vpack.c.b16 %v830, %v828
    %v1203 = vpack.c.b16 %v833, %v831
    %v1204 = vpack.c.b16 %v834, %v832
    %v1205 = vpack.c.b16 %v837, %v835
    %v1206 = vpack.c.b16 %v838, %v836
    %v1207 = vpack.c.b16 %v841, %v839
    %v1208 = vpack.c.b16 %v842, %v840
    %v1209 = vpack.c.b16 %v845, %v843
    %v1210 = vpack.c.b16 %v846, %v844
    %v1211 = vpack.c.b16 %v849, %v847
    %v1212 = vpack.c.b16 %v850, %v848
    %v1213 = vpack.c.b16 %v853, %v851
    %v1214 = vpack.c.b16 %v854, %v852
    %v1215 = vpack.c.b16 %v857, %v855
    %v1216 = vpack.c.b16 %v858, %v856
    %v1217 = vpack.c.b16 %v861, %v859
    %v1218 = vpack.c.b16 %v862, %v860
    %v1219 = vpack.c.b16 %v865, %v863
    %v1220 = vpack.c.b16 %v866, %v864
    %v1221 = vpack.c.b16 %v869, %v867
    %v1222 = vpack.c.b16 %v870, %v868
    %v1223 = vpack.c.b16 %v873, %v871
    %v1224 = vpack.c.b16 %v874, %v872
    %v1225 = vpack.c.b16 %v877, %v875
    %v1226 = vpack.c.b16 %v878, %v876
    %v1227 = vpack.c.b16 %v881, %v879
    %v1228 = vpack.c.b16 %v882, %v880
    %v1229 = vpack.c.b16 %v885, %v883
    %v1230 = vpack.c.b16 %v886, %v884
    %v1231 = vpack.c.b16 %v889, %v887
    %v1232 = vpack.c.b16 %v890, %v888
    %v1233 = vpack.c.b16 %v893, %v891
    %v1234 = vpack.c.b16 %v894, %v892
    %v1235 = vpack.c.b16 %v897, %v895
    %v1236 = vpack.c.b16 %v898, %v896
    %v1237 = vpack.c.b16 %v901, %v899
    %v1238 = vpack.c.b16 %v902, %v900
    %v1239 = vpack.c.b16 %v905, %v903
    %v1240 = vpack.c.b16 %v906, %v904
    %v1241 = vpack.c.b16 %v909, %v907
    %v1242 = vpack.c.b16 %v910, %v908
    %v1243 = vpack.c.b16 %v913, %v911
    %v1244 = vpack.c.b16 %v914, %v912
    %v1245 = vpack.c.b16 %v917, %v915
    %v1246 = vpack.c.b16 %v918, %v916
    %v1247 = vpack.c.b16 %v921, %v919
    %v1248 = vpack.c.b16 %v922, %v920
    %v1249 = vpack.c.b16 %v925, %v923
    %v1250 = vpack.c.b16 %v926, %v924
    %v1251 = vpack.c.b16 %v929, %v927
    %v1252 = vpack.c.b16 %v930, %v928
    %v1253 = vpack.c.b16 %v933, %v931
    %v1254 = vpack.c.b16 %v934, %v932
    %v1255 = vpack.c.b16 %v937, %v935
    %v1256 = vpack.c.b16 %v938, %v936
    %v1257 = vpack.c.b16 %v941, %v939
    %v1258 = vpack.c.b16 %v942, %v940
    %v1259 = vpack.c.b16 %v945, %v943
    %v1260 = vpack.c.b16 %v946, %v944
    %v1261 = vpack.c.b16 %v949, %v947
    %v1262 = vpack.c.b16 %v950, %v948
    %v1263 = vpack.c.b16 %v953, %v951
    %v1264 = vpack.c.b16 %v954, %v952
    %v1265 = vpack.c.b16 %v957, %v955
    %v1266 = vpack.c.b16 %v958, %v956
    %v1267 = vpack.c.b16 %v961, %v959
    %v1268 = vpack.c.b16 %v962, %v960
    %v1269 = vpack.c.b16 %v965, %v963
    %v1270 = vpack.c.b16 %v966, %v964
    %v1271 = vpack.c.b16 %v969, %v967
    %v1272 = vpack.c.b16 %v970, %v968
    %v1273 = vpack.c.b16 %v973, %v971
    %v1274 = vpack.c.b16 %v974, %v972
    %v1275 = vpack.c.b16 %v977, %v975
    %v1276 = vpack.c.b16 %v978, %v976
    %v1277 = vpack.c.b16 %v981, %v979
    %v1278 = vpack.c.b16 %v982, %v980
    %v1279 = vpack.c.b16 %v985, %v983
    %v1280 = vpack.c.b16 %v986, %v984
    %v1281 = vpack.c.b16 %v989, %v987
    %v1282 = vpack.c.b16 %v990, %v988
    %v1283 = vpack.c.b16 %v993, %v991
    %v1284 = vpack.c.b16 %v994, %v992
    %v1285 = vpack.c.b16 %v997, %v995
    %v1286 = vpack.c.b16 %v998, %v996
    %v1287 = vpack.c.b16 %v1001, %v999
    %v1288 = vpack.c.b16 %v1002, %v1000
    %v1289 = vpack.c.b16 %v1005, %v1003
    %v1290 = vpack.c.b16 %v1006, %v1004
    %v1291 = vpack.c.b16 %v1009, %v1007
    %v1292 = vpack.c.b16 %v1010, %v1008
    %v1293 = vpack.c.b16 %v1013, %v1011
    %v1294 = vpack.c.b16 %v1014, %v1012
    %v1295 = vpack.c.b16 %v1017, %v1015
    %v1296 = vpack.c.b16 %v1018, %v1016
    %v1297 = vpack.c.b16 %v1021, %v1019
    %v1298 = vpack.c.b16 %v1022, %v1020
    %v1299 = vpack.c.b16 %v1025, %v1023
    %v1300 = vpack.c.b16 %v1026, %v1024
    %v1301 = vpack.c.b16 %v1029, %v1027
    %v1302 = vpack.c.b16 %v1030, %v1028
    %v1303 = vpack.c.b16 %v1033, %v1031
    %v1304 = vpack.c.b16 %v1034, %v1032
    %v1305 = vpack.c.b16 %v1037, %v1035
    %v1306 = vpack.c.b16 %v1038, %v1036
    %v1307 = vpack.c.b16 %v1041, %v1039
    %v1308 = vpack.c.b16 %v1042, %v1040
    %v1309 = vpack.c.b16 %v1045, %v1043
    %v1310 = vpack.c.b16 %v1046, %v1044
    %v1311 = vpack.c.b16 %v1049, %v1047
    %v1312 = vpack.c.b16 %v1050, %v1048
    %v1313 = vpack.c.b16 %v1053, %v1051
    %v1314 = vpack.c.b16 %v1054, %v1052
    %v1315 = vpack.c.b16 %v1057, %v1055
    %v1316 = vpack.c.b16 %v1058, %v1056
    %v1317 = vpack.c.b16 %v1061, %v1059
    %v1318 = vpack.c.b16 %v1062, %v1060
    %v1470 = vunpack.c.l.b16 %v272
    %v1471 = vunpack.c.h.b16 %v272
    %v1472 = vunpack.c.l.b16 %v273
    %v1473 = vunpack.c.h.b16 %v273
    %v1474 = vunpack.c.l.b16 %v274
    %v1475 = vunpack.c.h.b16 %v274
    %v1476 = vunpack.c.l.b16 %v275
    %v1477 = vunpack.c.h.b16 %v275
    %v1478 = vunpack.c.l.b16 %v276
    %v1479 = vunpack.c.h.b16 %v276
    %v1480 = vunpack.c.l.b16 %v277
    %v1481 = vunpack.c.h.b16 %v277
    %v1482 = vunpack.c.l.b16 %v278
    %v1483 = vunpack.c.h.b16 %v278
    %v1484 = vunpack.c.l.b16 %v279
    %v1485 = vunpack.c.h.b16 %v279
    %v1486 = vunpack.c.l.b16 %v280
    %v1487 = vunpack.c.h.b16 %v280
    %v1488 = vunpack.c.l.b16 %v281
    %v1489 = vunpack.c.h.b16 %v281
    %v1490 = vunpack.c.l.b16 %v282
    %v1491 = vunpack.c.h.b16 %v282
    %v1492 = vunpack.c.l.b16 %v283
    %v1493 = vunpack.c.h.b16 %v283
    %v1494 = vunpack.c.l.b16 %v284
    %v1495 = vunpack.c.h.b16 %v284
    %v1496 = vunpack.c.l.b16 %v285
    %v1497 = vunpack.c.h.b16 %v285
    %v1498 = vunpack.c.l.b16 %v286
    %v1499 = vunpack.c.h.b16 %v286
    %v1500 = vunpack.c.l.b16 %v287
    %v1501 = vunpack.c.h.b16 %v287
    %v1502 = vunpack.c.l.b16 %v288
    %v1503 = vunpack.c.h.b16 %v288
    %v1504 = vunpack.c.l.b16 %v289
    %v1505 = vunpack.c.h.b16 %v289
    %v1506 = vunpack.c.l.b16 %v290
    %v1507 = vunpack.c.h.b16 %v290
    %v1508 = vunpack.c.l.b16 %v291
    %v1509 = vunpack.c.h.b16 %v291
    %v1510 = vunpack.c.l.b16 %v292
    %v1511 = vunpack.c.h.b16 %v292
    %v1512 = vunpack.c.l.b16 %v293
    %v1513 = vunpack.c.h.b16 %v293
    %v1514 = vunpack.c.l.b16 %v294
    %v1515 = vunpack.c.h.b16 %v294
    %v1516 = vpack.c.b16 %v1472, %v1470
    %v1517 = vpack.c.b16 %v1473, %v1471
    %v1518 = vpack.c.b16 %v1476, %v1474
    %v1519 = vpack.c.b16 %v1477, %v1475
    %v1520 = vpack.c.b16 %v1480, %v1478
    %v1521 = vpack.c.b16 %v1481, %v1479
    %v1522 = vpack.c.b16 %v1484, %v1482
    %v1523 = vpack.c.b16 %v1485, %v1483
    %v1524 = vpack.c.b16 %v1488, %v1486
    %v1525 = vpack.c.b16 %v1489, %v1487
    %v1526 = vpack.c.b16 %v1492, %v1490
    %v1527 = vpack.c.b16 %v1493, %v1491
    %v1528 = vpack.c.b16 %v1496, %v1494
    %v1529 = vpack.c.b16 %v1497, %v1495
    %v1530 = vpack.c.b16 %v1500, %v1498
    %v1531 = vpack.c.b16 %v1501, %v1499
    %v1532 = vpack.c.b16 %v1504, %v1502
    %v1533 = vpack.c.b16 %v1505, %v1503
    %v1534 = vpack.c.b16 %v1508, %v1506
    %v1535 = vpack.c.b16 %v1509, %v1507
    %v1536 = vpack.c.b16 %v1512, %v1510
    %v1537 = vpack.c.b16 %v1513, %v1511
    %v1538 = vpack.c.b16 %v1514, %v1514
    %v1539 = vpack.c.b16 %v1515, %v1515
    %vm1562 = vcmask 424960
    %v1564 = vsel %vm1562, %v1064, 0
    %v1567 = vsel %vm1562, %v1066, 0
    %v1570 = vsel %vm1562, %v1068, 0
    %v1573 = vsel %vm1562, %v1070, 0
    %v1576 = vsel %vm1562, %v1072, 0
    %v1579 = vsel %vm1562, %v1074, 0
    %v1582 = vsel %vm1562, %v1076, 0
    %v1585 = vsel %vm1562, %v1078, 0
    %v1588 = vsel %vm1562, %v1080, 0
    %v1591 = vsel %vm1562, %v1082, 0
    %v1594 = vsel %vm1562, %v1084, 0
    %v1597 = vsel %vm1562, %v1086, 0
    %v1600 = vsel %vm1562, %v1088, 0
    %v1603 = vsel %vm1562, %v1090, 0
    %v1606 = vsel %vm1562, %v1092, 0
    %v1609 = vsel %vm1562, %v1094, 0
    %v1612 = vsel %vm1562, %v1096, 0
    %v1615 = vsel %vm1562, %v1098, 0
    %v1618 = vsel %vm1562, %v1100, 0
    %v1621 = vsel %vm1562, %v1102, 0
    %v1624 = vsel %vm1562, %v1104, 0
    %v1627 = vsel %vm1562, %v1106, 0
    %v1630 = vsel %vm1562, %v1108, 0
    %v1633 = vsel %vm1562, %v1110, 0
    %v1636 = vsel %vm1562, %v1112, 0
    %v1639 = vsel %vm1562, %v1114, 0
    %v1642 = vsel %vm1562, %v1116, 0
    %v1645 = vsel %vm1562, %v1118, 0
    %v1648 = vsel %vm1562, %v1120, 0
    %v1651 = vsel %vm1562, %v1122, 0
    %v1654 = vsel %vm1562, %v1124, 0
    %v1657 = vsel %vm1562, %v1126, 0
    %v1660 = vsel %vm1562, %v1128, 0
    %v1663 = vsel %vm1562, %v1130, 0
    %v1666 = vsel %vm1562, %v1132, 0
    %v1669 = vsel %vm1562, %v1134, 0
    %v1672 = vsel %vm1562, %v1136, 0
    %v1675 = vsel %vm1562, %v1138, 0
    %v1678 = vsel %vm1562, %v1140, 0
    %v1681 = vsel %vm1562, %v1142, 0
    %v1684 = vsel %vm1562, %v1144, 0
    %v1687 = vsel %vm1562, %v1146, 0
    %v1690 = vsel %vm1562, %v1148, 0
    %v1693 = vsel %vm1562, %v1150, 0
    %v1696 = vsel %vm1562, %v1152, 0
    %v1699 = vsel %vm1562, %v1154, 0
    %v1702 = vsel %vm1562, %v1156, 0
    %v1705 = vsel %vm1562, %v1158, 0
    %v1708 = vsel %vm1562, %v1160, 0
    %v1711 = vsel %vm1562, %v1162, 0
    %v1714 = vsel %vm1562, %v1164, 0
    %v1717 = vsel %vm1562, %v1166, 0
    %v1720 = vsel %vm1562, %v1168, 0
    %v1723 = vsel %vm1562, %v1170, 0
    %v1726 = vsel %vm1562, %v1172, 0
    %v1729 = vsel %vm1562, %v1174, 0
    %v1732 = vsel %vm1562, %v1176, 0
    %v1735 = vsel %vm1562, %v1178, 0
    %v1738 = vsel %vm1562, %v1180, 0
    %v1741 = vsel %vm1562, %v1182, 0
    %v1744 = vsel %vm1562, %v1184, 0
    %v1747 = vsel %vm1562, %v1186, 0
    %v1750 = vsel %vm1562, %v1188, 0
    %v1753 = vsel %vm1562, %v1190, 0
    %v1756 = vsel %vm1562, %v1192, 0
    %v1759 = vsel %vm1562, %v1194, 0
    %v1762 = vsel %vm1562, %v1196, 0
    %v1765 = vsel %vm1562, %v1198, 0
    %v1768 = vsel %vm1562, %v1200, 0
    %v1771 = vsel %vm1562, %v1202, 0
    %v1774 = vsel %vm1562, %v1204, 0
    %v1777 = vsel %vm1562, %v1206, 0
    %v1780 = vsel %vm1562, %v1208, 0
    %v1783 = vsel %vm1562, %v1210, 0
    %v1786 = vsel %vm1562, %v1212, 0
    %v1789 = vsel %vm1562, %v1214, 0
    %v1792 = vsel %vm1562, %v1216, 0
    %v1795 = vsel %vm1562, %v1218, 0
    %v1798 = vsel %vm1562, %v1220, 0
    %v1801 = vsel %vm1562, %v1222, 0
    %v1804 = vsel %vm1562, %v1224, 0
    %v1807 = vsel %vm1562, %v1226, 0
    %v1810 = vsel %vm1562, %v1228, 0
    %v1813 = vsel %vm1562, %v1230, 0
    %v1816 = vsel %vm1562, %v1232, 0
    %v1819 = vsel %vm1562, %v1234, 0
    %v1822 = vsel %vm1562, %v1236, 0
    %v1825 = vsel %vm1562, %v1238, 0
    %v1828 = vsel %vm1562, %v1240, 0
    %v1831 = vsel %vm1562, %v1242, 0
    %v1834 = vsel %vm1562, %v1244, 0
    %v1837 = vsel %vm1562, %v1246, 0
    %v1840 = vsel %vm1562, %v1248, 0
    %v1843 = vsel %vm1562, %v1250, 0
    %v1846 = vsel %vm1562, %v1252, 0
    %v1849 = vsel %vm1562, %v1254, 0
    %v1852 = vsel %vm1562, %v1256, 0
    %v1855 = vsel %vm1562, %v1258, 0
    %v1858 = vsel %vm1562, %v1260, 0
    %v1861 = vsel %vm1562, %v1262, 0
    %v1864 = vsel %vm1562, %v1264, 0
    %v1867 = vsel %vm1562, %v1266, 0
    %v1870 = vsel %vm1562, %v1268, 0
    %v1873 = vsel %vm1562, %v1270, 0
    %v1876 = vsel %vm1562, %v1272, 0
    %v1879 = vsel %vm1562, %v1274, 0
    %v1882 = vsel %vm1562, %v1276, 0
    %v1885 = vsel %vm1562, %v1278, 0
    %v1888 = vsel %vm1562, %v1280, 0
    %v1891 = vsel %vm1562, %v1282, 0
    %v1894 = vsel %vm1562, %v1284, 0
    %v1897 = vsel %vm1562, %v1286, 0
    %v1900 = vsel %vm1562, %v1288, 0
    %v1903 = vsel %vm1562, %v1290, 0
    %v1906 = vsel %vm1562, %v1292, 0
    %v1909 = vsel %vm1562, %v1294, 0
    %v1912 = vsel %vm1562, %v1296, 0
    %v1915 = vsel %vm1562, %v1298, 0
    %v1918 = vsel %vm1562, %v1300, 0
    %v1921 = vsel %vm1562, %v1302, 0
    %v1924 = vsel %vm1562, %v1304, 0
    %v1927 = vsel %vm1562, %v1306, 0
    %v1930 = vsel %vm1562, %v1308, 0
    %v1933 = vsel %vm1562, %v1310, 0
    %v1936 = vsel %vm1562, %v1312, 0
    %v1939 = vsel %vm1562, %v1314, 0
    %v1942 = vsel %vm1562, %v1316, 0
    %v1945 = vsel %vm1562, %v1318, 0
    %vm1947 = vcmask 1041408
    %v1949 = vsel %vm1947, %v1538, 0
    %v1952 = vsel %vm1947, %v1539, 0
    %1954 = vmatprep.subr.bf16.mxu0 %v1531
    %1955 = vmatpush1.bf16.msra.mxu0 %v1530
    %1956 = vmatprep.subr.bf16.mxu0 %v1529
    %1957 = vmatpush1.bf16.msra.mxu0 %v1528
    %1958 = vmatprep.subr.bf16.mxu0 %v1527
    %1959 = vmatpush1.bf16.msra.mxu0 %v1526
    %1960 = vmatprep.subr.bf16.mxu0 %v1525
    %1961 = vmatpush1.bf16.msra.mxu0 %v1524
    %1962 = vmatprep.subr.bf16.mxu0 %v1523
    %1963 = vmatpush1.bf16.msra.mxu0 %v1522
    %1964 = vmatprep.subr.bf16.mxu0 %v1521
    %1965 = vmatpush1.bf16.msra.mxu0 %v1520
    %1966 = vmatprep.subr.bf16.mxu0 %v1519
    %1967 = vmatpush1.bf16.msra.mxu0 %v1518
    %1968 = vmatprep.subr.bf16.mxu0 %v1517
    %1969 = vmatpush1.bf16.msra.mxu0 %v1516
    %1970 = vmatprep.subr.bf16.mxu0 0
    %1971 = vmatpush2.bf16.msra.mxu0 0
    %1972 = vmatprep.subr.bf16.mxu0 0
    %1973 = vmatpush2.bf16.msra.mxu0 0
    %1974 = vmatprep.subr.bf16.mxu0 0
    %1975 = vmatpush2.bf16.msra.mxu0 0
    %1976 = vmatprep.subr.bf16.mxu0 0
    %1977 = vmatpush2.bf16.msra.mxu0 0
    %1978 = vmatprep.subr.bf16.mxu0 %v1952
    %1979 = vmatpush2.bf16.msra.mxu0 %v1949
    %1980 = vmatprep.subr.bf16.mxu0 %v1537
    %1981 = vmatpush2.bf16.msra.mxu0 %v1536
    %1982 = vmatprep.subr.bf16.mxu0 %v1535
    %1983 = vmatpush2.bf16.msra.mxu0 %v1534
    %1984 = vmatprep.subr.bf16.mxu0 %v1533
    %1985 = vmatpush2.bf16.msra.mxu0 %v1532
    %1986 = vmatprep.mubr.bf16.mxu0 %v1564
    %1987 = vmatmul.mubr.bf16.gmra.mxu0 %v1063
    %v1988 = vpop.f32.mrf.mxu0
    %v1989 = vadd.f32 0.0, %v1988
    %v1990 = vpop.f32.mrf.mxu0
    %v1991 = vadd.f32 0.0, %v1990
    %v1992 = vpop.f32.mrf.mxu0
    %v1993 = vadd.f32 0.0, %v1992
    %v1994 = vpop.f32.mrf.mxu0
    %v1995 = vadd.f32 0.0, %v1994
    %1996 = vmatprep.mubr.bf16.mxu0 %v1567
    %1997 = vmatmul.mubr.bf16.gmra.mxu0 %v1065
    %v1998 = vpop.f32.mrf.mxu0
    %v1999 = vadd.f32 0.0, %v1998
    %v2000 = vpop.f32.mrf.mxu0
    %v2001 = vadd.f32 0.0, %v2000
    %v2002 = vpop.f32.mrf.mxu0
    %v2003 = vadd.f32 0.0, %v2002
    %v2004 = vpop.f32.mrf.mxu0
    %v2005 = vadd.f32 0.0, %v2004
    %2006 = vmatprep.mubr.bf16.mxu0 %v1570
    %2007 = vmatmul.mubr.bf16.gmra.mxu0 %v1067
    %v2008 = vpop.f32.mrf.mxu0
    %v2009 = vadd.f32 0.0, %v2008
    %v2010 = vpop.f32.mrf.mxu0
    %v2011 = vadd.f32 0.0, %v2010
    %v2012 = vpop.f32.mrf.mxu0
    %v2013 = vadd.f32 0.0, %v2012
    %v2014 = vpop.f32.mrf.mxu0
    %v2015 = vadd.f32 0.0, %v2014
    %2016 = vmatprep.mubr.bf16.mxu0 %v1573
    %2017 = vmatmul.mubr.bf16.gmra.mxu0 %v1069
    %v2018 = vpop.f32.mrf.mxu0
    %v2019 = vadd.f32 0.0, %v2018
    %v2020 = vpop.f32.mrf.mxu0
    %v2021 = vadd.f32 0.0, %v2020
    %v2022 = vpop.f32.mrf.mxu0
    %v2023 = vadd.f32 0.0, %v2022
    %v2024 = vpop.f32.mrf.mxu0
    %v2025 = vadd.f32 0.0, %v2024
    %2026 = vmatprep.mubr.bf16.mxu0 %v1576
    %2027 = vmatmul.mubr.bf16.gmra.mxu0 %v1071
    %v2028 = vpop.f32.mrf.mxu0
    %v2029 = vadd.f32 0.0, %v2028
    %v2030 = vpop.f32.mrf.mxu0
    %v2031 = vadd.f32 0.0, %v2030
    %v2032 = vpop.f32.mrf.mxu0
    %v2033 = vadd.f32 0.0, %v2032
    %v2034 = vpop.f32.mrf.mxu0
    %v2035 = vadd.f32 0.0, %v2034
    %2036 = vmatprep.mubr.bf16.mxu0 %v1579
    %2037 = vmatmul.mubr.bf16.gmra.mxu0 %v1073
    %v2038 = vpop.f32.mrf.mxu0
    %v2039 = vadd.f32 0.0, %v2038
    %v2040 = vpop.f32.mrf.mxu0
    %v2041 = vadd.f32 0.0, %v2040
    %v2042 = vpop.f32.mrf.mxu0
    %v2043 = vadd.f32 0.0, %v2042
    %v2044 = vpop.f32.mrf.mxu0
    %v2045 = vadd.f32 0.0, %v2044
    %2046 = vmatprep.mubr.bf16.mxu0 %v1582
    %2047 = vmatmul.mubr.bf16.gmra.mxu0 %v1075
    %v2048 = vpop.f32.mrf.mxu0
    %v2049 = vadd.f32 0.0, %v2048
    %v2050 = vpop.f32.mrf.mxu0
    %v2051 = vadd.f32 0.0, %v2050
    %v2052 = vpop.f32.mrf.mxu0
    %v2053 = vadd.f32 0.0, %v2052
    %v2054 = vpop.f32.mrf.mxu0
    %v2055 = vadd.f32 0.0, %v2054
    %2056 = vmatprep.mubr.bf16.mxu0 %v1585
    %2057 = vmatmul.mubr.bf16.gmra.mxu0 %v1077
    %v2058 = vpop.f32.mrf.mxu0
    %v2059 = vadd.f32 0.0, %v2058
    %v2060 = vpop.f32.mrf.mxu0
    %v2061 = vadd.f32 0.0, %v2060
    %v2062 = vpop.f32.mrf.mxu0
    %v2063 = vadd.f32 0.0, %v2062
    %v2064 = vpop.f32.mrf.mxu0
    %v2065 = vadd.f32 0.0, %v2064
    %2066 = vmatprep.mubr.bf16.mxu0 %v1588
    %2067 = vmatmul.mubr.bf16.gmra.mxu0 %v1079
    %v2068 = vpop.f32.mrf.mxu0
    %v2069 = vadd.f32 0.0, %v2068
    %v2070 = vpop.f32.mrf.mxu0
    %v2071 = vadd.f32 0.0, %v2070
    %v2072 = vpop.f32.mrf.mxu0
    %v2073 = vadd.f32 0.0, %v2072
    %v2074 = vpop.f32.mrf.mxu0
    %v2075 = vadd.f32 0.0, %v2074
    %2076 = vmatprep.mubr.bf16.mxu0 %v1591
    %2077 = vmatmul.mubr.bf16.gmra.mxu0 %v1081
    %v2078 = vpop.f32.mrf.mxu0
    %v2079 = vadd.f32 0.0, %v2078
    %v2080 = vpop.f32.mrf.mxu0
    %v2081 = vadd.f32 0.0, %v2080
    %v2082 = vpop.f32.mrf.mxu0
    %v2083 = vadd.f32 0.0, %v2082
    %v2084 = vpop.f32.mrf.mxu0
    %v2085 = vadd.f32 0.0, %v2084
    %2086 = vmatprep.mubr.bf16.mxu0 %v1594
    %2087 = vmatmul.mubr.bf16.gmra.mxu0 %v1083
    %v2088 = vpop.f32.mrf.mxu0
    %v2089 = vadd.f32 0.0, %v2088
    %v2090 = vpop.f32.mrf.mxu0
    %v2091 = vadd.f32 0.0, %v2090
    %v2092 = vpop.f32.mrf.mxu0
    %v2093 = vadd.f32 0.0, %v2092
    %v2094 = vpop.f32.mrf.mxu0
    %v2095 = vadd.f32 0.0, %v2094
    %2096 = vmatprep.mubr.bf16.mxu0 %v1597
    %2097 = vmatmul.mubr.bf16.gmra.mxu0 %v1085
    %v2098 = vpop.f32.mrf.mxu0
    %v2099 = vadd.f32 0.0, %v2098
    %v2100 = vpop.f32.mrf.mxu0
    %v2101 = vadd.f32 0.0, %v2100
    %v2102 = vpop.f32.mrf.mxu0
    %v2103 = vadd.f32 0.0, %v2102
    %v2104 = vpop.f32.mrf.mxu0
    %v2105 = vadd.f32 0.0, %v2104
    %2106 = vmatprep.mubr.bf16.mxu0 %v1600
    %2107 = vmatmul.mubr.bf16.gmra.mxu0 %v1087
    %v2108 = vpop.f32.mrf.mxu0
    %v2109 = vadd.f32 0.0, %v2108
    %v2110 = vpop.f32.mrf.mxu0
    %v2111 = vadd.f32 0.0, %v2110
    %v2112 = vpop.f32.mrf.mxu0
    %v2113 = vadd.f32 0.0, %v2112
    %v2114 = vpop.f32.mrf.mxu0
    %v2115 = vadd.f32 0.0, %v2114
    %2116 = vmatprep.mubr.bf16.mxu0 %v1603
    %2117 = vmatmul.mubr.bf16.gmra.mxu0 %v1089
    %v2118 = vpop.f32.mrf.mxu0
    %v2119 = vadd.f32 0.0, %v2118
    %v2120 = vpop.f32.mrf.mxu0
    %v2121 = vadd.f32 0.0, %v2120
    %v2122 = vpop.f32.mrf.mxu0
    %v2123 = vadd.f32 0.0, %v2122
    %v2124 = vpop.f32.mrf.mxu0
    %v2125 = vadd.f32 0.0, %v2124
    %2126 = vmatprep.mubr.bf16.mxu0 %v1606
    %2127 = vmatmul.mubr.bf16.gmra.mxu0 %v1091
    %v2128 = vpop.f32.mrf.mxu0
    %v2129 = vadd.f32 0.0, %v2128
    %v2130 = vpop.f32.mrf.mxu0
    %v2131 = vadd.f32 0.0, %v2130
    %v2132 = vpop.f32.mrf.mxu0
    %v2133 = vadd.f32 0.0, %v2132
    %v2134 = vpop.f32.mrf.mxu0
    %v2135 = vadd.f32 0.0, %v2134
    %2136 = vmatprep.mubr.bf16.mxu0 %v1609
    %2137 = vmatmul.mubr.bf16.gmra.mxu0 %v1093
    %v2138 = vpop.f32.mrf.mxu0
    %v2139 = vadd.f32 0.0, %v2138
    %v2140 = vpop.f32.mrf.mxu0
    %v2141 = vadd.f32 0.0, %v2140
    %v2142 = vpop.f32.mrf.mxu0
    %v2143 = vadd.f32 0.0, %v2142
    %v2144 = vpop.f32.mrf.mxu0
    %v2145 = vadd.f32 0.0, %v2144
    %2146 = vmatprep.mubr.bf16.mxu0 %v1612
    %2147 = vmatmul.mubr.bf16.gmra.mxu0 %v1095
    %v2148 = vpop.f32.mrf.mxu0
    %v2149 = vadd.f32 0.0, %v2148
    %v2150 = vpop.f32.mrf.mxu0
    %v2151 = vadd.f32 0.0, %v2150
    %v2152 = vpop.f32.mrf.mxu0
    %v2153 = vadd.f32 0.0, %v2152
    %v2154 = vpop.f32.mrf.mxu0
    %v2155 = vadd.f32 0.0, %v2154
    %2156 = vmatprep.mubr.bf16.mxu0 %v1615
    %2157 = vmatmul.mubr.bf16.gmra.mxu0 %v1097
    %v2158 = vpop.f32.mrf.mxu0
    %v2159 = vadd.f32 0.0, %v2158
    %v2160 = vpop.f32.mrf.mxu0
    %v2161 = vadd.f32 0.0, %v2160
    %v2162 = vpop.f32.mrf.mxu0
    %v2163 = vadd.f32 0.0, %v2162
    %v2164 = vpop.f32.mrf.mxu0
    %v2165 = vadd.f32 0.0, %v2164
    %2166 = vmatprep.mubr.bf16.mxu0 %v1618
    %2167 = vmatmul.mubr.bf16.gmra.mxu0 %v1099
    %v2168 = vpop.f32.mrf.mxu0
    %v2169 = vadd.f32 0.0, %v2168
    %v2170 = vpop.f32.mrf.mxu0
    %v2171 = vadd.f32 0.0, %v2170
    %v2172 = vpop.f32.mrf.mxu0
    %v2173 = vadd.f32 0.0, %v2172
    %v2174 = vpop.f32.mrf.mxu0
    %v2175 = vadd.f32 0.0, %v2174
    %2176 = vmatprep.mubr.bf16.mxu0 %v1621
    %2177 = vmatmul.mubr.bf16.gmra.mxu0 %v1101
    %v2178 = vpop.f32.mrf.mxu0
    %v2179 = vadd.f32 0.0, %v2178
    %v2180 = vpop.f32.mrf.mxu0
    %v2181 = vadd.f32 0.0, %v2180
    %v2182 = vpop.f32.mrf.mxu0
    %v2183 = vadd.f32 0.0, %v2182
    %v2184 = vpop.f32.mrf.mxu0
    %v2185 = vadd.f32 0.0, %v2184
    %2186 = vmatprep.mubr.bf16.mxu0 %v1624
    %2187 = vmatmul.mubr.bf16.gmra.mxu0 %v1103
    %v2188 = vpop.f32.mrf.mxu0
    %v2189 = vadd.f32 0.0, %v2188
    %v2190 = vpop.f32.mrf.mxu0
    %v2191 = vadd.f32 0.0, %v2190
    %v2192 = vpop.f32.mrf.mxu0
    %v2193 = vadd.f32 0.0, %v2192
    %v2194 = vpop.f32.mrf.mxu0
    %v2195 = vadd.f32 0.0, %v2194
    %2196 = vmatprep.mubr.bf16.mxu0 %v1627
    %2197 = vmatmul.mubr.bf16.gmra.mxu0 %v1105
    %v2198 = vpop.f32.mrf.mxu0
    %v2199 = vadd.f32 0.0, %v2198
    %v2200 = vpop.f32.mrf.mxu0
    %v2201 = vadd.f32 0.0, %v2200
    %v2202 = vpop.f32.mrf.mxu0
    %v2203 = vadd.f32 0.0, %v2202
    %v2204 = vpop.f32.mrf.mxu0
    %v2205 = vadd.f32 0.0, %v2204
    %2206 = vmatprep.mubr.bf16.mxu0 %v1630
    %2207 = vmatmul.mubr.bf16.gmra.mxu0 %v1107
    %v2208 = vpop.f32.mrf.mxu0
    %v2209 = vadd.f32 0.0, %v2208
    %v2210 = vpop.f32.mrf.mxu0
    %v2211 = vadd.f32 0.0, %v2210
    %v2212 = vpop.f32.mrf.mxu0
    %v2213 = vadd.f32 0.0, %v2212
    %v2214 = vpop.f32.mrf.mxu0
    %v2215 = vadd.f32 0.0, %v2214
    %2216 = vmatprep.mubr.bf16.mxu0 %v1633
    %2217 = vmatmul.mubr.bf16.gmra.mxu0 %v1109
    %v2218 = vpop.f32.mrf.mxu0
    %v2219 = vadd.f32 0.0, %v2218
    %v2220 = vpop.f32.mrf.mxu0
    %v2221 = vadd.f32 0.0, %v2220
    %v2222 = vpop.f32.mrf.mxu0
    %v2223 = vadd.f32 0.0, %v2222
    %v2224 = vpop.f32.mrf.mxu0
    %v2225 = vadd.f32 0.0, %v2224
    %2226 = vmatprep.mubr.bf16.mxu0 %v1636
    %2227 = vmatmul.mubr.bf16.gmra.mxu0 %v1111
    %v2228 = vpop.f32.mrf.mxu0
    %v2229 = vadd.f32 0.0, %v2228
    %v2230 = vpop.f32.mrf.mxu0
    %v2231 = vadd.f32 0.0, %v2230
    %v2232 = vpop.f32.mrf.mxu0
    %v2233 = vadd.f32 0.0, %v2232
    %v2234 = vpop.f32.mrf.mxu0
    %v2235 = vadd.f32 0.0, %v2234
    %2236 = vmatprep.mubr.bf16.mxu0 %v1639
    %2237 = vmatmul.mubr.bf16.gmra.mxu0 %v1113
    %v2238 = vpop.f32.mrf.mxu0
    %v2239 = vadd.f32 0.0, %v2238
    %v2240 = vpop.f32.mrf.mxu0
    %v2241 = vadd.f32 0.0, %v2240
    %v2242 = vpop.f32.mrf.mxu0
    %v2243 = vadd.f32 0.0, %v2242
    %v2244 = vpop.f32.mrf.mxu0
    %v2245 = vadd.f32 0.0, %v2244
    %2246 = vmatprep.mubr.bf16.mxu0 %v1642
    %2247 = vmatmul.mubr.bf16.gmra.mxu0 %v1115
    %v2248 = vpop.f32.mrf.mxu0
    %v2249 = vadd.f32 0.0, %v2248
    %v2250 = vpop.f32.mrf.mxu0
    %v2251 = vadd.f32 0.0, %v2250
    %v2252 = vpop.f32.mrf.mxu0
    %v2253 = vadd.f32 0.0, %v2252
    %v2254 = vpop.f32.mrf.mxu0
    %v2255 = vadd.f32 0.0, %v2254
    %2256 = vmatprep.mubr.bf16.mxu0 %v1645
    %2257 = vmatmul.mubr.bf16.gmra.mxu0 %v1117
    %v2258 = vpop.f32.mrf.mxu0
    %v2259 = vadd.f32 0.0, %v2258
    %v2260 = vpop.f32.mrf.mxu0
    %v2261 = vadd.f32 0.0, %v2260
    %v2262 = vpop.f32.mrf.mxu0
    %v2263 = vadd.f32 0.0, %v2262
    %v2264 = vpop.f32.mrf.mxu0
    %v2265 = vadd.f32 0.0, %v2264
    %2266 = vmatprep.mubr.bf16.mxu0 %v1648
    %2267 = vmatmul.mubr.bf16.gmra.mxu0 %v1119
    %v2268 = vpop.f32.mrf.mxu0
    %v2269 = vadd.f32 0.0, %v2268
    %v2270 = vpop.f32.mrf.mxu0
    %v2271 = vadd.f32 0.0, %v2270
    %v2272 = vpop.f32.mrf.mxu0
    %v2273 = vadd.f32 0.0, %v2272
    %v2274 = vpop.f32.mrf.mxu0
    %v2275 = vadd.f32 0.0, %v2274
    %2276 = vmatprep.mubr.bf16.mxu0 %v1651
    %2277 = vmatmul.mubr.bf16.gmra.mxu0 %v1121
    %v2278 = vpop.f32.mrf.mxu0
    %v2279 = vadd.f32 0.0, %v2278
    %v2280 = vpop.f32.mrf.mxu0
    %v2281 = vadd.f32 0.0, %v2280
    %v2282 = vpop.f32.mrf.mxu0
    %v2283 = vadd.f32 0.0, %v2282
    %v2284 = vpop.f32.mrf.mxu0
    %v2285 = vadd.f32 0.0, %v2284
    %2286 = vmatprep.mubr.bf16.mxu0 %v1654
    %2287 = vmatmul.mubr.bf16.gmra.mxu0 %v1123
    %v2288 = vpop.f32.mrf.mxu0
    %v2289 = vadd.f32 0.0, %v2288
    %v2290 = vpop.f32.mrf.mxu0
    %v2291 = vadd.f32 0.0, %v2290
    %v2292 = vpop.f32.mrf.mxu0
    %v2293 = vadd.f32 0.0, %v2292
    %v2294 = vpop.f32.mrf.mxu0
    %v2295 = vadd.f32 0.0, %v2294
    %2296 = vmatprep.mubr.bf16.mxu0 %v1657
    %2297 = vmatmul.mubr.bf16.gmra.mxu0 %v1125
    %v2298 = vpop.f32.mrf.mxu0
    %v2299 = vadd.f32 0.0, %v2298
    %v2300 = vpop.f32.mrf.mxu0
    %v2301 = vadd.f32 0.0, %v2300
    %v2302 = vpop.f32.mrf.mxu0
    %v2303 = vadd.f32 0.0, %v2302
    %v2304 = vpop.f32.mrf.mxu0
    %v2305 = vadd.f32 0.0, %v2304
    %2306 = vmatprep.mubr.bf16.mxu0 %v1660
    %2307 = vmatmul.mubr.bf16.gmra.mxu0 %v1127
    %v2308 = vpop.f32.mrf.mxu0
    %v2309 = vadd.f32 0.0, %v2308
    %v2310 = vpop.f32.mrf.mxu0
    %v2311 = vadd.f32 0.0, %v2310
    %v2312 = vpop.f32.mrf.mxu0
    %v2313 = vadd.f32 0.0, %v2312
    %v2314 = vpop.f32.mrf.mxu0
    %v2315 = vadd.f32 0.0, %v2314
    %2316 = vmatprep.mubr.bf16.mxu0 %v1663
    %2317 = vmatmul.mubr.bf16.gmra.mxu0 %v1129
    %v2318 = vpop.f32.mrf.mxu0
    %v2319 = vadd.f32 0.0, %v2318
    %v2320 = vpop.f32.mrf.mxu0
    %v2321 = vadd.f32 0.0, %v2320
    %v2322 = vpop.f32.mrf.mxu0
    %v2323 = vadd.f32 0.0, %v2322
    %v2324 = vpop.f32.mrf.mxu0
    %v2325 = vadd.f32 0.0, %v2324
    %2326 = vmatprep.mubr.bf16.mxu0 %v1666
    %2327 = vmatmul.mubr.bf16.gmra.mxu0 %v1131
    %v2328 = vpop.f32.mrf.mxu0
    %v2329 = vadd.f32 0.0, %v2328
    %v2330 = vpop.f32.mrf.mxu0
    %v2331 = vadd.f32 0.0, %v2330
    %v2332 = vpop.f32.mrf.mxu0
    %v2333 = vadd.f32 0.0, %v2332
    %v2334 = vpop.f32.mrf.mxu0
    %v2335 = vadd.f32 0.0, %v2334
    %2336 = vmatprep.mubr.bf16.mxu0 %v1669
    %2337 = vmatmul.mubr.bf16.gmra.mxu0 %v1133
    %v2338 = vpop.f32.mrf.mxu0
    %v2339 = vadd.f32 0.0, %v2338
    %v2340 = vpop.f32.mrf.mxu0
    %v2341 = vadd.f32 0.0, %v2340
    %v2342 = vpop.f32.mrf.mxu0
    %v2343 = vadd.f32 0.0, %v2342
    %v2344 = vpop.f32.mrf.mxu0
    %v2345 = vadd.f32 0.0, %v2344
    %2346 = vmatprep.mubr.bf16.mxu0 %v1672
    %2347 = vmatmul.mubr.bf16.gmra.mxu0 %v1135
    %v2348 = vpop.f32.mrf.mxu0
    %v2349 = vadd.f32 0.0, %v2348
    %v2350 = vpop.f32.mrf.mxu0
    %v2351 = vadd.f32 0.0, %v2350
    %v2352 = vpop.f32.mrf.mxu0
    %v2353 = vadd.f32 0.0, %v2352
    %v2354 = vpop.f32.mrf.mxu0
    %v2355 = vadd.f32 0.0, %v2354
    %2356 = vmatprep.mubr.bf16.mxu0 %v1675
    %2357 = vmatmul.mubr.bf16.gmra.mxu0 %v1137
    %v2358 = vpop.f32.mrf.mxu0
    %v2359 = vadd.f32 0.0, %v2358
    %v2360 = vpop.f32.mrf.mxu0
    %v2361 = vadd.f32 0.0, %v2360
    %v2362 = vpop.f32.mrf.mxu0
    %v2363 = vadd.f32 0.0, %v2362
    %v2364 = vpop.f32.mrf.mxu0
    %v2365 = vadd.f32 0.0, %v2364
    %2366 = vmatprep.mubr.bf16.mxu0 %v1678
    %2367 = vmatmul.mubr.bf16.gmra.mxu0 %v1139
    %v2368 = vpop.f32.mrf.mxu0
    %v2369 = vadd.f32 0.0, %v2368
    %v2370 = vpop.f32.mrf.mxu0
    %v2371 = vadd.f32 0.0, %v2370
    %v2372 = vpop.f32.mrf.mxu0
    %v2373 = vadd.f32 0.0, %v2372
    %v2374 = vpop.f32.mrf.mxu0
    %v2375 = vadd.f32 0.0, %v2374
    %2376 = vmatprep.mubr.bf16.mxu0 %v1681
    %2377 = vmatmul.mubr.bf16.gmra.mxu0 %v1141
    %v2378 = vpop.f32.mrf.mxu0
    %v2379 = vadd.f32 0.0, %v2378
    %v2380 = vpop.f32.mrf.mxu0
    %v2381 = vadd.f32 0.0, %v2380
    %v2382 = vpop.f32.mrf.mxu0
    %v2383 = vadd.f32 0.0, %v2382
    %v2384 = vpop.f32.mrf.mxu0
    %v2385 = vadd.f32 0.0, %v2384
    %2386 = vmatprep.mubr.bf16.mxu0 %v1684
    %2387 = vmatmul.mubr.bf16.gmra.mxu0 %v1143
    %v2388 = vpop.f32.mrf.mxu0
    %v2389 = vadd.f32 0.0, %v2388
    %v2390 = vpop.f32.mrf.mxu0
    %v2391 = vadd.f32 0.0, %v2390
    %v2392 = vpop.f32.mrf.mxu0
    %v2393 = vadd.f32 0.0, %v2392
    %v2394 = vpop.f32.mrf.mxu0
    %v2395 = vadd.f32 0.0, %v2394
    %2396 = vmatprep.mubr.bf16.mxu0 %v1687
    %2397 = vmatmul.mubr.bf16.gmra.mxu0 %v1145
    %v2398 = vpop.f32.mrf.mxu0
    %v2399 = vadd.f32 0.0, %v2398
    %v2400 = vpop.f32.mrf.mxu0
    %v2401 = vadd.f32 0.0, %v2400
    %v2402 = vpop.f32.mrf.mxu0
    %v2403 = vadd.f32 0.0, %v2402
    %v2404 = vpop.f32.mrf.mxu0
    %v2405 = vadd.f32 0.0, %v2404
    %2406 = vmatprep.mubr.bf16.mxu0 %v1690
    %2407 = vmatmul.mubr.bf16.gmra.mxu0 %v1147
    %v2408 = vpop.f32.mrf.mxu0
    %v2409 = vadd.f32 0.0, %v2408
    %v2410 = vpop.f32.mrf.mxu0
    %v2411 = vadd.f32 0.0, %v2410
    %v2412 = vpop.f32.mrf.mxu0
    %v2413 = vadd.f32 0.0, %v2412
    %v2414 = vpop.f32.mrf.mxu0
    %v2415 = vadd.f32 0.0, %v2414
    %2416 = vmatprep.mubr.bf16.mxu0 %v1693
    %2417 = vmatmul.mubr.bf16.gmra.mxu0 %v1149
    %v2418 = vpop.f32.mrf.mxu0
    %v2419 = vadd.f32 0.0, %v2418
    %v2420 = vpop.f32.mrf.mxu0
    %v2421 = vadd.f32 0.0, %v2420
    %v2422 = vpop.f32.mrf.mxu0
    %v2423 = vadd.f32 0.0, %v2422
    %v2424 = vpop.f32.mrf.mxu0
    %v2425 = vadd.f32 0.0, %v2424
    %2426 = vmatprep.mubr.bf16.mxu0 %v1696
    %2427 = vmatmul.mubr.bf16.gmra.mxu0 %v1151
    %v2428 = vpop.f32.mrf.mxu0
    %v2429 = vadd.f32 0.0, %v2428
    %v2430 = vpop.f32.mrf.mxu0
    %v2431 = vadd.f32 0.0, %v2430
    %v2432 = vpop.f32.mrf.mxu0
    %v2433 = vadd.f32 0.0, %v2432
    %v2434 = vpop.f32.mrf.mxu0
    %v2435 = vadd.f32 0.0, %v2434
    %2436 = vmatprep.mubr.bf16.mxu0 %v1699
    %2437 = vmatmul.mubr.bf16.gmra.mxu0 %v1153
    %v2438 = vpop.f32.mrf.mxu0
    %v2439 = vadd.f32 0.0, %v2438
    %v2440 = vpop.f32.mrf.mxu0
    %v2441 = vadd.f32 0.0, %v2440
    %v2442 = vpop.f32.mrf.mxu0
    %v2443 = vadd.f32 0.0, %v2442
    %v2444 = vpop.f32.mrf.mxu0
    %v2445 = vadd.f32 0.0, %v2444
    %2446 = vmatprep.mubr.bf16.mxu0 %v1702
    %2447 = vmatmul.mubr.bf16.gmra.mxu0 %v1155
    %v2448 = vpop.f32.mrf.mxu0
    %v2449 = vadd.f32 0.0, %v2448
    %v2450 = vpop.f32.mrf.mxu0
    %v2451 = vadd.f32 0.0, %v2450
    %v2452 = vpop.f32.mrf.mxu0
    %v2453 = vadd.f32 0.0, %v2452
    %v2454 = vpop.f32.mrf.mxu0
    %v2455 = vadd.f32 0.0, %v2454
    %2456 = vmatprep.mubr.bf16.mxu0 %v1705
    %2457 = vmatmul.mubr.bf16.gmra.mxu0 %v1157
    %v2458 = vpop.f32.mrf.mxu0
    %v2459 = vadd.f32 0.0, %v2458
    %v2460 = vpop.f32.mrf.mxu0
    %v2461 = vadd.f32 0.0, %v2460
    %v2462 = vpop.f32.mrf.mxu0
    %v2463 = vadd.f32 0.0, %v2462
    %v2464 = vpop.f32.mrf.mxu0
    %v2465 = vadd.f32 0.0, %v2464
    %2466 = vmatprep.mubr.bf16.mxu0 %v1708
    %2467 = vmatmul.mubr.bf16.gmra.mxu0 %v1159
    %v2468 = vpop.f32.mrf.mxu0
    %v2469 = vadd.f32 0.0, %v2468
    %v2470 = vpop.f32.mrf.mxu0
    %v2471 = vadd.f32 0.0, %v2470
    %v2472 = vpop.f32.mrf.mxu0
    %v2473 = vadd.f32 0.0, %v2472
    %v2474 = vpop.f32.mrf.mxu0
    %v2475 = vadd.f32 0.0, %v2474
    %2476 = vmatprep.mubr.bf16.mxu0 %v1711
    %2477 = vmatmul.mubr.bf16.gmra.mxu0 %v1161
    %v2478 = vpop.f32.mrf.mxu0
    %v2479 = vadd.f32 0.0, %v2478
    %v2480 = vpop.f32.mrf.mxu0
    %v2481 = vadd.f32 0.0, %v2480
    %v2482 = vpop.f32.mrf.mxu0
    %v2483 = vadd.f32 0.0, %v2482
    %v2484 = vpop.f32.mrf.mxu0
    %v2485 = vadd.f32 0.0, %v2484
    %2486 = vmatprep.mubr.bf16.mxu0 %v1714
    %2487 = vmatmul.mubr.bf16.gmra.mxu0 %v1163
    %v2488 = vpop.f32.mrf.mxu0
    %v2489 = vadd.f32 0.0, %v2488
    %v2490 = vpop.f32.mrf.mxu0
    %v2491 = vadd.f32 0.0, %v2490
    %v2492 = vpop.f32.mrf.mxu0
    %v2493 = vadd.f32 0.0, %v2492
    %v2494 = vpop.f32.mrf.mxu0
    %v2495 = vadd.f32 0.0, %v2494
    %2496 = vmatprep.mubr.bf16.mxu0 %v1717
    %2497 = vmatmul.mubr.bf16.gmra.mxu0 %v1165
    %v2498 = vpop.f32.mrf.mxu0
    %v2499 = vadd.f32 0.0, %v2498
    %v2500 = vpop.f32.mrf.mxu0
    %v2501 = vadd.f32 0.0, %v2500
    %v2502 = vpop.f32.mrf.mxu0
    %v2503 = vadd.f32 0.0, %v2502
    %v2504 = vpop.f32.mrf.mxu0
    %v2505 = vadd.f32 0.0, %v2504
    %2506 = vmatprep.mubr.bf16.mxu0 %v1720
    %2507 = vmatmul.mubr.bf16.gmra.mxu0 %v1167
    %v2508 = vpop.f32.mrf.mxu0
    %v2509 = vadd.f32 0.0, %v2508
    %v2510 = vpop.f32.mrf.mxu0
    %v2511 = vadd.f32 0.0, %v2510
    %v2512 = vpop.f32.mrf.mxu0
    %v2513 = vadd.f32 0.0, %v2512
    %v2514 = vpop.f32.mrf.mxu0
    %v2515 = vadd.f32 0.0, %v2514
    %2516 = vmatprep.mubr.bf16.mxu0 %v1723
    %2517 = vmatmul.mubr.bf16.gmra.mxu0 %v1169
    %v2518 = vpop.f32.mrf.mxu0
    %v2519 = vadd.f32 0.0, %v2518
    %v2520 = vpop.f32.mrf.mxu0
    %v2521 = vadd.f32 0.0, %v2520
    %v2522 = vpop.f32.mrf.mxu0
    %v2523 = vadd.f32 0.0, %v2522
    %v2524 = vpop.f32.mrf.mxu0
    %v2525 = vadd.f32 0.0, %v2524
    %2526 = vmatprep.mubr.bf16.mxu0 %v1726
    %2527 = vmatmul.mubr.bf16.gmra.mxu0 %v1171
    %v2528 = vpop.f32.mrf.mxu0
    %v2529 = vadd.f32 0.0, %v2528
    %v2530 = vpop.f32.mrf.mxu0
    %v2531 = vadd.f32 0.0, %v2530
    %v2532 = vpop.f32.mrf.mxu0
    %v2533 = vadd.f32 0.0, %v2532
    %v2534 = vpop.f32.mrf.mxu0
    %v2535 = vadd.f32 0.0, %v2534
    %2536 = vmatprep.mubr.bf16.mxu0 %v1729
    %2537 = vmatmul.mubr.bf16.gmra.mxu0 %v1173
    %v2538 = vpop.f32.mrf.mxu0
    %v2539 = vadd.f32 0.0, %v2538
    %v2540 = vpop.f32.mrf.mxu0
    %v2541 = vadd.f32 0.0, %v2540
    %v2542 = vpop.f32.mrf.mxu0
    %v2543 = vadd.f32 0.0, %v2542
    %v2544 = vpop.f32.mrf.mxu0
    %v2545 = vadd.f32 0.0, %v2544
    %2546 = vmatprep.mubr.bf16.mxu0 %v1732
    %2547 = vmatmul.mubr.bf16.gmra.mxu0 %v1175
    %v2548 = vpop.f32.mrf.mxu0
    %v2549 = vadd.f32 0.0, %v2548
    %v2550 = vpop.f32.mrf.mxu0
    %v2551 = vadd.f32 0.0, %v2550
    %v2552 = vpop.f32.mrf.mxu0
    %v2553 = vadd.f32 0.0, %v2552
    %v2554 = vpop.f32.mrf.mxu0
    %v2555 = vadd.f32 0.0, %v2554
    %2556 = vmatprep.mubr.bf16.mxu0 %v1735
    %2557 = vmatmul.mubr.bf16.gmra.mxu0 %v1177
    %v2558 = vpop.f32.mrf.mxu0
    %v2559 = vadd.f32 0.0, %v2558
    %v2560 = vpop.f32.mrf.mxu0
    %v2561 = vadd.f32 0.0, %v2560
    %v2562 = vpop.f32.mrf.mxu0
    %v2563 = vadd.f32 0.0, %v2562
    %v2564 = vpop.f32.mrf.mxu0
    %v2565 = vadd.f32 0.0, %v2564
    %2566 = vmatprep.mubr.bf16.mxu0 %v1738
    %2567 = vmatmul.mubr.bf16.gmra.mxu0 %v1179
    %v2568 = vpop.f32.mrf.mxu0
    %v2569 = vadd.f32 0.0, %v2568
    %v2570 = vpop.f32.mrf.mxu0
    %v2571 = vadd.f32 0.0, %v2570
    %v2572 = vpop.f32.mrf.mxu0
    %v2573 = vadd.f32 0.0, %v2572
    %v2574 = vpop.f32.mrf.mxu0
    %v2575 = vadd.f32 0.0, %v2574
    %2576 = vmatprep.mubr.bf16.mxu0 %v1741
    %2577 = vmatmul.mubr.bf16.gmra.mxu0 %v1181
    %v2578 = vpop.f32.mrf.mxu0
    %v2579 = vadd.f32 0.0, %v2578
    %v2580 = vpop.f32.mrf.mxu0
    %v2581 = vadd.f32 0.0, %v2580
    %v2582 = vpop.f32.mrf.mxu0
    %v2583 = vadd.f32 0.0, %v2582
    %v2584 = vpop.f32.mrf.mxu0
    %v2585 = vadd.f32 0.0, %v2584
    %2586 = vmatprep.mubr.bf16.mxu0 %v1744
    %2587 = vmatmul.mubr.bf16.gmra.mxu0 %v1183
    %v2588 = vpop.f32.mrf.mxu0
    %v2589 = vadd.f32 0.0, %v2588
    %v2590 = vpop.f32.mrf.mxu0
    %v2591 = vadd.f32 0.0, %v2590
    %v2592 = vpop.f32.mrf.mxu0
    %v2593 = vadd.f32 0.0, %v2592
    %v2594 = vpop.f32.mrf.mxu0
    %v2595 = vadd.f32 0.0, %v2594
    %2596 = vmatprep.mubr.bf16.mxu0 %v1747
    %2597 = vmatmul.mubr.bf16.gmra.mxu0 %v1185
    %v2598 = vpop.f32.mrf.mxu0
    %v2599 = vadd.f32 0.0, %v2598
    %v2600 = vpop.f32.mrf.mxu0
    %v2601 = vadd.f32 0.0, %v2600
    %v2602 = vpop.f32.mrf.mxu0
    %v2603 = vadd.f32 0.0, %v2602
    %v2604 = vpop.f32.mrf.mxu0
    %v2605 = vadd.f32 0.0, %v2604
    %2606 = vmatprep.mubr.bf16.mxu0 %v1750
    %2607 = vmatmul.mubr.bf16.gmra.mxu0 %v1187
    %v2608 = vpop.f32.mrf.mxu0
    %v2609 = vadd.f32 0.0, %v2608
    %v2610 = vpop.f32.mrf.mxu0
    %v2611 = vadd.f32 0.0, %v2610
    %v2612 = vpop.f32.mrf.mxu0
    %v2613 = vadd.f32 0.0, %v2612
    %v2614 = vpop.f32.mrf.mxu0
    %v2615 = vadd.f32 0.0, %v2614
    %2616 = vmatprep.mubr.bf16.mxu0 %v1753
    %2617 = vmatmul.mubr.bf16.gmra.mxu0 %v1189
    %v2618 = vpop.f32.mrf.mxu0
    %v2619 = vadd.f32 0.0, %v2618
    %v2620 = vpop.f32.mrf.mxu0
    %v2621 = vadd.f32 0.0, %v2620
    %v2622 = vpop.f32.mrf.mxu0
    %v2623 = vadd.f32 0.0, %v2622
    %v2624 = vpop.f32.mrf.mxu0
    %v2625 = vadd.f32 0.0, %v2624
    %2626 = vmatprep.mubr.bf16.mxu0 %v1756
    %2627 = vmatmul.mubr.bf16.gmra.mxu0 %v1191
    %v2628 = vpop.f32.mrf.mxu0
    %v2629 = vadd.f32 0.0, %v2628
    %v2630 = vpop.f32.mrf.mxu0
    %v2631 = vadd.f32 0.0, %v2630
    %v2632 = vpop.f32.mrf.mxu0
    %v2633 = vadd.f32 0.0, %v2632
    %v2634 = vpop.f32.mrf.mxu0
    %v2635 = vadd.f32 0.0, %v2634
    %2636 = vmatprep.mubr.bf16.mxu0 %v1759
    %2637 = vmatmul.mubr.bf16.gmra.mxu0 %v1193
    %v2638 = vpop.f32.mrf.mxu0
    %v2639 = vadd.f32 0.0, %v2638
    %v2640 = vpop.f32.mrf.mxu0
    %v2641 = vadd.f32 0.0, %v2640
    %v2642 = vpop.f32.mrf.mxu0
    %v2643 = vadd.f32 0.0, %v2642
    %v2644 = vpop.f32.mrf.mxu0
    %v2645 = vadd.f32 0.0, %v2644
    %2646 = vmatprep.mubr.bf16.mxu0 %v1762
    %2647 = vmatmul.mubr.bf16.gmra.mxu0 %v1195
    %v2648 = vpop.f32.mrf.mxu0
    %v2649 = vadd.f32 0.0, %v2648
    %v2650 = vpop.f32.mrf.mxu0
    %v2651 = vadd.f32 0.0, %v2650
    %v2652 = vpop.f32.mrf.mxu0
    %v2653 = vadd.f32 0.0, %v2652
    %v2654 = vpop.f32.mrf.mxu0
    %v2655 = vadd.f32 0.0, %v2654
    %2656 = vmatprep.mubr.bf16.mxu0 %v1765
    %2657 = vmatmul.mubr.bf16.gmra.mxu0 %v1197
    %v2658 = vpop.f32.mrf.mxu0
    %v2659 = vadd.f32 0.0, %v2658
    %v2660 = vpop.f32.mrf.mxu0
    %v2661 = vadd.f32 0.0, %v2660
    %v2662 = vpop.f32.mrf.mxu0
    %v2663 = vadd.f32 0.0, %v2662
    %v2664 = vpop.f32.mrf.mxu0
    %v2665 = vadd.f32 0.0, %v2664
    %2666 = vmatprep.mubr.bf16.mxu0 %v1768
    %2667 = vmatmul.mubr.bf16.gmra.mxu0 %v1199
    %v2668 = vpop.f32.mrf.mxu0
    %v2669 = vadd.f32 0.0, %v2668
    %v2670 = vpop.f32.mrf.mxu0
    %v2671 = vadd.f32 0.0, %v2670
    %v2672 = vpop.f32.mrf.mxu0
    %v2673 = vadd.f32 0.0, %v2672
    %v2674 = vpop.f32.mrf.mxu0
    %v2675 = vadd.f32 0.0, %v2674
    %2676 = vmatprep.mubr.bf16.mxu0 %v1771
    %2677 = vmatmul.mubr.bf16.gmra.mxu0 %v1201
    %v2678 = vpop.f32.mrf.mxu0
    %v2679 = vadd.f32 0.0, %v2678
    %v2680 = vpop.f32.mrf.mxu0
    %v2681 = vadd.f32 0.0, %v2680
    %v2682 = vpop.f32.mrf.mxu0
    %v2683 = vadd.f32 0.0, %v2682
    %v2684 = vpop.f32.mrf.mxu0
    %v2685 = vadd.f32 0.0, %v2684
    %2686 = vmatprep.mubr.bf16.mxu0 %v1774
    %2687 = vmatmul.mubr.bf16.gmra.mxu0 %v1203
    %v2688 = vpop.f32.mrf.mxu0
    %v2689 = vadd.f32 0.0, %v2688
    %v2690 = vpop.f32.mrf.mxu0
    %v2691 = vadd.f32 0.0, %v2690
    %v2692 = vpop.f32.mrf.mxu0
    %v2693 = vadd.f32 0.0, %v2692
    %v2694 = vpop.f32.mrf.mxu0
    %v2695 = vadd.f32 0.0, %v2694
    %2696 = vmatprep.mubr.bf16.mxu0 %v1777
    %2697 = vmatmul.mubr.bf16.gmra.mxu0 %v1205
    %v2698 = vpop.f32.mrf.mxu0
    %v2699 = vadd.f32 0.0, %v2698
    %v2700 = vpop.f32.mrf.mxu0
    %v2701 = vadd.f32 0.0, %v2700
    %v2702 = vpop.f32.mrf.mxu0
    %v2703 = vadd.f32 0.0, %v2702
    %v2704 = vpop.f32.mrf.mxu0
    %v2705 = vadd.f32 0.0, %v2704
    %2706 = vmatprep.mubr.bf16.mxu0 %v1780
    %2707 = vmatmul.mubr.bf16.gmra.mxu0 %v1207
    %v2708 = vpop.f32.mrf.mxu0
    %v2709 = vadd.f32 0.0, %v2708
    %v2710 = vpop.f32.mrf.mxu0
    %v2711 = vadd.f32 0.0, %v2710
    %v2712 = vpop.f32.mrf.mxu0
    %v2713 = vadd.f32 0.0, %v2712
    %v2714 = vpop.f32.mrf.mxu0
    %v2715 = vadd.f32 0.0, %v2714
    %2716 = vmatprep.mubr.bf16.mxu0 %v1783
    %2717 = vmatmul.mubr.bf16.gmra.mxu0 %v1209
    %v2718 = vpop.f32.mrf.mxu0
    %v2719 = vadd.f32 0.0, %v2718
    %v2720 = vpop.f32.mrf.mxu0
    %v2721 = vadd.f32 0.0, %v2720
    %v2722 = vpop.f32.mrf.mxu0
    %v2723 = vadd.f32 0.0, %v2722
    %v2724 = vpop.f32.mrf.mxu0
    %v2725 = vadd.f32 0.0, %v2724
    %2726 = vmatprep.mubr.bf16.mxu0 %v1786
    %2727 = vmatmul.mubr.bf16.gmra.mxu0 %v1211
    %v2728 = vpop.f32.mrf.mxu0
    %v2729 = vadd.f32 0.0, %v2728
    %v2730 = vpop.f32.mrf.mxu0
    %v2731 = vadd.f32 0.0, %v2730
    %v2732 = vpop.f32.mrf.mxu0
    %v2733 = vadd.f32 0.0, %v2732
    %v2734 = vpop.f32.mrf.mxu0
    %v2735 = vadd.f32 0.0, %v2734
    %2736 = vmatprep.mubr.bf16.mxu0 %v1789
    %2737 = vmatmul.mubr.bf16.gmra.mxu0 %v1213
    %v2738 = vpop.f32.mrf.mxu0
    %v2739 = vadd.f32 0.0, %v2738
    %v2740 = vpop.f32.mrf.mxu0
    %v2741 = vadd.f32 0.0, %v2740
    %v2742 = vpop.f32.mrf.mxu0
    %v2743 = vadd.f32 0.0, %v2742
    %v2744 = vpop.f32.mrf.mxu0
    %v2745 = vadd.f32 0.0, %v2744
    %2746 = vmatprep.mubr.bf16.mxu0 %v1792
    %2747 = vmatmul.mubr.bf16.gmra.mxu0 %v1215
    %v2748 = vpop.f32.mrf.mxu0
    %v2749 = vadd.f32 0.0, %v2748
    %v2750 = vpop.f32.mrf.mxu0
    %v2751 = vadd.f32 0.0, %v2750
    %v2752 = vpop.f32.mrf.mxu0
    %v2753 = vadd.f32 0.0, %v2752
    %v2754 = vpop.f32.mrf.mxu0
    %v2755 = vadd.f32 0.0, %v2754
    %2756 = vmatprep.mubr.bf16.mxu0 %v1795
    %2757 = vmatmul.mubr.bf16.gmra.mxu0 %v1217
    %v2758 = vpop.f32.mrf.mxu0
    %v2759 = vadd.f32 0.0, %v2758
    %v2760 = vpop.f32.mrf.mxu0
    %v2761 = vadd.f32 0.0, %v2760
    %v2762 = vpop.f32.mrf.mxu0
    %v2763 = vadd.f32 0.0, %v2762
    %v2764 = vpop.f32.mrf.mxu0
    %v2765 = vadd.f32 0.0, %v2764
    %2766 = vmatprep.mubr.bf16.mxu0 %v1798
    %2767 = vmatmul.mubr.bf16.gmra.mxu0 %v1219
    %v2768 = vpop.f32.mrf.mxu0
    %v2769 = vadd.f32 0.0, %v2768
    %v2770 = vpop.f32.mrf.mxu0
    %v2771 = vadd.f32 0.0, %v2770
    %v2772 = vpop.f32.mrf.mxu0
    %v2773 = vadd.f32 0.0, %v2772
    %v2774 = vpop.f32.mrf.mxu0
    %v2775 = vadd.f32 0.0, %v2774
    %2776 = vmatprep.mubr.bf16.mxu0 %v1801
    %2777 = vmatmul.mubr.bf16.gmra.mxu0 %v1221
    %v2778 = vpop.f32.mrf.mxu0
    %v2779 = vadd.f32 0.0, %v2778
    %v2780 = vpop.f32.mrf.mxu0
    %v2781 = vadd.f32 0.0, %v2780
    %v2782 = vpop.f32.mrf.mxu0
    %v2783 = vadd.f32 0.0, %v2782
    %v2784 = vpop.f32.mrf.mxu0
    %v2785 = vadd.f32 0.0, %v2784
    %2786 = vmatprep.mubr.bf16.mxu0 %v1804
    %2787 = vmatmul.mubr.bf16.gmra.mxu0 %v1223
    %v2788 = vpop.f32.mrf.mxu0
    %v2789 = vadd.f32 0.0, %v2788
    %v2790 = vpop.f32.mrf.mxu0
    %v2791 = vadd.f32 0.0, %v2790
    %v2792 = vpop.f32.mrf.mxu0
    %v2793 = vadd.f32 0.0, %v2792
    %v2794 = vpop.f32.mrf.mxu0
    %v2795 = vadd.f32 0.0, %v2794
    %2796 = vmatprep.mubr.bf16.mxu0 %v1807
    %2797 = vmatmul.mubr.bf16.gmra.mxu0 %v1225
    %v2798 = vpop.f32.mrf.mxu0
    %v2799 = vadd.f32 0.0, %v2798
    %v2800 = vpop.f32.mrf.mxu0
    %v2801 = vadd.f32 0.0, %v2800
    %v2802 = vpop.f32.mrf.mxu0
    %v2803 = vadd.f32 0.0, %v2802
    %v2804 = vpop.f32.mrf.mxu0
    %v2805 = vadd.f32 0.0, %v2804
    %2806 = vmatprep.mubr.bf16.mxu0 %v1810
    %2807 = vmatmul.mubr.bf16.gmra.mxu0 %v1227
    %v2808 = vpop.f32.mrf.mxu0
    %v2809 = vadd.f32 0.0, %v2808
    %v2810 = vpop.f32.mrf.mxu0
    %v2811 = vadd.f32 0.0, %v2810
    %v2812 = vpop.f32.mrf.mxu0
    %v2813 = vadd.f32 0.0, %v2812
    %v2814 = vpop.f32.mrf.mxu0
    %v2815 = vadd.f32 0.0, %v2814
    %2816 = vmatprep.mubr.bf16.mxu0 %v1813
    %2817 = vmatmul.mubr.bf16.gmra.mxu0 %v1229
    %v2818 = vpop.f32.mrf.mxu0
    %v2819 = vadd.f32 0.0, %v2818
    %v2820 = vpop.f32.mrf.mxu0
    %v2821 = vadd.f32 0.0, %v2820
    %v2822 = vpop.f32.mrf.mxu0
    %v2823 = vadd.f32 0.0, %v2822
    %v2824 = vpop.f32.mrf.mxu0
    %v2825 = vadd.f32 0.0, %v2824
    %2826 = vmatprep.mubr.bf16.mxu0 %v1816
    %2827 = vmatmul.mubr.bf16.gmra.mxu0 %v1231
    %v2828 = vpop.f32.mrf.mxu0
    %v2829 = vadd.f32 0.0, %v2828
    %v2830 = vpop.f32.mrf.mxu0
    %v2831 = vadd.f32 0.0, %v2830
    %v2832 = vpop.f32.mrf.mxu0
    %v2833 = vadd.f32 0.0, %v2832
    %v2834 = vpop.f32.mrf.mxu0
    %v2835 = vadd.f32 0.0, %v2834
    %2836 = vmatprep.mubr.bf16.mxu0 %v1819
    %2837 = vmatmul.mubr.bf16.gmra.mxu0 %v1233
    %v2838 = vpop.f32.mrf.mxu0
    %v2839 = vadd.f32 0.0, %v2838
    %v2840 = vpop.f32.mrf.mxu0
    %v2841 = vadd.f32 0.0, %v2840
    %v2842 = vpop.f32.mrf.mxu0
    %v2843 = vadd.f32 0.0, %v2842
    %v2844 = vpop.f32.mrf.mxu0
    %v2845 = vadd.f32 0.0, %v2844
    %2846 = vmatprep.mubr.bf16.mxu0 %v1822
    %2847 = vmatmul.mubr.bf16.gmra.mxu0 %v1235
    %v2848 = vpop.f32.mrf.mxu0
    %v2849 = vadd.f32 0.0, %v2848
    %v2850 = vpop.f32.mrf.mxu0
    %v2851 = vadd.f32 0.0, %v2850
    %v2852 = vpop.f32.mrf.mxu0
    %v2853 = vadd.f32 0.0, %v2852
    %v2854 = vpop.f32.mrf.mxu0
    %v2855 = vadd.f32 0.0, %v2854
    %2856 = vmatprep.mubr.bf16.mxu0 %v1825
    %2857 = vmatmul.mubr.bf16.gmra.mxu0 %v1237
    %v2858 = vpop.f32.mrf.mxu0
    %v2859 = vadd.f32 0.0, %v2858
    %v2860 = vpop.f32.mrf.mxu0
    %v2861 = vadd.f32 0.0, %v2860
    %v2862 = vpop.f32.mrf.mxu0
    %v2863 = vadd.f32 0.0, %v2862
    %v2864 = vpop.f32.mrf.mxu0
    %v2865 = vadd.f32 0.0, %v2864
    %2866 = vmatprep.mubr.bf16.mxu0 %v1828
    %2867 = vmatmul.mubr.bf16.gmra.mxu0 %v1239
    %v2868 = vpop.f32.mrf.mxu0
    %v2869 = vadd.f32 0.0, %v2868
    %v2870 = vpop.f32.mrf.mxu0
    %v2871 = vadd.f32 0.0, %v2870
    %v2872 = vpop.f32.mrf.mxu0
    %v2873 = vadd.f32 0.0, %v2872
    %v2874 = vpop.f32.mrf.mxu0
    %v2875 = vadd.f32 0.0, %v2874
    %2876 = vmatprep.mubr.bf16.mxu0 %v1831
    %2877 = vmatmul.mubr.bf16.gmra.mxu0 %v1241
    %v2878 = vpop.f32.mrf.mxu0
    %v2879 = vadd.f32 0.0, %v2878
    %v2880 = vpop.f32.mrf.mxu0
    %v2881 = vadd.f32 0.0, %v2880
    %v2882 = vpop.f32.mrf.mxu0
    %v2883 = vadd.f32 0.0, %v2882
    %v2884 = vpop.f32.mrf.mxu0
    %v2885 = vadd.f32 0.0, %v2884
    %2886 = vmatprep.mubr.bf16.mxu0 %v1834
    %2887 = vmatmul.mubr.bf16.gmra.mxu0 %v1243
    %v2888 = vpop.f32.mrf.mxu0
    %v2889 = vadd.f32 0.0, %v2888
    %v2890 = vpop.f32.mrf.mxu0
    %v2891 = vadd.f32 0.0, %v2890
    %v2892 = vpop.f32.mrf.mxu0
    %v2893 = vadd.f32 0.0, %v2892
    %v2894 = vpop.f32.mrf.mxu0
    %v2895 = vadd.f32 0.0, %v2894
    %2896 = vmatprep.mubr.bf16.mxu0 %v1837
    %2897 = vmatmul.mubr.bf16.gmra.mxu0 %v1245
    %v2898 = vpop.f32.mrf.mxu0
    %v2899 = vadd.f32 0.0, %v2898
    %v2900 = vpop.f32.mrf.mxu0
    %v2901 = vadd.f32 0.0, %v2900
    %v2902 = vpop.f32.mrf.mxu0
    %v2903 = vadd.f32 0.0, %v2902
    %v2904 = vpop.f32.mrf.mxu0
    %v2905 = vadd.f32 0.0, %v2904
    %2906 = vmatprep.mubr.bf16.mxu0 %v1840
    %2907 = vmatmul.mubr.bf16.gmra.mxu0 %v1247
    %v2908 = vpop.f32.mrf.mxu0
    %v2909 = vadd.f32 0.0, %v2908
    %v2910 = vpop.f32.mrf.mxu0
    %v2911 = vadd.f32 0.0, %v2910
    %v2912 = vpop.f32.mrf.mxu0
    %v2913 = vadd.f32 0.0, %v2912
    %v2914 = vpop.f32.mrf.mxu0
    %v2915 = vadd.f32 0.0, %v2914
    %2916 = vmatprep.mubr.bf16.mxu0 %v1843
    %2917 = vmatmul.mubr.bf16.gmra.mxu0 %v1249
    %v2918 = vpop.f32.mrf.mxu0
    %v2919 = vadd.f32 0.0, %v2918
    %v2920 = vpop.f32.mrf.mxu0
    %v2921 = vadd.f32 0.0, %v2920
    %v2922 = vpop.f32.mrf.mxu0
    %v2923 = vadd.f32 0.0, %v2922
    %v2924 = vpop.f32.mrf.mxu0
    %v2925 = vadd.f32 0.0, %v2924
    %2926 = vmatprep.mubr.bf16.mxu0 %v1846
    %2927 = vmatmul.mubr.bf16.gmra.mxu0 %v1251
    %v2928 = vpop.f32.mrf.mxu0
    %v2929 = vadd.f32 0.0, %v2928
    %v2930 = vpop.f32.mrf.mxu0
    %v2931 = vadd.f32 0.0, %v2930
    %v2932 = vpop.f32.mrf.mxu0
    %v2933 = vadd.f32 0.0, %v2932
    %v2934 = vpop.f32.mrf.mxu0
    %v2935 = vadd.f32 0.0, %v2934
    %2936 = vmatprep.mubr.bf16.mxu0 %v1849
    %2937 = vmatmul.mubr.bf16.gmra.mxu0 %v1253
    %v2938 = vpop.f32.mrf.mxu0
    %v2939 = vadd.f32 0.0, %v2938
    %v2940 = vpop.f32.mrf.mxu0
    %v2941 = vadd.f32 0.0, %v2940
    %v2942 = vpop.f32.mrf.mxu0
    %v2943 = vadd.f32 0.0, %v2942
    %v2944 = vpop.f32.mrf.mxu0
    %v2945 = vadd.f32 0.0, %v2944
    %2946 = vmatprep.mubr.bf16.mxu0 %v1852
    %2947 = vmatmul.mubr.bf16.gmra.mxu0 %v1255
    %v2948 = vpop.f32.mrf.mxu0
    %v2949 = vadd.f32 0.0, %v2948
    %v2950 = vpop.f32.mrf.mxu0
    %v2951 = vadd.f32 0.0, %v2950
    %v2952 = vpop.f32.mrf.mxu0
    %v2953 = vadd.f32 0.0, %v2952
    %v2954 = vpop.f32.mrf.mxu0
    %v2955 = vadd.f32 0.0, %v2954
    %2956 = vmatprep.mubr.bf16.mxu0 %v1855
    %2957 = vmatmul.mubr.bf16.gmra.mxu0 %v1257
    %v2958 = vpop.f32.mrf.mxu0
    %v2959 = vadd.f32 0.0, %v2958
    %v2960 = vpop.f32.mrf.mxu0
    %v2961 = vadd.f32 0.0, %v2960
    %v2962 = vpop.f32.mrf.mxu0
    %v2963 = vadd.f32 0.0, %v2962
    %v2964 = vpop.f32.mrf.mxu0
    %v2965 = vadd.f32 0.0, %v2964
    %2966 = vmatprep.mubr.bf16.mxu0 %v1858
    %2967 = vmatmul.mubr.bf16.gmra.mxu0 %v1259
    %v2968 = vpop.f32.mrf.mxu0
    %v2969 = vadd.f32 0.0, %v2968
    %v2970 = vpop.f32.mrf.mxu0
    %v2971 = vadd.f32 0.0, %v2970
    %v2972 = vpop.f32.mrf.mxu0
    %v2973 = vadd.f32 0.0, %v2972
    %v2974 = vpop.f32.mrf.mxu0
    %v2975 = vadd.f32 0.0, %v2974
    %2976 = vmatprep.mubr.bf16.mxu0 %v1861
    %2977 = vmatmul.mubr.bf16.gmra.mxu0 %v1261
    %v2978 = vpop.f32.mrf.mxu0
    %v2979 = vadd.f32 0.0, %v2978
    %v2980 = vpop.f32.mrf.mxu0
    %v2981 = vadd.f32 0.0, %v2980
    %v2982 = vpop.f32.mrf.mxu0
    %v2983 = vadd.f32 0.0, %v2982
    %v2984 = vpop.f32.mrf.mxu0
    %v2985 = vadd.f32 0.0, %v2984
    %2986 = vmatprep.mubr.bf16.mxu0 %v1864
    %2987 = vmatmul.mubr.bf16.gmra.mxu0 %v1263
    %v2988 = vpop.f32.mrf.mxu0
    %v2989 = vadd.f32 0.0, %v2988
    %v2990 = vpop.f32.mrf.mxu0
    %v2991 = vadd.f32 0.0, %v2990
    %v2992 = vpop.f32.mrf.mxu0
    %v2993 = vadd.f32 0.0, %v2992
    %v2994 = vpop.f32.mrf.mxu0
    %v2995 = vadd.f32 0.0, %v2994
    %2996 = vmatprep.mubr.bf16.mxu0 %v1867
    %2997 = vmatmul.mubr.bf16.gmra.mxu0 %v1265
    %v2998 = vpop.f32.mrf.mxu0
    %v2999 = vadd.f32 0.0, %v2998
    %v3000 = vpop.f32.mrf.mxu0
    %v3001 = vadd.f32 0.0, %v3000
    %v3002 = vpop.f32.mrf.mxu0
    %v3003 = vadd.f32 0.0, %v3002
    %v3004 = vpop.f32.mrf.mxu0
    %v3005 = vadd.f32 0.0, %v3004
    %3006 = vmatprep.mubr.bf16.mxu0 %v1870
    %3007 = vmatmul.mubr.bf16.gmra.mxu0 %v1267
    %v3008 = vpop.f32.mrf.mxu0
    %v3009 = vadd.f32 0.0, %v3008
    %v3010 = vpop.f32.mrf.mxu0
    %v3011 = vadd.f32 0.0, %v3010
    %v3012 = vpop.f32.mrf.mxu0
    %v3013 = vadd.f32 0.0, %v3012
    %v3014 = vpop.f32.mrf.mxu0
    %v3015 = vadd.f32 0.0, %v3014
    %3016 = vmatprep.mubr.bf16.mxu0 %v1873
    %3017 = vmatmul.mubr.bf16.gmra.mxu0 %v1269
    %v3018 = vpop.f32.mrf.mxu0
    %v3019 = vadd.f32 0.0, %v3018
    %v3020 = vpop.f32.mrf.mxu0
    %v3021 = vadd.f32 0.0, %v3020
    %v3022 = vpop.f32.mrf.mxu0
    %v3023 = vadd.f32 0.0, %v3022
    %v3024 = vpop.f32.mrf.mxu0
    %v3025 = vadd.f32 0.0, %v3024
    %3026 = vmatprep.mubr.bf16.mxu0 %v1876
    %3027 = vmatmul.mubr.bf16.gmra.mxu0 %v1271
    %v3028 = vpop.f32.mrf.mxu0
    %v3029 = vadd.f32 0.0, %v3028
    %v3030 = vpop.f32.mrf.mxu0
    %v3031 = vadd.f32 0.0, %v3030
    %v3032 = vpop.f32.mrf.mxu0
    %v3033 = vadd.f32 0.0, %v3032
    %v3034 = vpop.f32.mrf.mxu0
    %v3035 = vadd.f32 0.0, %v3034
    %3036 = vmatprep.mubr.bf16.mxu0 %v1879
    %3037 = vmatmul.mubr.bf16.gmra.mxu0 %v1273
    %v3038 = vpop.f32.mrf.mxu0
    %v3039 = vadd.f32 0.0, %v3038
    %v3040 = vpop.f32.mrf.mxu0
    %v3041 = vadd.f32 0.0, %v3040
    %v3042 = vpop.f32.mrf.mxu0
    %v3043 = vadd.f32 0.0, %v3042
    %v3044 = vpop.f32.mrf.mxu0
    %v3045 = vadd.f32 0.0, %v3044
    %3046 = vmatprep.mubr.bf16.mxu0 %v1882
    %3047 = vmatmul.mubr.bf16.gmra.mxu0 %v1275
    %v3048 = vpop.f32.mrf.mxu0
    %v3049 = vadd.f32 0.0, %v3048
    %v3050 = vpop.f32.mrf.mxu0
    %v3051 = vadd.f32 0.0, %v3050
    %v3052 = vpop.f32.mrf.mxu0
    %v3053 = vadd.f32 0.0, %v3052
    %v3054 = vpop.f32.mrf.mxu0
    %v3055 = vadd.f32 0.0, %v3054
    %3056 = vmatprep.mubr.bf16.mxu0 %v1885
    %3057 = vmatmul.mubr.bf16.gmra.mxu0 %v1277
    %v3058 = vpop.f32.mrf.mxu0
    %v3059 = vadd.f32 0.0, %v3058
    %v3060 = vpop.f32.mrf.mxu0
    %v3061 = vadd.f32 0.0, %v3060
    %v3062 = vpop.f32.mrf.mxu0
    %v3063 = vadd.f32 0.0, %v3062
    %v3064 = vpop.f32.mrf.mxu0
    %v3065 = vadd.f32 0.0, %v3064
    %3066 = vmatprep.mubr.bf16.mxu0 %v1888
    %3067 = vmatmul.mubr.bf16.gmra.mxu0 %v1279
    %v3068 = vpop.f32.mrf.mxu0
    %v3069 = vadd.f32 0.0, %v3068
    %v3070 = vpop.f32.mrf.mxu0
    %v3071 = vadd.f32 0.0, %v3070
    %v3072 = vpop.f32.mrf.mxu0
    %v3073 = vadd.f32 0.0, %v3072
    %v3074 = vpop.f32.mrf.mxu0
    %v3075 = vadd.f32 0.0, %v3074
    %3076 = vmatprep.mubr.bf16.mxu0 %v1891
    %3077 = vmatmul.mubr.bf16.gmra.mxu0 %v1281
    %v3078 = vpop.f32.mrf.mxu0
    %v3079 = vadd.f32 0.0, %v3078
    %v3080 = vpop.f32.mrf.mxu0
    %v3081 = vadd.f32 0.0, %v3080
    %v3082 = vpop.f32.mrf.mxu0
    %v3083 = vadd.f32 0.0, %v3082
    %v3084 = vpop.f32.mrf.mxu0
    %v3085 = vadd.f32 0.0, %v3084
    %3086 = vmatprep.mubr.bf16.mxu0 %v1894
    %3087 = vmatmul.mubr.bf16.gmra.mxu0 %v1283
    %v3088 = vpop.f32.mrf.mxu0
    %v3089 = vadd.f32 0.0, %v3088
    %v3090 = vpop.f32.mrf.mxu0
    %v3091 = vadd.f32 0.0, %v3090
    %v3092 = vpop.f32.mrf.mxu0
    %v3093 = vadd.f32 0.0, %v3092
    %v3094 = vpop.f32.mrf.mxu0
    %v3095 = vadd.f32 0.0, %v3094
    %3096 = vmatprep.mubr.bf16.mxu0 %v1897
    %3097 = vmatmul.mubr.bf16.gmra.mxu0 %v1285
    %v3098 = vpop.f32.mrf.mxu0
    %v3099 = vadd.f32 0.0, %v3098
    %v3100 = vpop.f32.mrf.mxu0
    %v3101 = vadd.f32 0.0, %v3100
    %v3102 = vpop.f32.mrf.mxu0
    %v3103 = vadd.f32 0.0, %v3102
    %v3104 = vpop.f32.mrf.mxu0
    %v3105 = vadd.f32 0.0, %v3104
    %3106 = vmatprep.mubr.bf16.mxu0 %v1900
    %3107 = vmatmul.mubr.bf16.gmra.mxu0 %v1287
    %v3108 = vpop.f32.mrf.mxu0
    %v3109 = vadd.f32 0.0, %v3108
    %v3110 = vpop.f32.mrf.mxu0
    %v3111 = vadd.f32 0.0, %v3110
    %v3112 = vpop.f32.mrf.mxu0
    %v3113 = vadd.f32 0.0, %v3112
    %v3114 = vpop.f32.mrf.mxu0
    %v3115 = vadd.f32 0.0, %v3114
    %3116 = vmatprep.mubr.bf16.mxu0 %v1903
    %3117 = vmatmul.mubr.bf16.gmra.mxu0 %v1289
    %v3118 = vpop.f32.mrf.mxu0
    %v3119 = vadd.f32 0.0, %v3118
    %v3120 = vpop.f32.mrf.mxu0
    %v3121 = vadd.f32 0.0, %v3120
    %v3122 = vpop.f32.mrf.mxu0
    %v3123 = vadd.f32 0.0, %v3122
    %v3124 = vpop.f32.mrf.mxu0
    %v3125 = vadd.f32 0.0, %v3124
    %3126 = vmatprep.mubr.bf16.mxu0 %v1906
    %3127 = vmatmul.mubr.bf16.gmra.mxu0 %v1291
    %v3128 = vpop.f32.mrf.mxu0
    %v3129 = vadd.f32 0.0, %v3128
    %v3130 = vpop.f32.mrf.mxu0
    %v3131 = vadd.f32 0.0, %v3130
    %v3132 = vpop.f32.mrf.mxu0
    %v3133 = vadd.f32 0.0, %v3132
    %v3134 = vpop.f32.mrf.mxu0
    %v3135 = vadd.f32 0.0, %v3134
    %3136 = vmatprep.mubr.bf16.mxu0 %v1909
    %3137 = vmatmul.mubr.bf16.gmra.mxu0 %v1293
    %v3138 = vpop.f32.mrf.mxu0
    %v3139 = vadd.f32 0.0, %v3138
    %v3140 = vpop.f32.mrf.mxu0
    %v3141 = vadd.f32 0.0, %v3140
    %v3142 = vpop.f32.mrf.mxu0
    %v3143 = vadd.f32 0.0, %v3142
    %v3144 = vpop.f32.mrf.mxu0
    %v3145 = vadd.f32 0.0, %v3144
    %3146 = vmatprep.mubr.bf16.mxu0 %v1912
    %3147 = vmatmul.mubr.bf16.gmra.mxu0 %v1295
    %v3148 = vpop.f32.mrf.mxu0
    %v3149 = vadd.f32 0.0, %v3148
    %v3150 = vpop.f32.mrf.mxu0
    %v3151 = vadd.f32 0.0, %v3150
    %v3152 = vpop.f32.mrf.mxu0
    %v3153 = vadd.f32 0.0, %v3152
    %v3154 = vpop.f32.mrf.mxu0
    %v3155 = vadd.f32 0.0, %v3154
    %3156 = vmatprep.mubr.bf16.mxu0 %v1915
    %3157 = vmatmul.mubr.bf16.gmra.mxu0 %v1297
    %v3158 = vpop.f32.mrf.mxu0
    %v3159 = vadd.f32 0.0, %v3158
    %v3160 = vpop.f32.mrf.mxu0
    %v3161 = vadd.f32 0.0, %v3160
    %v3162 = vpop.f32.mrf.mxu0
    %v3163 = vadd.f32 0.0, %v3162
    %v3164 = vpop.f32.mrf.mxu0
    %v3165 = vadd.f32 0.0, %v3164
    %3166 = vmatprep.mubr.bf16.mxu0 %v1918
    %3167 = vmatmul.mubr.bf16.gmra.mxu0 %v1299
    %v3168 = vpop.f32.mrf.mxu0
    %v3169 = vadd.f32 0.0, %v3168
    %v3170 = vpop.f32.mrf.mxu0
    %v3171 = vadd.f32 0.0, %v3170
    %v3172 = vpop.f32.mrf.mxu0
    %v3173 = vadd.f32 0.0, %v3172
    %v3174 = vpop.f32.mrf.mxu0
    %v3175 = vadd.f32 0.0, %v3174
    %3176 = vmatprep.mubr.bf16.mxu0 %v1921
    %3177 = vmatmul.mubr.bf16.gmra.mxu0 %v1301
    %v3178 = vpop.f32.mrf.mxu0
    %v3179 = vadd.f32 0.0, %v3178
    %v3180 = vpop.f32.mrf.mxu0
    %v3181 = vadd.f32 0.0, %v3180
    %v3182 = vpop.f32.mrf.mxu0
    %v3183 = vadd.f32 0.0, %v3182
    %v3184 = vpop.f32.mrf.mxu0
    %v3185 = vadd.f32 0.0, %v3184
    %3186 = vmatprep.mubr.bf16.mxu0 %v1924
    %3187 = vmatmul.mubr.bf16.gmra.mxu0 %v1303
    %v3188 = vpop.f32.mrf.mxu0
    %v3189 = vadd.f32 0.0, %v3188
    %v3190 = vpop.f32.mrf.mxu0
    %v3191 = vadd.f32 0.0, %v3190
    %v3192 = vpop.f32.mrf.mxu0
    %v3193 = vadd.f32 0.0, %v3192
    %v3194 = vpop.f32.mrf.mxu0
    %v3195 = vadd.f32 0.0, %v3194
    %3196 = vmatprep.mubr.bf16.mxu0 %v1927
    %3197 = vmatmul.mubr.bf16.gmra.mxu0 %v1305
    %v3198 = vpop.f32.mrf.mxu0
    %v3199 = vadd.f32 0.0, %v3198
    %v3200 = vpop.f32.mrf.mxu0
    %v3201 = vadd.f32 0.0, %v3200
    %v3202 = vpop.f32.mrf.mxu0
    %v3203 = vadd.f32 0.0, %v3202
    %v3204 = vpop.f32.mrf.mxu0
    %v3205 = vadd.f32 0.0, %v3204
    %3206 = vmatprep.mubr.bf16.mxu0 %v1930
    %3207 = vmatmul.mubr.bf16.gmra.mxu0 %v1307
    %v3208 = vpop.f32.mrf.mxu0
    %v3209 = vadd.f32 0.0, %v3208
    %v3210 = vpop.f32.mrf.mxu0
    %v3211 = vadd.f32 0.0, %v3210
    %v3212 = vpop.f32.mrf.mxu0
    %v3213 = vadd.f32 0.0, %v3212
    %v3214 = vpop.f32.mrf.mxu0
    %v3215 = vadd.f32 0.0, %v3214
    %3216 = vmatprep.mubr.bf16.mxu0 %v1933
    %3217 = vmatmul.mubr.bf16.gmra.mxu0 %v1309
    %v3218 = vpop.f32.mrf.mxu0
    %v3219 = vadd.f32 0.0, %v3218
    %v3220 = vpop.f32.mrf.mxu0
    %v3221 = vadd.f32 0.0, %v3220
    %v3222 = vpop.f32.mrf.mxu0
    %v3223 = vadd.f32 0.0, %v3222
    %v3224 = vpop.f32.mrf.mxu0
    %v3225 = vadd.f32 0.0, %v3224
    %3226 = vmatprep.mubr.bf16.mxu0 %v1936
    %3227 = vmatmul.mubr.bf16.gmra.mxu0 %v1311
    %v3228 = vpop.f32.mrf.mxu0
    %v3229 = vadd.f32 0.0, %v3228
    %v3230 = vpop.f32.mrf.mxu0
    %v3231 = vadd.f32 0.0, %v3230
    %v3232 = vpop.f32.mrf.mxu0
    %v3233 = vadd.f32 0.0, %v3232
    %v3234 = vpop.f32.mrf.mxu0
    %v3235 = vadd.f32 0.0, %v3234
    %3236 = vmatprep.mubr.bf16.mxu0 %v1939
    %3237 = vmatmul.mubr.bf16.gmra.mxu0 %v1313
    %v3238 = vpop.f32.mrf.mxu0
    %v3239 = vadd.f32 0.0, %v3238
    %v3240 = vpop.f32.mrf.mxu0
    %v3241 = vadd.f32 0.0, %v3240
    %v3242 = vpop.f32.mrf.mxu0
    %v3243 = vadd.f32 0.0, %v3242
    %v3244 = vpop.f32.mrf.mxu0
    %v3245 = vadd.f32 0.0, %v3244
    %3246 = vmatprep.mubr.bf16.mxu0 %v1942
    %3247 = vmatmul.mubr.bf16.gmra.mxu0 %v1315
    %v3248 = vpop.f32.mrf.mxu0
    %v3249 = vadd.f32 0.0, %v3248
    %v3250 = vpop.f32.mrf.mxu0
    %v3251 = vadd.f32 0.0, %v3250
    %v3252 = vpop.f32.mrf.mxu0
    %v3253 = vadd.f32 0.0, %v3252
    %v3254 = vpop.f32.mrf.mxu0
    %v3255 = vadd.f32 0.0, %v3254
    %3256 = vmatprep.mubr.bf16.mxu0 %v1945
    %3257 = vmatmul.mubr.bf16.gmra.mxu0 %v1317
    %v3258 = vpop.f32.mrf.mxu0
    %v3259 = vadd.f32 0.0, %v3258
    %v3260 = vpop.f32.mrf.mxu0
    %v3261 = vadd.f32 0.0, %v3260
    %v3262 = vpop.f32.mrf.mxu0
    %v3263 = vadd.f32 0.0, %v3262
    %v3264 = vpop.f32.mrf.mxu0
    %v3265 = vadd.f32 0.0, %v3264
    %3266 = vdwg.mxu0
    %3267 = vst [vmem:[#allocation2] sm:$0xff] %v1989
    %3268 = vst [vmem:[#allocation2 + $0x8] sm:$0xff] %v1991
    %3269 = vst [vmem:[#allocation2 + $0x10] sm:$0xff] %v1993
    %3270 = vst [vmem:[#allocation2 + $0x18] sm:$0xff] %v1995
    %3271 = vst [vmem:[#allocation2 + $0x20] sm:$0xff] %v1999
    %3272 = vst [vmem:[#allocation2 + $0x28] sm:$0xff] %v2001
    %3273 = vst [vmem:[#allocation2 + $0x30] sm:$0xff] %v2003
    %3274 = vst [vmem:[#allocation2 + $0x38] sm:$0xff] %v2005
    %3275 = vst [vmem:[#allocation2 + $0x40] sm:$0xff] %v2009
    %3276 = vst [vmem:[#allocation2 + $0x48] sm:$0xff] %v2011
    %3277 = vst [vmem:[#allocation2 + $0x50] sm:$0xff] %v2013
    %3278 = vst [vmem:[#allocation2 + $0x58] sm:$0xff] %v2015
    %3279 = vst [vmem:[#allocation2 + $0x60] sm:$0xff] %v2019
    %3280 = vst [vmem:[#allocation2 + $0x68] sm:$0xff] %v2021
    %3281 = vst [vmem:[#allocation2 + $0x70] sm:$0xff] %v2023
    %3282 = vst [vmem:[#allocation2 + $0x78] sm:$0xff] %v2025
    %3283 = vst [vmem:[#allocation2 + $0x80] sm:$0xff] %v2029
    %3284 = vst [vmem:[#allocation2 + $0x88] sm:$0xff] %v2031
    %3285 = vst [vmem:[#allocation2 + $0x90] sm:$0xff] %v2033
    %3286 = vst [vmem:[#allocation2 + $0x98] sm:$0xff] %v2035
    %3287 = vst [vmem:[#allocation2 + $0xa0] sm:$0xff] %v2039
    %3288 = vst [vmem:[#allocation2 + $0xa8] sm:$0xff] %v2041
    %3289 = vst [vmem:[#allocation2 + $0xb0] sm:$0xff] %v2043
    %3290 = vst [vmem:[#allocation2 + $0xb8] sm:$0xff] %v2045
    %3291 = vst [vmem:[#allocation2 + $0xc0] sm:$0xff] %v2049
    %3292 = vst [vmem:[#allocation2 + $0xc8] sm:$0xff] %v2051
    %3293 = vst [vmem:[#allocation2 + $0xd0] sm:$0xff] %v2053
    %3294 = vst [vmem:[#allocation2 + $0xd8] sm:$0xff] %v2055
    %3295 = vst [vmem:[#allocation2 + $0xe0] sm:$0xff] %v2059
    %3296 = vst [vmem:[#allocation2 + $0xe8] sm:$0xff] %v2061
    %3297 = vst [vmem:[#allocation2 + $0xf0] sm:$0xff] %v2063
    %3298 = vst [vmem:[#allocation2 + $0xf8] sm:$0xff] %v2065
    %3299 = vst [vmem:[#allocation2 + $0x100] sm:$0xff] %v2069
    %3300 = vst [vmem:[#allocation2 + $0x108] sm:$0xff] %v2071
    %3301 = vst [vmem:[#allocation2 + $0x110] sm:$0xff] %v2073
    %3302 = vst [vmem:[#allocation2 + $0x118] sm:$0xff] %v2075
    %3303 = vst [vmem:[#allocation2 + $0x120] sm:$0xff] %v2079
    %3304 = vst [vmem:[#allocation2 + $0x128] sm:$0xff] %v2081
    %3305 = vst [vmem:[#allocation2 + $0x130] sm:$0xff] %v2083
    %3306 = vst [vmem:[#allocation2 + $0x138] sm:$0xff] %v2085
    %3307 = vst [vmem:[#allocation2 + $0x140] sm:$0xff] %v2089
    %3308 = vst [vmem:[#allocation2 + $0x148] sm:$0xff] %v2091
    %3309 = vst [vmem:[#allocation2 + $0x150] sm:$0xff] %v2093
    %3310 = vst [vmem:[#allocation2 + $0x158] sm:$0xff] %v2095
    %3311 = vst [vmem:[#allocation2 + $0x160] sm:$0xff] %v2099
    %3312 = vst [vmem:[#allocation2 + $0x168] sm:$0xff] %v2101
    %3313 = vst [vmem:[#allocation2 + $0x170] sm:$0xff] %v2103
    %3314 = vst [vmem:[#allocation2 + $0x178] sm:$0xff] %v2105
    %3315 = vst [vmem:[#allocation2 + $0x180] sm:$0xff] %v2109
    %3316 = vst [vmem:[#allocation2 + $0x188] sm:$0xff] %v2111
    %3317 = vst [vmem:[#allocation2 + $0x190] sm:$0xff] %v2113
    %3318 = vst [vmem:[#allocation2 + $0x198] sm:$0xff] %v2115
    %3319 = vst [vmem:[#allocation2 + $0x1a0] sm:$0xff] %v2119
    %3320 = vst [vmem:[#allocation2 + $0x1a8] sm:$0xff] %v2121
    %3321 = vst [vmem:[#allocation2 + $0x1b0] sm:$0xff] %v2123
    %3322 = vst [vmem:[#allocation2 + $0x1b8] sm:$0xff] %v2125
    %3323 = vst [vmem:[#allocation2 + $0x1c0] sm:$0xff] %v2129
    %3324 = vst [vmem:[#allocation2 + $0x1c8] sm:$0xff] %v2131
    %3325 = vst [vmem:[#allocation2 + $0x1d0] sm:$0xff] %v2133
    %3326 = vst [vmem:[#allocation2 + $0x1d8] sm:$0xff] %v2135
    %3327 = vst [vmem:[#allocation2 + $0x1e0] sm:$0xff] %v2139
    %3328 = vst [vmem:[#allocation2 + $0x1e8] sm:$0xff] %v2141
    %3329 = vst [vmem:[#allocation2 + $0x1f0] sm:$0xff] %v2143
    %3330 = vst [vmem:[#allocation2 + $0x1f8] sm:$0xff] %v2145
    %3331 = vst [vmem:[#allocation2 + $0x200] sm:$0xff] %v2149
    %3332 = vst [vmem:[#allocation2 + $0x208] sm:$0xff] %v2151
    %3333 = vst [vmem:[#allocation2 + $0x210] sm:$0xff] %v2153
    %3334 = vst [vmem:[#allocation2 + $0x218] sm:$0xff] %v2155
    %3335 = vst [vmem:[#allocation2 + $0x220] sm:$0xff] %v2159
    %3336 = vst [vmem:[#allocation2 + $0x228] sm:$0xff] %v2161
    %3337 = vst [vmem:[#allocation2 + $0x230] sm:$0xff] %v2163
    %3338 = vst [vmem:[#allocation2 + $0x238] sm:$0xff] %v2165
    %3339 = vst [vmem:[#allocation2 + $0x240] sm:$0xff] %v2169
    %3340 = vst [vmem:[#allocation2 + $0x248] sm:$0xff] %v2171
    %3341 = vst [vmem:[#allocation2 + $0x250] sm:$0xff] %v2173
    %3342 = vst [vmem:[#allocation2 + $0x258] sm:$0xff] %v2175
    %3343 = vst [vmem:[#allocation2 + $0x260] sm:$0xff] %v2179
    %3344 = vst [vmem:[#allocation2 + $0x268] sm:$0xff] %v2181
    %3345 = vst [vmem:[#allocation2 + $0x270] sm:$0xff] %v2183
    %3346 = vst [vmem:[#allocation2 + $0x278] sm:$0xff] %v2185
    %3347 = vst [vmem:[#allocation2 + $0x280] sm:$0xff] %v2189
    %3348 = vst [vmem:[#allocation2 + $0x288] sm:$0xff] %v2191
    %3349 = vst [vmem:[#allocation2 + $0x290] sm:$0xff] %v2193
    %3350 = vst [vmem:[#allocation2 + $0x298] sm:$0xff] %v2195
    %3351 = vst [vmem:[#allocation2 + $0x2a0] sm:$0xff] %v2199
    %3352 = vst [vmem:[#allocation2 + $0x2a8] sm:$0xff] %v2201
    %3353 = vst [vmem:[#allocation2 + $0x2b0] sm:$0xff] %v2203
    %3354 = vst [vmem:[#allocation2 + $0x2b8] sm:$0xff] %v2205
    %3355 = vst [vmem:[#allocation2 + $0x2c0] sm:$0xff] %v2209
    %3356 = vst [vmem:[#allocation2 + $0x2c8] sm:$0xff] %v2211
    %3357 = vst [vmem:[#allocation2 + $0x2d0] sm:$0xff] %v2213
    %3358 = vst [vmem:[#allocation2 + $0x2d8] sm:$0xff] %v2215
    %3359 = vst [vmem:[#allocation2 + $0x2e0] sm:$0xff] %v2219
    %3360 = vst [vmem:[#allocation2 + $0x2e8] sm:$0xff] %v2221
    %3361 = vst [vmem:[#allocation2 + $0x2f0] sm:$0xff] %v2223
    %3362 = vst [vmem:[#allocation2 + $0x2f8] sm:$0xff] %v2225
    %3363 = vst [vmem:[#allocation2 + $0x300] sm:$0xff] %v2229
    %3364 = vst [vmem:[#allocation2 + $0x308] sm:$0xff] %v2231
    %3365 = vst [vmem:[#allocation2 + $0x310] sm:$0xff] %v2233
    %3366 = vst [vmem:[#allocation2 + $0x318] sm:$0xff] %v2235
    %3367 = vst [vmem:[#allocation2 + $0x320] sm:$0xff] %v2239
    %3368 = vst [vmem:[#allocation2 + $0x328] sm:$0xff] %v2241
    %3369 = vst [vmem:[#allocation2 + $0x330] sm:$0xff] %v2243
    %3370 = vst [vmem:[#allocation2 + $0x338] sm:$0xff] %v2245
    %3371 = vst [vmem:[#allocation2 + $0x340] sm:$0xff] %v2249
    %3372 = vst [vmem:[#allocation2 + $0x348] sm:$0xff] %v2251
    %3373 = vst [vmem:[#allocation2 + $0x350] sm:$0xff] %v2253
    %3374 = vst [vmem:[#allocation2 + $0x358] sm:$0xff] %v2255
    %3375 = vst [vmem:[#allocation2 + $0x360] sm:$0xff] %v2259
    %3376 = vst [vmem:[#allocation2 + $0x368] sm:$0xff] %v2261
    %3377 = vst [vmem:[#allocation2 + $0x370] sm:$0xff] %v2263
    %3378 = vst [vmem:[#allocation2 + $0x378] sm:$0xff] %v2265
    %3379 = vst [vmem:[#allocation2 + $0x380] sm:$0xff] %v2269
    %3380 = vst [vmem:[#allocation2 + $0x388] sm:$0xff] %v2271
    %3381 = vst [vmem:[#allocation2 + $0x390] sm:$0xff] %v2273
    %3382 = vst [vmem:[#allocation2 + $0x398] sm:$0xff] %v2275
    %3383 = vst [vmem:[#allocation2 + $0x3a0] sm:$0xff] %v2279
    %3384 = vst [vmem:[#allocation2 + $0x3a8] sm:$0xff] %v2281
    %3385 = vst [vmem:[#allocation2 + $0x3b0] sm:$0xff] %v2283
    %3386 = vst [vmem:[#allocation2 + $0x3b8] sm:$0xff] %v2285
    %3387 = vst [vmem:[#allocation2 + $0x3c0] sm:$0xff] %v2289
    %3388 = vst [vmem:[#allocation2 + $0x3c8] sm:$0xff] %v2291
    %3389 = vst [vmem:[#allocation2 + $0x3d0] sm:$0xff] %v2293
    %3390 = vst [vmem:[#allocation2 + $0x3d8] sm:$0xff] %v2295
    %3391 = vst [vmem:[#allocation2 + $0x3e0] sm:$0xff] %v2299
    %3392 = vst [vmem:[#allocation2 + $0x3e8] sm:$0xff] %v2301
    %3393 = vst [vmem:[#allocation2 + $0x3f0] sm:$0xff] %v2303
    %3394 = vst [vmem:[#allocation2 + $0x3f8] sm:$0xff] %v2305
    %3395 = vst [vmem:[#allocation2 + $0x400] sm:$0xff] %v2309
    %3396 = vst [vmem:[#allocation2 + $0x408] sm:$0xff] %v2311
    %3397 = vst [vmem:[#allocation2 + $0x410] sm:$0xff] %v2313
    %3398 = vst [vmem:[#allocation2 + $0x418] sm:$0xff] %v2315
    %3399 = vst [vmem:[#allocation2 + $0x420] sm:$0xff] %v2319
    %3400 = vst [vmem:[#allocation2 + $0x428] sm:$0xff] %v2321
    %3401 = vst [vmem:[#allocation2 + $0x430] sm:$0xff] %v2323
    %3402 = vst [vmem:[#allocation2 + $0x438] sm:$0xff] %v2325
    %3403 = vst [vmem:[#allocation2 + $0x440] sm:$0xff] %v2329
    %3404 = vst [vmem:[#allocation2 + $0x448] sm:$0xff] %v2331
    %3405 = vst [vmem:[#allocation2 + $0x450] sm:$0xff] %v2333
    %3406 = vst [vmem:[#allocation2 + $0x458] sm:$0xff] %v2335
    %3407 = vst [vmem:[#allocation2 + $0x460] sm:$0xff] %v2339
    %3408 = vst [vmem:[#allocation2 + $0x468] sm:$0xff] %v2341
    %3409 = vst [vmem:[#allocation2 + $0x470] sm:$0xff] %v2343
    %3410 = vst [vmem:[#allocation2 + $0x478] sm:$0xff] %v2345
    %3411 = vst [vmem:[#allocation2 + $0x480] sm:$0xff] %v2349
    %3412 = vst [vmem:[#allocation2 + $0x488] sm:$0xff] %v2351
    %3413 = vst [vmem:[#allocation2 + $0x490] sm:$0xff] %v2353
    %3414 = vst [vmem:[#allocation2 + $0x498] sm:$0xff] %v2355
    %3415 = vst [vmem:[#allocation2 + $0x4a0] sm:$0xff] %v2359
    %3416 = vst [vmem:[#allocation2 + $0x4a8] sm:$0xff] %v2361
    %3417 = vst [vmem:[#allocation2 + $0x4b0] sm:$0xff] %v2363
    %3418 = vst [vmem:[#allocation2 + $0x4b8] sm:$0xff] %v2365
    %3419 = vst [vmem:[#allocation2 + $0x4c0] sm:$0xff] %v2369
    %3420 = vst [vmem:[#allocation2 + $0x4c8] sm:$0xff] %v2371
    %3421 = vst [vmem:[#allocation2 + $0x4d0] sm:$0xff] %v2373
    %3422 = vst [vmem:[#allocation2 + $0x4d8] sm:$0xff] %v2375
    %3423 = vst [vmem:[#allocation2 + $0x4e0] sm:$0xff] %v2379
    %3424 = vst [vmem:[#allocation2 + $0x4e8] sm:$0xff] %v2381
    %3425 = vst [vmem:[#allocation2 + $0x4f0] sm:$0xff] %v2383
    %3426 = vst [vmem:[#allocation2 + $0x4f8] sm:$0xff] %v2385
    %3427 = vst [vmem:[#allocation2 + $0x500] sm:$0xff] %v2389
    %3428 = vst [vmem:[#allocation2 + $0x508] sm:$0xff] %v2391
    %3429 = vst [vmem:[#allocation2 + $0x510] sm:$0xff] %v2393
    %3430 = vst [vmem:[#allocation2 + $0x518] sm:$0xff] %v2395
    %3431 = vst [vmem:[#allocation2 + $0x520] sm:$0xff] %v2399
    %3432 = vst [vmem:[#allocation2 + $0x528] sm:$0xff] %v2401
    %3433 = vst [vmem:[#allocation2 + $0x530] sm:$0xff] %v2403
    %3434 = vst [vmem:[#allocation2 + $0x538] sm:$0xff] %v2405
    %3435 = vst [vmem:[#allocation2 + $0x540] sm:$0xff] %v2409
    %3436 = vst [vmem:[#allocation2 + $0x548] sm:$0xff] %v2411
    %3437 = vst [vmem:[#allocation2 + $0x550] sm:$0xff] %v2413
    %3438 = vst [vmem:[#allocation2 + $0x558] sm:$0xff] %v2415
    %3439 = vst [vmem:[#allocation2 + $0x560] sm:$0xff] %v2419
    %3440 = vst [vmem:[#allocation2 + $0x568] sm:$0xff] %v2421
    %3441 = vst [vmem:[#allocation2 + $0x570] sm:$0xff] %v2423
    %3442 = vst [vmem:[#allocation2 + $0x578] sm:$0xff] %v2425
    %3443 = vst [vmem:[#allocation2 + $0x580] sm:$0xff] %v2429
    %3444 = vst [vmem:[#allocation2 + $0x588] sm:$0xff] %v2431
    %3445 = vst [vmem:[#allocation2 + $0x590] sm:$0xff] %v2433
    %3446 = vst [vmem:[#allocation2 + $0x598] sm:$0xff] %v2435
    %3447 = vst [vmem:[#allocation2 + $0x5a0] sm:$0xff] %v2439
    %3448 = vst [vmem:[#allocation2 + $0x5a8] sm:$0xff] %v2441
    %3449 = vst [vmem:[#allocation2 + $0x5b0] sm:$0xff] %v2443
    %3450 = vst [vmem:[#allocation2 + $0x5b8] sm:$0xff] %v2445
    %3451 = vst [vmem:[#allocation2 + $0x5c0] sm:$0xff] %v2449
    %3452 = vst [vmem:[#allocation2 + $0x5c8] sm:$0xff] %v2451
    %3453 = vst [vmem:[#allocation2 + $0x5d0] sm:$0xff] %v2453
    %3454 = vst [vmem:[#allocation2 + $0x5d8] sm:$0xff] %v2455
    %3455 = vst [vmem:[#allocation2 + $0x5e0] sm:$0xff] %v2459
    %3456 = vst [vmem:[#allocation2 + $0x5e8] sm:$0xff] %v2461
    %3457 = vst [vmem:[#allocation2 + $0x5f0] sm:$0xff] %v2463
    %3458 = vst [vmem:[#allocation2 + $0x5f8] sm:$0xff] %v2465
    %3459 = vst [vmem:[#allocation2 + $0x600] sm:$0xff] %v2469
    %3460 = vst [vmem:[#allocation2 + $0x608] sm:$0xff] %v2471
    %3461 = vst [vmem:[#allocation2 + $0x610] sm:$0xff] %v2473
    %3462 = vst [vmem:[#allocation2 + $0x618] sm:$0xff] %v2475
    %3463 = vst [vmem:[#allocation2 + $0x620] sm:$0xff] %v2479
    %3464 = vst [vmem:[#allocation2 + $0x628] sm:$0xff] %v2481
    %3465 = vst [vmem:[#allocation2 + $0x630] sm:$0xff] %v2483
    %3466 = vst [vmem:[#allocation2 + $0x638] sm:$0xff] %v2485
    %3467 = vst [vmem:[#allocation2 + $0x640] sm:$0xff] %v2489
    %3468 = vst [vmem:[#allocation2 + $0x648] sm:$0xff] %v2491
    %3469 = vst [vmem:[#allocation2 + $0x650] sm:$0xff] %v2493
    %3470 = vst [vmem:[#allocation2 + $0x658] sm:$0xff] %v2495
    %3471 = vst [vmem:[#allocation2 + $0x660] sm:$0xff] %v2499
    %3472 = vst [vmem:[#allocation2 + $0x668] sm:$0xff] %v2501
    %3473 = vst [vmem:[#allocation2 + $0x670] sm:$0xff] %v2503
    %3474 = vst [vmem:[#allocation2 + $0x678] sm:$0xff] %v2505
    %3475 = vst [vmem:[#allocation2 + $0x680] sm:$0xff] %v2509
    %3476 = vst [vmem:[#allocation2 + $0x688] sm:$0xff] %v2511
    %3477 = vst [vmem:[#allocation2 + $0x690] sm:$0xff] %v2513
    %3478 = vst [vmem:[#allocation2 + $0x698] sm:$0xff] %v2515
    %3479 = vst [vmem:[#allocation2 + $0x6a0] sm:$0xff] %v2519
    %3480 = vst [vmem:[#allocation2 + $0x6a8] sm:$0xff] %v2521
    %3481 = vst [vmem:[#allocation2 + $0x6b0] sm:$0xff] %v2523
    %3482 = vst [vmem:[#allocation2 + $0x6b8] sm:$0xff] %v2525
    %3483 = vst [vmem:[#allocation2 + $0x6c0] sm:$0xff] %v2529
    %3484 = vst [vmem:[#allocation2 + $0x6c8] sm:$0xff] %v2531
    %3485 = vst [vmem:[#allocation2 + $0x6d0] sm:$0xff] %v2533
    %3486 = vst [vmem:[#allocation2 + $0x6d8] sm:$0xff] %v2535
    %3487 = vst [vmem:[#allocation2 + $0x6e0] sm:$0xff] %v2539
    %3488 = vst [vmem:[#allocation2 + $0x6e8] sm:$0xff] %v2541
    %3489 = vst [vmem:[#allocation2 + $0x6f0] sm:$0xff] %v2543
    %3490 = vst [vmem:[#allocation2 + $0x6f8] sm:$0xff] %v2545
    %3491 = vst [vmem:[#allocation2 + $0x700] sm:$0xff] %v2549
    %3492 = vst [vmem:[#allocation2 + $0x708] sm:$0xff] %v2551
    %3493 = vst [vmem:[#allocation2 + $0x710] sm:$0xff] %v2553
    %3494 = vst [vmem:[#allocation2 + $0x718] sm:$0xff] %v2555
    %3495 = vst [vmem:[#allocation2 + $0x720] sm:$0xff] %v2559
    %3496 = vst [vmem:[#allocation2 + $0x728] sm:$0xff] %v2561
    %3497 = vst [vmem:[#allocation2 + $0x730] sm:$0xff] %v2563
    %3498 = vst [vmem:[#allocation2 + $0x738] sm:$0xff] %v2565
    %3499 = vst [vmem:[#allocation2 + $0x740] sm:$0xff] %v2569
    %3500 = vst [vmem:[#allocation2 + $0x748] sm:$0xff] %v2571
    %3501 = vst [vmem:[#allocation2 + $0x750] sm:$0xff] %v2573
    %3502 = vst [vmem:[#allocation2 + $0x758] sm:$0xff] %v2575
    %3503 = vst [vmem:[#allocation2 + $0x760] sm:$0xff] %v2579
    %3504 = vst [vmem:[#allocation2 + $0x768] sm:$0xff] %v2581
    %3505 = vst [vmem:[#allocation2 + $0x770] sm:$0xff] %v2583
    %3506 = vst [vmem:[#allocation2 + $0x778] sm:$0xff] %v2585
    %3507 = vst [vmem:[#allocation2 + $0x780] sm:$0xff] %v2589
    %3508 = vst [vmem:[#allocation2 + $0x788] sm:$0xff] %v2591
    %3509 = vst [vmem:[#allocation2 + $0x790] sm:$0xff] %v2593
    %3510 = vst [vmem:[#allocation2 + $0x798] sm:$0xff] %v2595
    %3511 = vst [vmem:[#allocation2 + $0x7a0] sm:$0xff] %v2599
    %3512 = vst [vmem:[#allocation2 + $0x7a8] sm:$0xff] %v2601
    %3513 = vst [vmem:[#allocation2 + $0x7b0] sm:$0xff] %v2603
    %3514 = vst [vmem:[#allocation2 + $0x7b8] sm:$0xff] %v2605
    %3515 = vst [vmem:[#allocation2 + $0x7c0] sm:$0xff] %v2609
    %3516 = vst [vmem:[#allocation2 + $0x7c8] sm:$0xff] %v2611
    %3517 = vst [vmem:[#allocation2 + $0x7d0] sm:$0xff] %v2613
    %3518 = vst [vmem:[#allocation2 + $0x7d8] sm:$0xff] %v2615
    %3519 = vst [vmem:[#allocation2 + $0x7e0] sm:$0xff] %v2619
    %3520 = vst [vmem:[#allocation2 + $0x7e8] sm:$0xff] %v2621
    %3521 = vst [vmem:[#allocation2 + $0x7f0] sm:$0xff] %v2623
    %3522 = vst [vmem:[#allocation2 + $0x7f8] sm:$0xff] %v2625
    %3523 = vst [vmem:[#allocation2 + $0x800] sm:$0xff] %v2629
    %3524 = vst [vmem:[#allocation2 + $0x808] sm:$0xff] %v2631
    %3525 = vst [vmem:[#allocation2 + $0x810] sm:$0xff] %v2633
    %3526 = vst [vmem:[#allocation2 + $0x818] sm:$0xff] %v2635
    %3527 = vst [vmem:[#allocation2 + $0x820] sm:$0xff] %v2639
    %3528 = vst [vmem:[#allocation2 + $0x828] sm:$0xff] %v2641
    %3529 = vst [vmem:[#allocation2 + $0x830] sm:$0xff] %v2643
    %3530 = vst [vmem:[#allocation2 + $0x838] sm:$0xff] %v2645
    %3531 = vst [vmem:[#allocation2 + $0x840] sm:$0xff] %v2649
    %3532 = vst [vmem:[#allocation2 + $0x848] sm:$0xff] %v2651
    %3533 = vst [vmem:[#allocation2 + $0x850] sm:$0xff] %v2653
    %3534 = vst [vmem:[#allocation2 + $0x858] sm:$0xff] %v2655
    %3535 = vst [vmem:[#allocation2 + $0x860] sm:$0xff] %v2659
    %3536 = vst [vmem:[#allocation2 + $0x868] sm:$0xff] %v2661
    %3537 = vst [vmem:[#allocation2 + $0x870] sm:$0xff] %v2663
    %3538 = vst [vmem:[#allocation2 + $0x878] sm:$0xff] %v2665
    %3539 = vst [vmem:[#allocation2 + $0x880] sm:$0xff] %v2669
    %3540 = vst [vmem:[#allocation2 + $0x888] sm:$0xff] %v2671
    %3541 = vst [vmem:[#allocation2 + $0x890] sm:$0xff] %v2673
    %3542 = vst [vmem:[#allocation2 + $0x898] sm:$0xff] %v2675
    %3543 = vst [vmem:[#allocation2 + $0x8a0] sm:$0xff] %v2679
    %3544 = vst [vmem:[#allocation2 + $0x8a8] sm:$0xff] %v2681
    %3545 = vst [vmem:[#allocation2 + $0x8b0] sm:$0xff] %v2683
    %3546 = vst [vmem:[#allocation2 + $0x8b8] sm:$0xff] %v2685
    %3547 = vst [vmem:[#allocation2 + $0x8c0] sm:$0xff] %v2689
    %3548 = vst [vmem:[#allocation2 + $0x8c8] sm:$0xff] %v2691
    %3549 = vst [vmem:[#allocation2 + $0x8d0] sm:$0xff] %v2693
    %3550 = vst [vmem:[#allocation2 + $0x8d8] sm:$0xff] %v2695
    %3551 = vst [vmem:[#allocation2 + $0x8e0] sm:$0xff] %v2699
    %3552 = vst [vmem:[#allocation2 + $0x8e8] sm:$0xff] %v2701
    %3553 = vst [vmem:[#allocation2 + $0x8f0] sm:$0xff] %v2703
    %3554 = vst [vmem:[#allocation2 + $0x8f8] sm:$0xff] %v2705
    %3555 = vst [vmem:[#allocation2 + $0x900] sm:$0xff] %v2709
    %3556 = vst [vmem:[#allocation2 + $0x908] sm:$0xff] %v2711
    %3557 = vst [vmem:[#allocation2 + $0x910] sm:$0xff] %v2713
    %3558 = vst [vmem:[#allocation2 + $0x918] sm:$0xff] %v2715
    %3559 = vst [vmem:[#allocation2 + $0x920] sm:$0xff] %v2719
    %3560 = vst [vmem:[#allocation2 + $0x928] sm:$0xff] %v2721
    %3561 = vst [vmem:[#allocation2 + $0x930] sm:$0xff] %v2723
    %3562 = vst [vmem:[#allocation2 + $0x938] sm:$0xff] %v2725
    %3563 = vst [vmem:[#allocation2 + $0x940] sm:$0xff] %v2729
    %3564 = vst [vmem:[#allocation2 + $0x948] sm:$0xff] %v2731
    %3565 = vst [vmem:[#allocation2 + $0x950] sm:$0xff] %v2733
    %3566 = vst [vmem:[#allocation2 + $0x958] sm:$0xff] %v2735
    %3567 = vst [vmem:[#allocation2 + $0x960] sm:$0xff] %v2739
    %3568 = vst [vmem:[#allocation2 + $0x968] sm:$0xff] %v2741
    %3569 = vst [vmem:[#allocation2 + $0x970] sm:$0xff] %v2743
    %3570 = vst [vmem:[#allocation2 + $0x978] sm:$0xff] %v2745
    %3571 = vst [vmem:[#allocation2 + $0x980] sm:$0xff] %v2749
    %3572 = vst [vmem:[#allocation2 + $0x988] sm:$0xff] %v2751
    %3573 = vst [vmem:[#allocation2 + $0x990] sm:$0xff] %v2753
    %3574 = vst [vmem:[#allocation2 + $0x998] sm:$0xff] %v2755
    %3575 = vst [vmem:[#allocation2 + $0x9a0] sm:$0xff] %v2759
    %3576 = vst [vmem:[#allocation2 + $0x9a8] sm:$0xff] %v2761
    %3577 = vst [vmem:[#allocation2 + $0x9b0] sm:$0xff] %v2763
    %3578 = vst [vmem:[#allocation2 + $0x9b8] sm:$0xff] %v2765
    %3579 = vst [vmem:[#allocation2 + $0x9c0] sm:$0xff] %v2769
    %3580 = vst [vmem:[#allocation2 + $0x9c8] sm:$0xff] %v2771
    %3581 = vst [vmem:[#allocation2 + $0x9d0] sm:$0xff] %v2773
    %3582 = vst [vmem:[#allocation2 + $0x9d8] sm:$0xff] %v2775
    %3583 = vst [vmem:[#allocation2 + $0x9e0] sm:$0xff] %v2779
    %3584 = vst [vmem:[#allocation2 + $0x9e8] sm:$0xff] %v2781
    %3585 = vst [vmem:[#allocation2 + $0x9f0] sm:$0xff] %v2783
    %3586 = vst [vmem:[#allocation2 + $0x9f8] sm:$0xff] %v2785
    %3587 = vst [vmem:[#allocation2 + $0xa00] sm:$0xff] %v2789
    %3588 = vst [vmem:[#allocation2 + $0xa08] sm:$0xff] %v2791
    %3589 = vst [vmem:[#allocation2 + $0xa10] sm:$0xff] %v2793
    %3590 = vst [vmem:[#allocation2 + $0xa18] sm:$0xff] %v2795
    %3591 = vst [vmem:[#allocation2 + $0xa20] sm:$0xff] %v2799
    %3592 = vst [vmem:[#allocation2 + $0xa28] sm:$0xff] %v2801
    %3593 = vst [vmem:[#allocation2 + $0xa30] sm:$0xff] %v2803
    %3594 = vst [vmem:[#allocation2 + $0xa38] sm:$0xff] %v2805
    %3595 = vst [vmem:[#allocation2 + $0xa40] sm:$0xff] %v2809
    %3596 = vst [vmem:[#allocation2 + $0xa48] sm:$0xff] %v2811
    %3597 = vst [vmem:[#allocation2 + $0xa50] sm:$0xff] %v2813
    %3598 = vst [vmem:[#allocation2 + $0xa58] sm:$0xff] %v2815
    %3599 = vst [vmem:[#allocation2 + $0xa60] sm:$0xff] %v2819
    %3600 = vst [vmem:[#allocation2 + $0xa68] sm:$0xff] %v2821
    %3601 = vst [vmem:[#allocation2 + $0xa70] sm:$0xff] %v2823
    %3602 = vst [vmem:[#allocation2 + $0xa78] sm:$0xff] %v2825
    %3603 = vst [vmem:[#allocation2 + $0xa80] sm:$0xff] %v2829
    %3604 = vst [vmem:[#allocation2 + $0xa88] sm:$0xff] %v2831
    %3605 = vst [vmem:[#allocation2 + $0xa90] sm:$0xff] %v2833
    %3606 = vst [vmem:[#allocation2 + $0xa98] sm:$0xff] %v2835
    %3607 = vst [vmem:[#allocation2 + $0xaa0] sm:$0xff] %v2839
    %3608 = vst [vmem:[#allocation2 + $0xaa8] sm:$0xff] %v2841
    %3609 = vst [vmem:[#allocation2 + $0xab0] sm:$0xff] %v2843
    %3610 = vst [vmem:[#allocation2 + $0xab8] sm:$0xff] %v2845
    %3611 = vst [vmem:[#allocation2 + $0xac0] sm:$0xff] %v2849
    %3612 = vst [vmem:[#allocation2 + $0xac8] sm:$0xff] %v2851
    %3613 = vst [vmem:[#allocation2 + $0xad0] sm:$0xff] %v2853
    %3614 = vst [vmem:[#allocation2 + $0xad8] sm:$0xff] %v2855
    %3615 = vst [vmem:[#allocation2 + $0xae0] sm:$0xff] %v2859
    %3616 = vst [vmem:[#allocation2 + $0xae8] sm:$0xff] %v2861
    %3617 = vst [vmem:[#allocation2 + $0xaf0] sm:$0xff] %v2863
    %3618 = vst [vmem:[#allocation2 + $0xaf8] sm:$0xff] %v2865
    %3619 = vst [vmem:[#allocation2 + $0xb00] sm:$0xff] %v2869
    %3620 = vst [vmem:[#allocation2 + $0xb08] sm:$0xff] %v2871
    %3621 = vst [vmem:[#allocation2 + $0xb10] sm:$0xff] %v2873
    %3622 = vst [vmem:[#allocation2 + $0xb18] sm:$0xff] %v2875
    %3623 = vst [vmem:[#allocation2 + $0xb20] sm:$0xff] %v2879
    %3624 = vst [vmem:[#allocation2 + $0xb28] sm:$0xff] %v2881
    %3625 = vst [vmem:[#allocation2 + $0xb30] sm:$0xff] %v2883
    %3626 = vst [vmem:[#allocation2 + $0xb38] sm:$0xff] %v2885
    %3627 = vst [vmem:[#allocation2 + $0xb40] sm:$0xff] %v2889
    %3628 = vst [vmem:[#allocation2 + $0xb48] sm:$0xff] %v2891
    %3629 = vst [vmem:[#allocation2 + $0xb50] sm:$0xff] %v2893
    %3630 = vst [vmem:[#allocation2 + $0xb58] sm:$0xff] %v2895
    %3631 = vst [vmem:[#allocation2 + $0xb60] sm:$0xff] %v2899
    %3632 = vst [vmem:[#allocation2 + $0xb68] sm:$0xff] %v2901
    %3633 = vst [vmem:[#allocation2 + $0xb70] sm:$0xff] %v2903
    %3634 = vst [vmem:[#allocation2 + $0xb78] sm:$0xff] %v2905
    %3635 = vst [vmem:[#allocation2 + $0xb80] sm:$0xff] %v2909
    %3636 = vst [vmem:[#allocation2 + $0xb88] sm:$0xff] %v2911
    %3637 = vst [vmem:[#allocation2 + $0xb90] sm:$0xff] %v2913
    %3638 = vst [vmem:[#allocation2 + $0xb98] sm:$0xff] %v2915
    %3639 = vst [vmem:[#allocation2 + $0xba0] sm:$0xff] %v2919
    %3640 = vst [vmem:[#allocation2 + $0xba8] sm:$0xff] %v2921
    %3641 = vst [vmem:[#allocation2 + $0xbb0] sm:$0xff] %v2923
    %3642 = vst [vmem:[#allocation2 + $0xbb8] sm:$0xff] %v2925
    %3643 = vst [vmem:[#allocation2 + $0xbc0] sm:$0xff] %v2929
    %3644 = vst [vmem:[#allocation2 + $0xbc8] sm:$0xff] %v2931
    %3645 = vst [vmem:[#allocation2 + $0xbd0] sm:$0xff] %v2933
    %3646 = vst [vmem:[#allocation2 + $0xbd8] sm:$0xff] %v2935
    %3647 = vst [vmem:[#allocation2 + $0xbe0] sm:$0xff] %v2939
    %3648 = vst [vmem:[#allocation2 + $0xbe8] sm:$0xff] %v2941
    %3649 = vst [vmem:[#allocation2 + $0xbf0] sm:$0xff] %v2943
    %3650 = vst [vmem:[#allocation2 + $0xbf8] sm:$0xff] %v2945
    %3651 = vst [vmem:[#allocation2 + $0xc00] sm:$0xff] %v2949
    %3652 = vst [vmem:[#allocation2 + $0xc08] sm:$0xff] %v2951
    %3653 = vst [vmem:[#allocation2 + $0xc10] sm:$0xff] %v2953
    %3654 = vst [vmem:[#allocation2 + $0xc18] sm:$0xff] %v2955
    %3655 = vst [vmem:[#allocation2 + $0xc20] sm:$0xff] %v2959
    %3656 = vst [vmem:[#allocation2 + $0xc28] sm:$0xff] %v2961
    %3657 = vst [vmem:[#allocation2 + $0xc30] sm:$0xff] %v2963
    %3658 = vst [vmem:[#allocation2 + $0xc38] sm:$0xff] %v2965
    %3659 = vst [vmem:[#allocation2 + $0xc40] sm:$0xff] %v2969
    %3660 = vst [vmem:[#allocation2 + $0xc48] sm:$0xff] %v2971
    %3661 = vst [vmem:[#allocation2 + $0xc50] sm:$0xff] %v2973
    %3662 = vst [vmem:[#allocation2 + $0xc58] sm:$0xff] %v2975
    %3663 = vst [vmem:[#allocation2 + $0xc60] sm:$0xff] %v2979
    %3664 = vst [vmem:[#allocation2 + $0xc68] sm:$0xff] %v2981
    %3665 = vst [vmem:[#allocation2 + $0xc70] sm:$0xff] %v2983
    %3666 = vst [vmem:[#allocation2 + $0xc78] sm:$0xff] %v2985
    %3667 = vst [vmem:[#allocation2 + $0xc80] sm:$0xff] %v2989
    %3668 = vst [vmem:[#allocation2 + $0xc88] sm:$0xff] %v2991
    %3669 = vst [vmem:[#allocation2 + $0xc90] sm:$0xff] %v2993
    %3670 = vst [vmem:[#allocation2 + $0xc98] sm:$0xff] %v2995
    %3671 = vst [vmem:[#allocation2 + $0xca0] sm:$0xff] %v2999
    %3672 = vst [vmem:[#allocation2 + $0xca8] sm:$0xff] %v3001
    %3673 = vst [vmem:[#allocation2 + $0xcb0] sm:$0xff] %v3003
    %3674 = vst [vmem:[#allocation2 + $0xcb8] sm:$0xff] %v3005
    %3675 = vst [vmem:[#allocation2 + $0xcc0] sm:$0xff] %v3009
    %3676 = vst [vmem:[#allocation2 + $0xcc8] sm:$0xff] %v3011
    %3677 = vst [vmem:[#allocation2 + $0xcd0] sm:$0xff] %v3013
    %3678 = vst [vmem:[#allocation2 + $0xcd8] sm:$0xff] %v3015
    %3679 = vst [vmem:[#allocation2 + $0xce0] sm:$0xff] %v3019
    %3680 = vst [vmem:[#allocation2 + $0xce8] sm:$0xff] %v3021
    %3681 = vst [vmem:[#allocation2 + $0xcf0] sm:$0xff] %v3023
    %3682 = vst [vmem:[#allocation2 + $0xcf8] sm:$0xff] %v3025
    %3683 = vst [vmem:[#allocation2 + $0xd00] sm:$0xff] %v3029
    %3684 = vst [vmem:[#allocation2 + $0xd08] sm:$0xff] %v3031
    %3685 = vst [vmem:[#allocation2 + $0xd10] sm:$0xff] %v3033
    %3686 = vst [vmem:[#allocation2 + $0xd18] sm:$0xff] %v3035
    %3687 = vst [vmem:[#allocation2 + $0xd20] sm:$0xff] %v3039
    %3688 = vst [vmem:[#allocation2 + $0xd28] sm:$0xff] %v3041
    %3689 = vst [vmem:[#allocation2 + $0xd30] sm:$0xff] %v3043
    %3690 = vst [vmem:[#allocation2 + $0xd38] sm:$0xff] %v3045
    %3691 = vst [vmem:[#allocation2 + $0xd40] sm:$0xff] %v3049
    %3692 = vst [vmem:[#allocation2 + $0xd48] sm:$0xff] %v3051
    %3693 = vst [vmem:[#allocation2 + $0xd50] sm:$0xff] %v3053
    %3694 = vst [vmem:[#allocation2 + $0xd58] sm:$0xff] %v3055
    %3695 = vst [vmem:[#allocation2 + $0xd60] sm:$0xff] %v3059
    %3696 = vst [vmem:[#allocation2 + $0xd68] sm:$0xff] %v3061
    %3697 = vst [vmem:[#allocation2 + $0xd70] sm:$0xff] %v3063
    %3698 = vst [vmem:[#allocation2 + $0xd78] sm:$0xff] %v3065
    %3699 = vst [vmem:[#allocation2 + $0xd80] sm:$0xff] %v3069
    %3700 = vst [vmem:[#allocation2 + $0xd88] sm:$0xff] %v3071
    %3701 = vst [vmem:[#allocation2 + $0xd90] sm:$0xff] %v3073
    %3702 = vst [vmem:[#allocation2 + $0xd98] sm:$0xff] %v3075
    %3703 = vst [vmem:[#allocation2 + $0xda0] sm:$0xff] %v3079
    %3704 = vst [vmem:[#allocation2 + $0xda8] sm:$0xff] %v3081
    %3705 = vst [vmem:[#allocation2 + $0xdb0] sm:$0xff] %v3083
    %3706 = vst [vmem:[#allocation2 + $0xdb8] sm:$0xff] %v3085
    %3707 = vst [vmem:[#allocation2 + $0xdc0] sm:$0xff] %v3089
    %3708 = vst [vmem:[#allocation2 + $0xdc8] sm:$0xff] %v3091
    %3709 = vst [vmem:[#allocation2 + $0xdd0] sm:$0xff] %v3093
    %3710 = vst [vmem:[#allocation2 + $0xdd8] sm:$0xff] %v3095
    %3711 = vst [vmem:[#allocation2 + $0xde0] sm:$0xff] %v3099
    %3712 = vst [vmem:[#allocation2 + $0xde8] sm:$0xff] %v3101
    %3713 = vst [vmem:[#allocation2 + $0xdf0] sm:$0xff] %v3103
    %3714 = vst [vmem:[#allocation2 + $0xdf8] sm:$0xff] %v3105
    %3715 = vst [vmem:[#allocation2 + $0xe00] sm:$0xff] %v3109
    %3716 = vst [vmem:[#allocation2 + $0xe08] sm:$0xff] %v3111
    %3717 = vst [vmem:[#allocation2 + $0xe10] sm:$0xff] %v3113
    %3718 = vst [vmem:[#allocation2 + $0xe18] sm:$0xff] %v3115
    %3719 = vst [vmem:[#allocation2 + $0xe20] sm:$0xff] %v3119
    %3720 = vst [vmem:[#allocation2 + $0xe28] sm:$0xff] %v3121
    %3721 = vst [vmem:[#allocation2 + $0xe30] sm:$0xff] %v3123
    %3722 = vst [vmem:[#allocation2 + $0xe38] sm:$0xff] %v3125
    %3723 = vst [vmem:[#allocation2 + $0xe40] sm:$0xff] %v3129
    %3724 = vst [vmem:[#allocation2 + $0xe48] sm:$0xff] %v3131
    %3725 = vst [vmem:[#allocation2 + $0xe50] sm:$0xff] %v3133
    %3726 = vst [vmem:[#allocation2 + $0xe58] sm:$0xff] %v3135
    %3727 = vst [vmem:[#allocation2 + $0xe60] sm:$0xff] %v3139
    %3728 = vst [vmem:[#allocation2 + $0xe68] sm:$0xff] %v3141
    %3729 = vst [vmem:[#allocation2 + $0xe70] sm:$0xff] %v3143
    %3730 = vst [vmem:[#allocation2 + $0xe78] sm:$0xff] %v3145
    %3731 = vst [vmem:[#allocation2 + $0xe80] sm:$0xff] %v3149
    %3732 = vst [vmem:[#allocation2 + $0xe88] sm:$0xff] %v3151
    %3733 = vst [vmem:[#allocation2 + $0xe90] sm:$0xff] %v3153
    %3734 = vst [vmem:[#allocation2 + $0xe98] sm:$0xff] %v3155
    %3735 = vst [vmem:[#allocation2 + $0xea0] sm:$0xff] %v3159
    %3736 = vst [vmem:[#allocation2 + $0xea8] sm:$0xff] %v3161
    %3737 = vst [vmem:[#allocation2 + $0xeb0] sm:$0xff] %v3163
    %3738 = vst [vmem:[#allocation2 + $0xeb8] sm:$0xff] %v3165
    %3739 = vst [vmem:[#allocation2 + $0xec0] sm:$0xff] %v3169
    %3740 = vst [vmem:[#allocation2 + $0xec8] sm:$0xff] %v3171
    %3741 = vst [vmem:[#allocation2 + $0xed0] sm:$0xff] %v3173
    %3742 = vst [vmem:[#allocation2 + $0xed8] sm:$0xff] %v3175
    %3743 = vst [vmem:[#allocation2 + $0xee0] sm:$0xff] %v3179
    %3744 = vst [vmem:[#allocation2 + $0xee8] sm:$0xff] %v3181
    %3745 = vst [vmem:[#allocation2 + $0xef0] sm:$0xff] %v3183
    %3746 = vst [vmem:[#allocation2 + $0xef8] sm:$0xff] %v3185
    %3747 = vst [vmem:[#allocation2 + $0xf00] sm:$0xff] %v3189
    %3748 = vst [vmem:[#allocation2 + $0xf08] sm:$0xff] %v3191
    %3749 = vst [vmem:[#allocation2 + $0xf10] sm:$0xff] %v3193
    %3750 = vst [vmem:[#allocation2 + $0xf18] sm:$0xff] %v3195
    %3751 = vst [vmem:[#allocation2 + $0xf20] sm:$0xff] %v3199
    %3752 = vst [vmem:[#allocation2 + $0xf28] sm:$0xff] %v3201
    %3753 = vst [vmem:[#allocation2 + $0xf30] sm:$0xff] %v3203
    %3754 = vst [vmem:[#allocation2 + $0xf38] sm:$0xff] %v3205
    %3755 = vst [vmem:[#allocation2 + $0xf40] sm:$0xff] %v3209
    %3756 = vst [vmem:[#allocation2 + $0xf48] sm:$0xff] %v3211
    %3757 = vst [vmem:[#allocation2 + $0xf50] sm:$0xff] %v3213
    %3758 = vst [vmem:[#allocation2 + $0xf58] sm:$0xff] %v3215
    %3759 = vst [vmem:[#allocation2 + $0xf60] sm:$0xff] %v3219
    %3760 = vst [vmem:[#allocation2 + $0xf68] sm:$0xff] %v3221
    %3761 = vst [vmem:[#allocation2 + $0xf70] sm:$0xff] %v3223
    %3762 = vst [vmem:[#allocation2 + $0xf78] sm:$0xff] %v3225
    %3763 = vst [vmem:[#allocation2 + $0xf80] sm:$0xff] %v3229
    %3764 = vst [vmem:[#allocation2 + $0xf88] sm:$0xff] %v3231
    %3765 = vst [vmem:[#allocation2 + $0xf90] sm:$0xff] %v3233
    %3766 = vst [vmem:[#allocation2 + $0xf98] sm:$0xff] %v3235
    %3767 = vst [vmem:[#allocation2 + $0xfa0] sm:$0xff] %v3239
    %3768 = vst [vmem:[#allocation2 + $0xfa8] sm:$0xff] %v3241
    %3769 = vst [vmem:[#allocation2 + $0xfb0] sm:$0xff] %v3243
    %3770 = vst [vmem:[#allocation2 + $0xfb8] sm:$0xff] %v3245
    %3771 = vst [vmem:[#allocation2 + $0xfc0] sm:$0xff] %v3249
    %3772 = vst [vmem:[#allocation2 + $0xfc8] sm:$0xff] %v3251
    %3773 = vst [vmem:[#allocation2 + $0xfd0] sm:$0xff] %v3253
    %3774 = vst [vmem:[#allocation2 + $0xfd8] sm:$0xff] %v3255
    %3775 = vst [vmem:[#allocation2 + $0xfe0] sm:$0xff] %v3259
    %3776 = vst [vmem:[#allocation2 + $0xfe8] sm:$0xff] %v3261
    %3777 = vst [vmem:[#allocation2 + $0xff0] sm:$0xff] %v3263
    %3778 = vst [vmem:[#allocation2 + $0xff8] sm:$0xff] %v3265
    %v3779 = vld [vmem:[#allocation2] sm:$0xff]
    %v3780 = vld [vmem:[#allocation2 + $0x8] sm:$0xff]
    %v3781 = vld [vmem:[#allocation2 + $0x10] sm:$0xff]
    %v3782 = vld [vmem:[#allocation2 + $0x18] sm:$0xff]
    %v3783 = vld [vmem:[#allocation2 + $0x20] sm:$0xff]
    %v3784 = vld [vmem:[#allocation2 + $0x28] sm:$0xff]
    %v3785 = vld [vmem:[#allocation2 + $0x30] sm:$0xff]
    %v3786 = vld [vmem:[#allocation2 + $0x38] sm:$0xff]
    %v3787 = vld [vmem:[#allocation2 + $0x40] sm:$0xff]
    %v3788 = vld [vmem:[#allocation2 + $0x48] sm:$0xff]
    %v3789 = vld [vmem:[#allocation2 + $0x50] sm:$0xff]
    %v3790 = vld [vmem:[#allocation2 + $0x58] sm:$0xff]
    %v3791 = vld [vmem:[#allocation2 + $0x60] sm:$0xff]
    %v3792 = vld [vmem:[#allocation2 + $0x68] sm:$0xff]
    %v3793 = vld [vmem:[#allocation2 + $0x70] sm:$0x3]
    %v3794 = vld [vmem:[#allocation2 + $0x78] sm:$0x3]
    %v3795 = vmax.f32 %v3779, %v3783
    %v3796 = vmax.f32 %v3781, %v3785
    %v3797 = vmax.f32 %v3795, %v3787
    %v3798 = vmax.f32 %v3796, %v3789
    %v3799 = vmax.f32 %v3797, %v3791
    %v3800 = vsel %vm1947, %v3793, -inf
    %v3801 = vmax.f32 %v3798, %v3800
    %v3802 = vmax.f32 %v3799, %v3801
    %v3803 = vrot.slane %v3802, 4
    %v3804 = vmax.f32 %v3802, %v3803
    %v3805 = vrot.slane %v3804, 2
    %v3806 = vmax.f32 %v3804, %v3805
    %v3807 = vrot.slane %v3806, 1
    %v3808 = vmax.f32 %v3806, %v3807
    %v3809 = vmax.f32 %v3780, %v3784
    %v3810 = vmax.f32 %v3782, %v3786
    %v3811 = vmax.f32 %v3809, %v3788
    %v3812 = vmax.f32 %v3810, %v3790
    %v3813 = vmax.f32 %v3811, %v3792
    %v3814 = vsel %vm1947, %v3794, -inf
    %v3815 = vmax.f32 %v3812, %v3814
    %v3816 = vmax.f32 %v3813, %v3815
    %v3817 = vrot.slane %v3816, 4
    %v3818 = vmax.f32 %v3816, %v3817
    %v3819 = vrot.slane %v3818, 2
    %v3820 = vmax.f32 %v3818, %v3819
    %v3821 = vrot.slane %v3820, 1
    %v3822 = vmax.f32 %v3820, %v3821
    %v3823 = vld [vmem:[#allocation2 + $0x80] sm:$0xff]
    %v3824 = vld [vmem:[#allocation2 + $0x88] sm:$0xff]
    %v3825 = vld [vmem:[#allocation2 + $0x90] sm:$0xff]
    %v3826 = vld [vmem:[#allocation2 + $0x98] sm:$0xff]
    %v3827 = vld [vmem:[#allocation2 + $0xa0] sm:$0xff]
    %v3828 = vld [vmem:[#allocation2 + $0xa8] sm:$0xff]
    %v3829 = vld [vmem:[#allocation2 + $0xb0] sm:$0xff]
    %v3830 = vld [vmem:[#allocation2 + $0xb8] sm:$0xff]
    %v3831 = vld [vmem:[#allocation2 + $0xc0] sm:$0xff]
    %v3832 = vld [vmem:[#allocation2 + $0xc8] sm:$0xff]
    %v3833 = vld [vmem:[#allocation2 + $0xd0] sm:$0xff]
    %v3834 = vld [vmem:[#allocation2 + $0xd8] sm:$0xff]
    %v3835 = vld [vmem:[#allocation2 + $0xe0] sm:$0xff]
    %v3836 = vld [vmem:[#allocation2 + $0xe8] sm:$0xff]
    %v3837 = vld [vmem:[#allocation2 + $0xf0] sm:$0x3]
    %v3838 = vld [vmem:[#allocation2 + $0xf8] sm:$0x3]
    %v3839 = vmax.f32 %v3823, %v3827
    %v3840 = vmax.f32 %v3825, %v3829
    %v3841 = vmax.f32 %v3839, %v3831
    %v3842 = vmax.f32 %v3840, %v3833
    %v3843 = vmax.f32 %v3841, %v3835
    %v3844 = vsel %vm1947, %v3837, -inf
    %v3845 = vmax.f32 %v3842, %v3844
    %v3846 = vmax.f32 %v3843, %v3845
    %v3847 = vrot.slane %v3846, 4
    %v3848 = vmax.f32 %v3846, %v3847
    %v3849 = vrot.slane %v3848, 2
    %v3850 = vmax.f32 %v3848, %v3849
    %v3851 = vrot.slane %v3850, 1
    %v3852 = vmax.f32 %v3850, %v3851
    %v3853 = vmax.f32 %v3824, %v3828
    %v3854 = vmax.f32 %v3826, %v3830
    %v3855 = vmax.f32 %v3853, %v3832
    %v3856 = vmax.f32 %v3854, %v3834
    %v3857 = vmax.f32 %v3855, %v3836
    %v3858 = vsel %vm1947, %v3838, -inf
    %v3859 = vmax.f32 %v3856, %v3858
    %v3860 = vmax.f32 %v3857, %v3859
    %v3861 = vrot.slane %v3860, 4
    %v3862 = vmax.f32 %v3860, %v3861
    %v3863 = vrot.slane %v3862, 2
    %v3864 = vmax.f32 %v3862, %v3863
    %v3865 = vrot.slane %v3864, 1
    %v3866 = vmax.f32 %v3864, %v3865
    %v3867 = vld [vmem:[#allocation2 + $0x100] sm:$0xff]
    %v3868 = vld [vmem:[#allocation2 + $0x108] sm:$0xff]
    %v3869 = vld [vmem:[#allocation2 + $0x110] sm:$0xff]
    %v3870 = vld [vmem:[#allocation2 + $0x118] sm:$0xff]
    %v3871 = vld [vmem:[#allocation2 + $0x120] sm:$0xff]
    %v3872 = vld [vmem:[#allocation2 + $0x128] sm:$0xff]
    %v3873 = vld [vmem:[#allocation2 + $0x130] sm:$0xff]
    %v3874 = vld [vmem:[#allocation2 + $0x138] sm:$0xff]
    %v3875 = vld [vmem:[#allocation2 + $0x140] sm:$0xff]
    %v3876 = vld [vmem:[#allocation2 + $0x148] sm:$0xff]
    %v3877 = vld [vmem:[#allocation2 + $0x150] sm:$0xff]
    %v3878 = vld [vmem:[#allocation2 + $0x158] sm:$0xff]
    %v3879 = vld [vmem:[#allocation2 + $0x160] sm:$0xff]
    %v3880 = vld [vmem:[#allocation2 + $0x168] sm:$0xff]
    %v3881 = vld [vmem:[#allocation2 + $0x170] sm:$0x3]
    %v3882 = vld [vmem:[#allocation2 + $0x178] sm:$0x3]
    %v3883 = vmax.f32 %v3867, %v3871
    %v3884 = vmax.f32 %v3869, %v3873
    %v3885 = vmax.f32 %v3883, %v3875
    %v3886 = vmax.f32 %v3884, %v3877
    %v3887 = vmax.f32 %v3885, %v3879
    %v3888 = vsel %vm1947, %v3881, -inf
    %v3889 = vmax.f32 %v3886, %v3888
    %v3890 = vmax.f32 %v3887, %v3889
    %v3891 = vrot.slane %v3890, 4
    %v3892 = vmax.f32 %v3890, %v3891
    %v3893 = vrot.slane %v3892, 2
    %v3894 = vmax.f32 %v3892, %v3893
    %v3895 = vrot.slane %v3894, 1
    %v3896 = vmax.f32 %v3894, %v3895
    %v3897 = vmax.f32 %v3868, %v3872
    %v3898 = vmax.f32 %v3870, %v3874
    %v3899 = vmax.f32 %v3897, %v3876
    %v3900 = vmax.f32 %v3898, %v3878
    %v3901 = vmax.f32 %v3899, %v3880
    %v3902 = vsel %vm1947, %v3882, -inf
    %v3903 = vmax.f32 %v3900, %v3902
    %v3904 = vmax.f32 %v3901, %v3903
    %v3905 = vrot.slane %v3904, 4
    %v3906 = vmax.f32 %v3904, %v3905
    %v3907 = vrot.slane %v3906, 2
    %v3908 = vmax.f32 %v3906, %v3907
    %v3909 = vrot.slane %v3908, 1
    %v3910 = vmax.f32 %v3908, %v3909
    %v3911 = vld [vmem:[#allocation2 + $0x180] sm:$0xff]
    %v3912 = vld [vmem:[#allocation2 + $0x188] sm:$0xff]
    %v3913 = vld [vmem:[#allocation2 + $0x190] sm:$0xff]
    %v3914 = vld [vmem:[#allocation2 + $0x198] sm:$0xff]
    %v3915 = vld [vmem:[#allocation2 + $0x1a0] sm:$0xff]
    %v3916 = vld [vmem:[#allocation2 + $0x1a8] sm:$0xff]
    %v3917 = vld [vmem:[#allocation2 + $0x1b0] sm:$0xff]
    %v3918 = vld [vmem:[#allocation2 + $0x1b8] sm:$0xff]
    %v3919 = vld [vmem:[#allocation2 + $0x1c0] sm:$0xff]
    %v3920 = vld [vmem:[#allocation2 + $0x1c8] sm:$0xff]
    %v3921 = vld [vmem:[#allocation2 + $0x1d0] sm:$0xff]
    %v3922 = vld [vmem:[#allocation2 + $0x1d8] sm:$0xff]
    %v3923 = vld [vmem:[#allocation2 + $0x1e0] sm:$0xff]
    %v3924 = vld [vmem:[#allocation2 + $0x1e8] sm:$0xff]
    %v3925 = vld [vmem:[#allocation2 + $0x1f0] sm:$0x3]
    %v3926 = vld [vmem:[#allocation2 + $0x1f8] sm:$0x3]
    %v3927 = vmax.f32 %v3911, %v3915
    %v3928 = vmax.f32 %v3913, %v3917
    %v3929 = vmax.f32 %v3927, %v3919
    %v3930 = vmax.f32 %v3928, %v3921
    %v3931 = vmax.f32 %v3929, %v3923
    %v3932 = vsel %vm1947, %v3925, -inf
    %v3933 = vmax.f32 %v3930, %v3932
    %v3934 = vmax.f32 %v3931, %v3933
    %v3935 = vrot.slane %v3934, 4
    %v3936 = vmax.f32 %v3934, %v3935
    %v3937 = vrot.slane %v3936, 2
    %v3938 = vmax.f32 %v3936, %v3937
    %v3939 = vrot.slane %v3938, 1
    %v3940 = vmax.f32 %v3938, %v3939
    %v3941 = vmax.f32 %v3912, %v3916
    %v3942 = vmax.f32 %v3914, %v3918
    %v3943 = vmax.f32 %v3941, %v3920
    %v3944 = vmax.f32 %v3942, %v3922
    %v3945 = vmax.f32 %v3943, %v3924
    %v3946 = vsel %vm1947, %v3926, -inf
    %v3947 = vmax.f32 %v3944, %v3946
    %v3948 = vmax.f32 %v3945, %v3947
    %v3949 = vrot.slane %v3948, 4
    %v3950 = vmax.f32 %v3948, %v3949
    %v3951 = vrot.slane %v3950, 2
    %v3952 = vmax.f32 %v3950, %v3951
    %v3953 = vrot.slane %v3952, 1
    %v3954 = vmax.f32 %v3952, %v3953
    %v3955 = vld [vmem:[#allocation2 + $0x200] sm:$0xff]
    %v3956 = vld [vmem:[#allocation2 + $0x208] sm:$0xff]
    %v3957 = vld [vmem:[#allocation2 + $0x210] sm:$0xff]
    %v3958 = vld [vmem:[#allocation2 + $0x218] sm:$0xff]
    %v3959 = vld [vmem:[#allocation2 + $0x220] sm:$0xff]
    %v3960 = vld [vmem:[#allocation2 + $0x228] sm:$0xff]
    %v3961 = vld [vmem:[#allocation2 + $0x230] sm:$0xff]
    %v3962 = vld [vmem:[#allocation2 + $0x238] sm:$0xff]
    %v3963 = vld [vmem:[#allocation2 + $0x240] sm:$0xff]
    %v3964 = vld [vmem:[#allocation2 + $0x248] sm:$0xff]
    %v3965 = vld [vmem:[#allocation2 + $0x250] sm:$0xff]
    %v3966 = vld [vmem:[#allocation2 + $0x258] sm:$0xff]
    %v3967 = vld [vmem:[#allocation2 + $0x260] sm:$0xff]
    %v3968 = vld [vmem:[#allocation2 + $0x268] sm:$0xff]
    %v3969 = vld [vmem:[#allocation2 + $0x270] sm:$0x3]
    %v3970 = vld [vmem:[#allocation2 + $0x278] sm:$0x3]
    %v3971 = vmax.f32 %v3955, %v3959
    %v3972 = vmax.f32 %v3957, %v3961
    %v3973 = vmax.f32 %v3971, %v3963
    %v3974 = vmax.f32 %v3972, %v3965
    %v3975 = vmax.f32 %v3973, %v3967
    %v3976 = vsel %vm1947, %v3969, -inf
    %v3977 = vmax.f32 %v3974, %v3976
    %v3978 = vmax.f32 %v3975, %v3977
    %v3979 = vrot.slane %v3978, 4
    %v3980 = vmax.f32 %v3978, %v3979
    %v3981 = vrot.slane %v3980, 2
    %v3982 = vmax.f32 %v3980, %v3981
    %v3983 = vrot.slane %v3982, 1
    %v3984 = vmax.f32 %v3982, %v3983
    %v3985 = vmax.f32 %v3956, %v3960
    %v3986 = vmax.f32 %v3958, %v3962
    %v3987 = vmax.f32 %v3985, %v3964
    %v3988 = vmax.f32 %v3986, %v3966
    %v3989 = vmax.f32 %v3987, %v3968
    %v3990 = vsel %vm1947, %v3970, -inf
    %v3991 = vmax.f32 %v3988, %v3990
    %v3992 = vmax.f32 %v3989, %v3991
    %v3993 = vrot.slane %v3992, 4
    %v3994 = vmax.f32 %v3992, %v3993
    %v3995 = vrot.slane %v3994, 2
    %v3996 = vmax.f32 %v3994, %v3995
    %v3997 = vrot.slane %v3996, 1
    %v3998 = vmax.f32 %v3996, %v3997
    %v3999 = vld [vmem:[#allocation2 + $0x280] sm:$0xff]
    %v4000 = vld [vmem:[#allocation2 + $0x288] sm:$0xff]
    %v4001 = vld [vmem:[#allocation2 + $0x290] sm:$0xff]
    %v4002 = vld [vmem:[#allocation2 + $0x298] sm:$0xff]
    %v4003 = vld [vmem:[#allocation2 + $0x2a0] sm:$0xff]
    %v4004 = vld [vmem:[#allocation2 + $0x2a8] sm:$0xff]
    %v4005 = vld [vmem:[#allocation2 + $0x2b0] sm:$0xff]
    %v4006 = vld [vmem:[#allocation2 + $0x2b8] sm:$0xff]
    %v4007 = vld [vmem:[#allocation2 + $0x2c0] sm:$0xff]
    %v4008 = vld [vmem:[#allocation2 + $0x2c8] sm:$0xff]
    %v4009 = vld [vmem:[#allocation2 + $0x2d0] sm:$0xff]
    %v4010 = vld [vmem:[#allocation2 + $0x2d8] sm:$0xff]
    %v4011 = vld [vmem:[#allocation2 + $0x2e0] sm:$0xff]
    %v4012 = vld [vmem:[#allocation2 + $0x2e8] sm:$0xff]
    %v4013 = vld [vmem:[#allocation2 + $0x2f0] sm:$0x3]
    %v4014 = vld [vmem:[#allocation2 + $0x2f8] sm:$0x3]
    %v4015 = vmax.f32 %v3999, %v4003
    %v4016 = vmax.f32 %v4001, %v4005
    %v4017 = vmax.f32 %v4015, %v4007
    %v4018 = vmax.f32 %v4016, %v4009
    %v4019 = vmax.f32 %v4017, %v4011
    %v4020 = vsel %vm1947, %v4013, -inf
    %v4021 = vmax.f32 %v4018, %v4020
    %v4022 = vmax.f32 %v4019, %v4021
    %v4023 = vrot.slane %v4022, 4
    %v4024 = vmax.f32 %v4022, %v4023
    %v4025 = vrot.slane %v4024, 2
    %v4026 = vmax.f32 %v4024, %v4025
    %v4027 = vrot.slane %v4026, 1
    %v4028 = vmax.f32 %v4026, %v4027
    %v4029 = vmax.f32 %v4000, %v4004
    %v4030 = vmax.f32 %v4002, %v4006
    %v4031 = vmax.f32 %v4029, %v4008
    %v4032 = vmax.f32 %v4030, %v4010
    %v4033 = vmax.f32 %v4031, %v4012
    %v4034 = vsel %vm1947, %v4014, -inf
    %v4035 = vmax.f32 %v4032, %v4034
    %v4036 = vmax.f32 %v4033, %v4035
    %v4037 = vrot.slane %v4036, 4
    %v4038 = vmax.f32 %v4036, %v4037
    %v4039 = vrot.slane %v4038, 2
    %v4040 = vmax.f32 %v4038, %v4039
    %v4041 = vrot.slane %v4040, 1
    %v4042 = vmax.f32 %v4040, %v4041
    %v4043 = vld [vmem:[#allocation2 + $0x300] sm:$0xff]
    %v4044 = vld [vmem:[#allocation2 + $0x308] sm:$0xff]
    %v4045 = vld [vmem:[#allocation2 + $0x310] sm:$0xff]
    %v4046 = vld [vmem:[#allocation2 + $0x318] sm:$0xff]
    %v4047 = vld [vmem:[#allocation2 + $0x320] sm:$0xff]
    %v4048 = vld [vmem:[#allocation2 + $0x328] sm:$0xff]
    %v4049 = vld [vmem:[#allocation2 + $0x330] sm:$0xff]
    %v4050 = vld [vmem:[#allocation2 + $0x338] sm:$0xff]
    %v4051 = vld [vmem:[#allocation2 + $0x340] sm:$0xff]
    %v4052 = vld [vmem:[#allocation2 + $0x348] sm:$0xff]
    %v4053 = vld [vmem:[#allocation2 + $0x350] sm:$0xff]
    %v4054 = vld [vmem:[#allocation2 + $0x358] sm:$0xff]
    %v4055 = vld [vmem:[#allocation2 + $0x360] sm:$0xff]
    %v4056 = vld [vmem:[#allocation2 + $0x368] sm:$0xff]
    %v4057 = vld [vmem:[#allocation2 + $0x370] sm:$0x3]
    %v4058 = vld [vmem:[#allocation2 + $0x378] sm:$0x3]
    %v4059 = vmax.f32 %v4043, %v4047
    %v4060 = vmax.f32 %v4045, %v4049
    %v4061 = vmax.f32 %v4059, %v4051
    %v4062 = vmax.f32 %v4060, %v4053
    %v4063 = vmax.f32 %v4061, %v4055
    %v4064 = vsel %vm1947, %v4057, -inf
    %v4065 = vmax.f32 %v4062, %v4064
    %v4066 = vmax.f32 %v4063, %v4065
    %v4067 = vrot.slane %v4066, 4
    %v4068 = vmax.f32 %v4066, %v4067
    %v4069 = vrot.slane %v4068, 2
    %v4070 = vmax.f32 %v4068, %v4069
    %v4071 = vrot.slane %v4070, 1
    %v4072 = vmax.f32 %v4070, %v4071
    %v4073 = vmax.f32 %v4044, %v4048
    %v4074 = vmax.f32 %v4046, %v4050
    %v4075 = vmax.f32 %v4073, %v4052
    %v4076 = vmax.f32 %v4074, %v4054
    %v4077 = vmax.f32 %v4075, %v4056
    %v4078 = vsel %vm1947, %v4058, -inf
    %v4079 = vmax.f32 %v4076, %v4078
    %v4080 = vmax.f32 %v4077, %v4079
    %v4081 = vrot.slane %v4080, 4
    %v4082 = vmax.f32 %v4080, %v4081
    %v4083 = vrot.slane %v4082, 2
    %v4084 = vmax.f32 %v4082, %v4083
    %v4085 = vrot.slane %v4084, 1
    %v4086 = vmax.f32 %v4084, %v4085
    %v4087 = vld [vmem:[#allocation2 + $0x380] sm:$0xff]
    %v4088 = vld [vmem:[#allocation2 + $0x388] sm:$0xff]
    %v4089 = vld [vmem:[#allocation2 + $0x390] sm:$0xff]
    %v4090 = vld [vmem:[#allocation2 + $0x398] sm:$0xff]
    %v4091 = vld [vmem:[#allocation2 + $0x3a0] sm:$0xff]
    %v4092 = vld [vmem:[#allocation2 + $0x3a8] sm:$0xff]
    %v4093 = vld [vmem:[#allocation2 + $0x3b0] sm:$0xff]
    %v4094 = vld [vmem:[#allocation2 + $0x3b8] sm:$0xff]
    %v4095 = vld [vmem:[#allocation2 + $0x3c0] sm:$0xff]
    %v4096 = vld [vmem:[#allocation2 + $0x3c8] sm:$0xff]
    %v4097 = vld [vmem:[#allocation2 + $0x3d0] sm:$0xff]
    %v4098 = vld [vmem:[#allocation2 + $0x3d8] sm:$0xff]
    %v4099 = vld [vmem:[#allocation2 + $0x3e0] sm:$0xff]
    %v4100 = vld [vmem:[#allocation2 + $0x3e8] sm:$0xff]
    %v4101 = vld [vmem:[#allocation2 + $0x3f0] sm:$0x3]
    %v4102 = vld [vmem:[#allocation2 + $0x3f8] sm:$0x3]
    %v4103 = vmax.f32 %v4087, %v4091
    %v4104 = vmax.f32 %v4089, %v4093
    %v4105 = vmax.f32 %v4103, %v4095
    %v4106 = vmax.f32 %v4104, %v4097
    %v4107 = vmax.f32 %v4105, %v4099
    %v4108 = vsel %vm1947, %v4101, -inf
    %v4109 = vmax.f32 %v4106, %v4108
    %v4110 = vmax.f32 %v4107, %v4109
    %v4111 = vrot.slane %v4110, 4
    %v4112 = vmax.f32 %v4110, %v4111
    %v4113 = vrot.slane %v4112, 2
    %v4114 = vmax.f32 %v4112, %v4113
    %v4115 = vrot.slane %v4114, 1
    %v4116 = vmax.f32 %v4114, %v4115
    %v4117 = vmax.f32 %v4088, %v4092
    %v4118 = vmax.f32 %v4090, %v4094
    %v4119 = vmax.f32 %v4117, %v4096
    %v4120 = vmax.f32 %v4118, %v4098
    %v4121 = vmax.f32 %v4119, %v4100
    %v4122 = vsel %vm1947, %v4102, -inf
    %v4123 = vmax.f32 %v4120, %v4122
    %v4124 = vmax.f32 %v4121, %v4123
    %v4125 = vrot.slane %v4124, 4
    %v4126 = vmax.f32 %v4124, %v4125
    %v4127 = vrot.slane %v4126, 2
    %v4128 = vmax.f32 %v4126, %v4127
    %v4129 = vrot.slane %v4128, 1
    %v4130 = vmax.f32 %v4128, %v4129
    %v4131 = vld [vmem:[#allocation2 + $0x400] sm:$0xff]
    %v4132 = vld [vmem:[#allocation2 + $0x408] sm:$0xff]
    %v4133 = vld [vmem:[#allocation2 + $0x410] sm:$0xff]
    %v4134 = vld [vmem:[#allocation2 + $0x418] sm:$0xff]
    %v4135 = vld [vmem:[#allocation2 + $0x420] sm:$0xff]
    %v4136 = vld [vmem:[#allocation2 + $0x428] sm:$0xff]
    %v4137 = vld [vmem:[#allocation2 + $0x430] sm:$0xff]
    %v4138 = vld [vmem:[#allocation2 + $0x438] sm:$0xff]
    %v4139 = vld [vmem:[#allocation2 + $0x440] sm:$0xff]
    %v4140 = vld [vmem:[#allocation2 + $0x448] sm:$0xff]
    %v4141 = vld [vmem:[#allocation2 + $0x450] sm:$0xff]
    %v4142 = vld [vmem:[#allocation2 + $0x458] sm:$0xff]
    %v4143 = vld [vmem:[#allocation2 + $0x460] sm:$0xff]
    %v4144 = vld [vmem:[#allocation2 + $0x468] sm:$0xff]
    %v4145 = vld [vmem:[#allocation2 + $0x470] sm:$0x3]
    %v4146 = vld [vmem:[#allocation2 + $0x478] sm:$0x3]
    %v4147 = vmax.f32 %v4131, %v4135
    %v4148 = vmax.f32 %v4133, %v4137
    %v4149 = vmax.f32 %v4147, %v4139
    %v4150 = vmax.f32 %v4148, %v4141
    %v4151 = vmax.f32 %v4149, %v4143
    %v4152 = vsel %vm1947, %v4145, -inf
    %v4153 = vmax.f32 %v4150, %v4152
    %v4154 = vmax.f32 %v4151, %v4153
    %v4155 = vrot.slane %v4154, 4
    %v4156 = vmax.f32 %v4154, %v4155
    %v4157 = vrot.slane %v4156, 2
    %v4158 = vmax.f32 %v4156, %v4157
    %v4159 = vrot.slane %v4158, 1
    %v4160 = vmax.f32 %v4158, %v4159
    %v4161 = vmax.f32 %v4132, %v4136
    %v4162 = vmax.f32 %v4134, %v4138
    %v4163 = vmax.f32 %v4161, %v4140
    %v4164 = vmax.f32 %v4162, %v4142
    %v4165 = vmax.f32 %v4163, %v4144
    %v4166 = vsel %vm1947, %v4146, -inf
    %v4167 = vmax.f32 %v4164, %v4166
    %v4168 = vmax.f32 %v4165, %v4167
    %v4169 = vrot.slane %v4168, 4
    %v4170 = vmax.f32 %v4168, %v4169
    %v4171 = vrot.slane %v4170, 2
    %v4172 = vmax.f32 %v4170, %v4171
    %v4173 = vrot.slane %v4172, 1
    %v4174 = vmax.f32 %v4172, %v4173
    %v4175 = vld [vmem:[#allocation2 + $0x480] sm:$0xff]
    %v4176 = vld [vmem:[#allocation2 + $0x488] sm:$0xff]
    %v4177 = vld [vmem:[#allocation2 + $0x490] sm:$0xff]
    %v4178 = vld [vmem:[#allocation2 + $0x498] sm:$0xff]
    %v4179 = vld [vmem:[#allocation2 + $0x4a0] sm:$0xff]
    %v4180 = vld [vmem:[#allocation2 + $0x4a8] sm:$0xff]
    %v4181 = vld [vmem:[#allocation2 + $0x4b0] sm:$0xff]
    %v4182 = vld [vmem:[#allocation2 + $0x4b8] sm:$0xff]
    %v4183 = vld [vmem:[#allocation2 + $0x4c0] sm:$0xff]
    %v4184 = vld [vmem:[#allocation2 + $0x4c8] sm:$0xff]
    %v4185 = vld [vmem:[#allocation2 + $0x4d0] sm:$0xff]
    %v4186 = vld [vmem:[#allocation2 + $0x4d8] sm:$0xff]
    %v4187 = vld [vmem:[#allocation2 + $0x4e0] sm:$0xff]
    %v4188 = vld [vmem:[#allocation2 + $0x4e8] sm:$0xff]
    %v4189 = vld [vmem:[#allocation2 + $0x4f0] sm:$0x3]
    %v4190 = vld [vmem:[#allocation2 + $0x4f8] sm:$0x3]
    %v4191 = vmax.f32 %v4175, %v4179
    %v4192 = vmax.f32 %v4177, %v4181
    %v4193 = vmax.f32 %v4191, %v4183
    %v4194 = vmax.f32 %v4192, %v4185
    %v4195 = vmax.f32 %v4193, %v4187
    %v4196 = vsel %vm1947, %v4189, -inf
    %v4197 = vmax.f32 %v4194, %v4196
    %v4198 = vmax.f32 %v4195, %v4197
    %v4199 = vrot.slane %v4198, 4
    %v4200 = vmax.f32 %v4198, %v4199
    %v4201 = vrot.slane %v4200, 2
    %v4202 = vmax.f32 %v4200, %v4201
    %v4203 = vrot.slane %v4202, 1
    %v4204 = vmax.f32 %v4202, %v4203
    %v4205 = vmax.f32 %v4176, %v4180
    %v4206 = vmax.f32 %v4178, %v4182
    %v4207 = vmax.f32 %v4205, %v4184
    %v4208 = vmax.f32 %v4206, %v4186
    %v4209 = vmax.f32 %v4207, %v4188
    %v4210 = vsel %vm1947, %v4190, -inf
    %v4211 = vmax.f32 %v4208, %v4210
    %v4212 = vmax.f32 %v4209, %v4211
    %v4213 = vrot.slane %v4212, 4
    %v4214 = vmax.f32 %v4212, %v4213
    %v4215 = vrot.slane %v4214, 2
    %v4216 = vmax.f32 %v4214, %v4215
    %v4217 = vrot.slane %v4216, 1
    %v4218 = vmax.f32 %v4216, %v4217
    %v4219 = vld [vmem:[#allocation2 + $0x500] sm:$0xff]
    %v4220 = vld [vmem:[#allocation2 + $0x508] sm:$0xff]
    %v4221 = vld [vmem:[#allocation2 + $0x510] sm:$0xff]
    %v4222 = vld [vmem:[#allocation2 + $0x518] sm:$0xff]
    %v4223 = vld [vmem:[#allocation2 + $0x520] sm:$0xff]
    %v4224 = vld [vmem:[#allocation2 + $0x528] sm:$0xff]
    %v4225 = vld [vmem:[#allocation2 + $0x530] sm:$0xff]
    %v4226 = vld [vmem:[#allocation2 + $0x538] sm:$0xff]
    %v4227 = vld [vmem:[#allocation2 + $0x540] sm:$0xff]
    %v4228 = vld [vmem:[#allocation2 + $0x548] sm:$0xff]
    %v4229 = vld [vmem:[#allocation2 + $0x550] sm:$0xff]
    %v4230 = vld [vmem:[#allocation2 + $0x558] sm:$0xff]
    %v4231 = vld [vmem:[#allocation2 + $0x560] sm:$0xff]
    %v4232 = vld [vmem:[#allocation2 + $0x568] sm:$0xff]
    %v4233 = vld [vmem:[#allocation2 + $0x570] sm:$0x3]
    %v4234 = vld [vmem:[#allocation2 + $0x578] sm:$0x3]
    %v4235 = vmax.f32 %v4219, %v4223
    %v4236 = vmax.f32 %v4221, %v4225
    %v4237 = vmax.f32 %v4235, %v4227
    %v4238 = vmax.f32 %v4236, %v4229
    %v4239 = vmax.f32 %v4237, %v4231
    %v4240 = vsel %vm1947, %v4233, -inf
    %v4241 = vmax.f32 %v4238, %v4240
    %v4242 = vmax.f32 %v4239, %v4241
    %v4243 = vrot.slane %v4242, 4
    %v4244 = vmax.f32 %v4242, %v4243
    %v4245 = vrot.slane %v4244, 2
    %v4246 = vmax.f32 %v4244, %v4245
    %v4247 = vrot.slane %v4246, 1
    %v4248 = vmax.f32 %v4246, %v4247
    %v4249 = vmax.f32 %v4220, %v4224
    %v4250 = vmax.f32 %v4222, %v4226
    %v4251 = vmax.f32 %v4249, %v4228
    %v4252 = vmax.f32 %v4250, %v4230
    %v4253 = vmax.f32 %v4251, %v4232
    %v4254 = vsel %vm1947, %v4234, -inf
    %v4255 = vmax.f32 %v4252, %v4254
    %v4256 = vmax.f32 %v4253, %v4255
    %v4257 = vrot.slane %v4256, 4
    %v4258 = vmax.f32 %v4256, %v4257
    %v4259 = vrot.slane %v4258, 2
    %v4260 = vmax.f32 %v4258, %v4259
    %v4261 = vrot.slane %v4260, 1
    %v4262 = vmax.f32 %v4260, %v4261
    %v4263 = vld [vmem:[#allocation2 + $0x580] sm:$0xff]
    %v4264 = vld [vmem:[#allocation2 + $0x588] sm:$0xff]
    %v4265 = vld [vmem:[#allocation2 + $0x590] sm:$0xff]
    %v4266 = vld [vmem:[#allocation2 + $0x598] sm:$0xff]
    %v4267 = vld [vmem:[#allocation2 + $0x5a0] sm:$0xff]
    %v4268 = vld [vmem:[#allocation2 + $0x5a8] sm:$0xff]
    %v4269 = vld [vmem:[#allocation2 + $0x5b0] sm:$0xff]
    %v4270 = vld [vmem:[#allocation2 + $0x5b8] sm:$0xff]
    %v4271 = vld [vmem:[#allocation2 + $0x5c0] sm:$0xff]
    %v4272 = vld [vmem:[#allocation2 + $0x5c8] sm:$0xff]
    %v4273 = vld [vmem:[#allocation2 + $0x5d0] sm:$0xff]
    %v4274 = vld [vmem:[#allocation2 + $0x5d8] sm:$0xff]
    %v4275 = vld [vmem:[#allocation2 + $0x5e0] sm:$0xff]
    %v4276 = vld [vmem:[#allocation2 + $0x5e8] sm:$0xff]
    %v4277 = vld [vmem:[#allocation2 + $0x5f0] sm:$0x3]
    %v4278 = vld [vmem:[#allocation2 + $0x5f8] sm:$0x3]
    %v4279 = vmax.f32 %v4263, %v4267
    %v4280 = vmax.f32 %v4265, %v4269
    %v4281 = vmax.f32 %v4279, %v4271
    %v4282 = vmax.f32 %v4280, %v4273
    %v4283 = vmax.f32 %v4281, %v4275
    %v4284 = vsel %vm1947, %v4277, -inf
    %v4285 = vmax.f32 %v4282, %v4284
    %v4286 = vmax.f32 %v4283, %v4285
    %v4287 = vrot.slane %v4286, 4
    %v4288 = vmax.f32 %v4286, %v4287
    %v4289 = vrot.slane %v4288, 2
    %v4290 = vmax.f32 %v4288, %v4289
    %v4291 = vrot.slane %v4290, 1
    %v4292 = vmax.f32 %v4290, %v4291
    %v4293 = vmax.f32 %v4264, %v4268
    %v4294 = vmax.f32 %v4266, %v4270
    %v4295 = vmax.f32 %v4293, %v4272
    %v4296 = vmax.f32 %v4294, %v4274
    %v4297 = vmax.f32 %v4295, %v4276
    %v4298 = vsel %vm1947, %v4278, -inf
    %v4299 = vmax.f32 %v4296, %v4298
    %v4300 = vmax.f32 %v4297, %v4299
    %v4301 = vrot.slane %v4300, 4
    %v4302 = vmax.f32 %v4300, %v4301
    %v4303 = vrot.slane %v4302, 2
    %v4304 = vmax.f32 %v4302, %v4303
    %v4305 = vrot.slane %v4304, 1
    %v4306 = vmax.f32 %v4304, %v4305
    %v4307 = vld [vmem:[#allocation2 + $0x600] sm:$0xff]
    %v4308 = vld [vmem:[#allocation2 + $0x608] sm:$0xff]
    %v4309 = vld [vmem:[#allocation2 + $0x610] sm:$0xff]
    %v4310 = vld [vmem:[#allocation2 + $0x618] sm:$0xff]
    %v4311 = vld [vmem:[#allocation2 + $0x620] sm:$0xff]
    %v4312 = vld [vmem:[#allocation2 + $0x628] sm:$0xff]
    %v4313 = vld [vmem:[#allocation2 + $0x630] sm:$0xff]
    %v4314 = vld [vmem:[#allocation2 + $0x638] sm:$0xff]
    %v4315 = vld [vmem:[#allocation2 + $0x640] sm:$0xff]
    %v4316 = vld [vmem:[#allocation2 + $0x648] sm:$0xff]
    %v4317 = vld [vmem:[#allocation2 + $0x650] sm:$0xff]
    %v4318 = vld [vmem:[#allocation2 + $0x658] sm:$0xff]
    %v4319 = vld [vmem:[#allocation2 + $0x660] sm:$0xff]
    %v4320 = vld [vmem:[#allocation2 + $0x668] sm:$0xff]
    %v4321 = vld [vmem:[#allocation2 + $0x670] sm:$0x3]
    %v4322 = vld [vmem:[#allocation2 + $0x678] sm:$0x3]
    %v4323 = vmax.f32 %v4307, %v4311
    %v4324 = vmax.f32 %v4309, %v4313
    %v4325 = vmax.f32 %v4323, %v4315
    %v4326 = vmax.f32 %v4324, %v4317
    %v4327 = vmax.f32 %v4325, %v4319
    %v4328 = vsel %vm1947, %v4321, -inf
    %v4329 = vmax.f32 %v4326, %v4328
    %v4330 = vmax.f32 %v4327, %v4329
    %v4331 = vrot.slane %v4330, 4
    %v4332 = vmax.f32 %v4330, %v4331
    %v4333 = vrot.slane %v4332, 2
    %v4334 = vmax.f32 %v4332, %v4333
    %v4335 = vrot.slane %v4334, 1
    %v4336 = vmax.f32 %v4334, %v4335
    %v4337 = vmax.f32 %v4308, %v4312
    %v4338 = vmax.f32 %v4310, %v4314
    %v4339 = vmax.f32 %v4337, %v4316
    %v4340 = vmax.f32 %v4338, %v4318
    %v4341 = vmax.f32 %v4339, %v4320
    %v4342 = vsel %vm1947, %v4322, -inf
    %v4343 = vmax.f32 %v4340, %v4342
    %v4344 = vmax.f32 %v4341, %v4343
    %v4345 = vrot.slane %v4344, 4
    %v4346 = vmax.f32 %v4344, %v4345
    %v4347 = vrot.slane %v4346, 2
    %v4348 = vmax.f32 %v4346, %v4347
    %v4349 = vrot.slane %v4348, 1
    %v4350 = vmax.f32 %v4348, %v4349
    %v4351 = vld [vmem:[#allocation2 + $0x680] sm:$0xff]
    %v4352 = vld [vmem:[#allocation2 + $0x688] sm:$0xff]
    %v4353 = vld [vmem:[#allocation2 + $0x690] sm:$0xff]
    %v4354 = vld [vmem:[#allocation2 + $0x698] sm:$0xff]
    %v4355 = vld [vmem:[#allocation2 + $0x6a0] sm:$0xff]
    %v4356 = vld [vmem:[#allocation2 + $0x6a8] sm:$0xff]
    %v4357 = vld [vmem:[#allocation2 + $0x6b0] sm:$0xff]
    %v4358 = vld [vmem:[#allocation2 + $0x6b8] sm:$0xff]
    %v4359 = vld [vmem:[#allocation2 + $0x6c0] sm:$0xff]
    %v4360 = vld [vmem:[#allocation2 + $0x6c8] sm:$0xff]
    %v4361 = vld [vmem:[#allocation2 + $0x6d0] sm:$0xff]
    %v4362 = vld [vmem:[#allocation2 + $0x6d8] sm:$0xff]
    %v4363 = vld [vmem:[#allocation2 + $0x6e0] sm:$0xff]
    %v4364 = vld [vmem:[#allocation2 + $0x6e8] sm:$0xff]
    %v4365 = vld [vmem:[#allocation2 + $0x6f0] sm:$0x3]
    %v4366 = vld [vmem:[#allocation2 + $0x6f8] sm:$0x3]
    %v4367 = vmax.f32 %v4351, %v4355
    %v4368 = vmax.f32 %v4353, %v4357
    %v4369 = vmax.f32 %v4367, %v4359
    %v4370 = vmax.f32 %v4368, %v4361
    %v4371 = vmax.f32 %v4369, %v4363
    %v4372 = vsel %vm1947, %v4365, -inf
    %v4373 = vmax.f32 %v4370, %v4372
    %v4374 = vmax.f32 %v4371, %v4373
    %v4375 = vrot.slane %v4374, 4
    %v4376 = vmax.f32 %v4374, %v4375
    %v4377 = vrot.slane %v4376, 2
    %v4378 = vmax.f32 %v4376, %v4377
    %v4379 = vrot.slane %v4378, 1
    %v4380 = vmax.f32 %v4378, %v4379
    %v4381 = vmax.f32 %v4352, %v4356
    %v4382 = vmax.f32 %v4354, %v4358
    %v4383 = vmax.f32 %v4381, %v4360
    %v4384 = vmax.f32 %v4382, %v4362
    %v4385 = vmax.f32 %v4383, %v4364
    %v4386 = vsel %vm1947, %v4366, -inf
    %v4387 = vmax.f32 %v4384, %v4386
    %v4388 = vmax.f32 %v4385, %v4387
    %v4389 = vrot.slane %v4388, 4
    %v4390 = vmax.f32 %v4388, %v4389
    %v4391 = vrot.slane %v4390, 2
    %v4392 = vmax.f32 %v4390, %v4391
    %v4393 = vrot.slane %v4392, 1
    %v4394 = vmax.f32 %v4392, %v4393
    %v4395 = vld [vmem:[#allocation2 + $0x700] sm:$0xff]
    %v4396 = vld [vmem:[#allocation2 + $0x708] sm:$0xff]
    %v4397 = vld [vmem:[#allocation2 + $0x710] sm:$0xff]
    %v4398 = vld [vmem:[#allocation2 + $0x718] sm:$0xff]
    %v4399 = vld [vmem:[#allocation2 + $0x720] sm:$0xff]
    %v4400 = vld [vmem:[#allocation2 + $0x728] sm:$0xff]
    %v4401 = vld [vmem:[#allocation2 + $0x730] sm:$0xff]
    %v4402 = vld [vmem:[#allocation2 + $0x738] sm:$0xff]
    %v4403 = vld [vmem:[#allocation2 + $0x740] sm:$0xff]
    %v4404 = vld [vmem:[#allocation2 + $0x748] sm:$0xff]
    %v4405 = vld [vmem:[#allocation2 + $0x750] sm:$0xff]
    %v4406 = vld [vmem:[#allocation2 + $0x758] sm:$0xff]
    %v4407 = vld [vmem:[#allocation2 + $0x760] sm:$0xff]
    %v4408 = vld [vmem:[#allocation2 + $0x768] sm:$0xff]
    %v4409 = vld [vmem:[#allocation2 + $0x770] sm:$0x3]
    %v4410 = vld [vmem:[#allocation2 + $0x778] sm:$0x3]
    %v4411 = vmax.f32 %v4395, %v4399
    %v4412 = vmax.f32 %v4397, %v4401
    %v4413 = vmax.f32 %v4411, %v4403
    %v4414 = vmax.f32 %v4412, %v4405
    %v4415 = vmax.f32 %v4413, %v4407
    %v4416 = vsel %vm1947, %v4409, -inf
    %v4417 = vmax.f32 %v4414, %v4416
    %v4418 = vmax.f32 %v4415, %v4417
    %v4419 = vrot.slane %v4418, 4
    %v4420 = vmax.f32 %v4418, %v4419
    %v4421 = vrot.slane %v4420, 2
    %v4422 = vmax.f32 %v4420, %v4421
    %v4423 = vrot.slane %v4422, 1
    %v4424 = vmax.f32 %v4422, %v4423
    %v4425 = vmax.f32 %v4396, %v4400
    %v4426 = vmax.f32 %v4398, %v4402
    %v4427 = vmax.f32 %v4425, %v4404
    %v4428 = vmax.f32 %v4426, %v4406
    %v4429 = vmax.f32 %v4427, %v4408
    %v4430 = vsel %vm1947, %v4410, -inf
    %v4431 = vmax.f32 %v4428, %v4430
    %v4432 = vmax.f32 %v4429, %v4431
    %v4433 = vrot.slane %v4432, 4
    %v4434 = vmax.f32 %v4432, %v4433
    %v4435 = vrot.slane %v4434, 2
    %v4436 = vmax.f32 %v4434, %v4435
    %v4437 = vrot.slane %v4436, 1
    %v4438 = vmax.f32 %v4436, %v4437
    %v4439 = vld [vmem:[#allocation2 + $0x780] sm:$0xff]
    %v4440 = vld [vmem:[#allocation2 + $0x788] sm:$0xff]
    %v4441 = vld [vmem:[#allocation2 + $0x790] sm:$0xff]
    %v4442 = vld [vmem:[#allocation2 + $0x798] sm:$0xff]
    %v4443 = vld [vmem:[#allocation2 + $0x7a0] sm:$0xff]
    %v4444 = vld [vmem:[#allocation2 + $0x7a8] sm:$0xff]
    %v4445 = vld [vmem:[#allocation2 + $0x7b0] sm:$0xff]
    %v4446 = vld [vmem:[#allocation2 + $0x7b8] sm:$0xff]
    %v4447 = vld [vmem:[#allocation2 + $0x7c0] sm:$0xff]
    %v4448 = vld [vmem:[#allocation2 + $0x7c8] sm:$0xff]
    %v4449 = vld [vmem:[#allocation2 + $0x7d0] sm:$0xff]
    %v4450 = vld [vmem:[#allocation2 + $0x7d8] sm:$0xff]
    %v4451 = vld [vmem:[#allocation2 + $0x7e0] sm:$0xff]
    %v4452 = vld [vmem:[#allocation2 + $0x7e8] sm:$0xff]
    %v4453 = vld [vmem:[#allocation2 + $0x7f0] sm:$0x3]
    %v4454 = vld [vmem:[#allocation2 + $0x7f8] sm:$0x3]
    %v4455 = vmax.f32 %v4439, %v4443
    %v4456 = vmax.f32 %v4441, %v4445
    %v4457 = vmax.f32 %v4455, %v4447
    %v4458 = vmax.f32 %v4456, %v4449
    %v4459 = vmax.f32 %v4457, %v4451
    %v4460 = vsel %vm1947, %v4453, -inf
    %v4461 = vmax.f32 %v4458, %v4460
    %v4462 = vmax.f32 %v4459, %v4461
    %v4463 = vrot.slane %v4462, 4
    %v4464 = vmax.f32 %v4462, %v4463
    %v4465 = vrot.slane %v4464, 2
    %v4466 = vmax.f32 %v4464, %v4465
    %v4467 = vrot.slane %v4466, 1
    %v4468 = vmax.f32 %v4466, %v4467
    %v4469 = vmax.f32 %v4440, %v4444
    %v4470 = vmax.f32 %v4442, %v4446
    %v4471 = vmax.f32 %v4469, %v4448
    %v4472 = vmax.f32 %v4470, %v4450
    %v4473 = vmax.f32 %v4471, %v4452
    %v4474 = vsel %vm1947, %v4454, -inf
    %v4475 = vmax.f32 %v4472, %v4474
    %v4476 = vmax.f32 %v4473, %v4475
    %v4477 = vrot.slane %v4476, 4
    %v4478 = vmax.f32 %v4476, %v4477
    %v4479 = vrot.slane %v4478, 2
    %v4480 = vmax.f32 %v4478, %v4479
    %v4481 = vrot.slane %v4480, 1
    %v4482 = vmax.f32 %v4480, %v4481
    %v4483 = vld [vmem:[#allocation2 + $0x800] sm:$0xff]
    %v4484 = vld [vmem:[#allocation2 + $0x808] sm:$0xff]
    %v4485 = vld [vmem:[#allocation2 + $0x810] sm:$0xff]
    %v4486 = vld [vmem:[#allocation2 + $0x818] sm:$0xff]
    %v4487 = vld [vmem:[#allocation2 + $0x820] sm:$0xff]
    %v4488 = vld [vmem:[#allocation2 + $0x828] sm:$0xff]
    %v4489 = vld [vmem:[#allocation2 + $0x830] sm:$0xff]
    %v4490 = vld [vmem:[#allocation2 + $0x838] sm:$0xff]
    %v4491 = vld [vmem:[#allocation2 + $0x840] sm:$0xff]
    %v4492 = vld [vmem:[#allocation2 + $0x848] sm:$0xff]
    %v4493 = vld [vmem:[#allocation2 + $0x850] sm:$0xff]
    %v4494 = vld [vmem:[#allocation2 + $0x858] sm:$0xff]
    %v4495 = vld [vmem:[#allocation2 + $0x860] sm:$0xff]
    %v4496 = vld [vmem:[#allocation2 + $0x868] sm:$0xff]
    %v4497 = vld [vmem:[#allocation2 + $0x870] sm:$0x3]
    %v4498 = vld [vmem:[#allocation2 + $0x878] sm:$0x3]
    %v4499 = vmax.f32 %v4483, %v4487
    %v4500 = vmax.f32 %v4485, %v4489
    %v4501 = vmax.f32 %v4499, %v4491
    %v4502 = vmax.f32 %v4500, %v4493
    %v4503 = vmax.f32 %v4501, %v4495
    %v4504 = vsel %vm1947, %v4497, -inf
    %v4505 = vmax.f32 %v4502, %v4504
    %v4506 = vmax.f32 %v4503, %v4505
    %v4507 = vrot.slane %v4506, 4
    %v4508 = vmax.f32 %v4506, %v4507
    %v4509 = vrot.slane %v4508, 2
    %v4510 = vmax.f32 %v4508, %v4509
    %v4511 = vrot.slane %v4510, 1
    %v4512 = vmax.f32 %v4510, %v4511
    %v4513 = vmax.f32 %v4484, %v4488
    %v4514 = vmax.f32 %v4486, %v4490
    %v4515 = vmax.f32 %v4513, %v4492
    %v4516 = vmax.f32 %v4514, %v4494
    %v4517 = vmax.f32 %v4515, %v4496
    %v4518 = vsel %vm1947, %v4498, -inf
    %v4519 = vmax.f32 %v4516, %v4518
    %v4520 = vmax.f32 %v4517, %v4519
    %v4521 = vrot.slane %v4520, 4
    %v4522 = vmax.f32 %v4520, %v4521
    %v4523 = vrot.slane %v4522, 2
    %v4524 = vmax.f32 %v4522, %v4523
    %v4525 = vrot.slane %v4524, 1
    %v4526 = vmax.f32 %v4524, %v4525
    %v4527 = vld [vmem:[#allocation2 + $0x880] sm:$0xff]
    %v4528 = vld [vmem:[#allocation2 + $0x888] sm:$0xff]
    %v4529 = vld [vmem:[#allocation2 + $0x890] sm:$0xff]
    %v4530 = vld [vmem:[#allocation2 + $0x898] sm:$0xff]
    %v4531 = vld [vmem:[#allocation2 + $0x8a0] sm:$0xff]
    %v4532 = vld [vmem:[#allocation2 + $0x8a8] sm:$0xff]
    %v4533 = vld [vmem:[#allocation2 + $0x8b0] sm:$0xff]
    %v4534 = vld [vmem:[#allocation2 + $0x8b8] sm:$0xff]
    %v4535 = vld [vmem:[#allocation2 + $0x8c0] sm:$0xff]
    %v4536 = vld [vmem:[#allocation2 + $0x8c8] sm:$0xff]
    %v4537 = vld [vmem:[#allocation2 + $0x8d0] sm:$0xff]
    %v4538 = vld [vmem:[#allocation2 + $0x8d8] sm:$0xff]
    %v4539 = vld [vmem:[#allocation2 + $0x8e0] sm:$0xff]
    %v4540 = vld [vmem:[#allocation2 + $0x8e8] sm:$0xff]
    %v4541 = vld [vmem:[#allocation2 + $0x8f0] sm:$0x3]
    %v4542 = vld [vmem:[#allocation2 + $0x8f8] sm:$0x3]
    %v4543 = vmax.f32 %v4527, %v4531
    %v4544 = vmax.f32 %v4529, %v4533
    %v4545 = vmax.f32 %v4543, %v4535
    %v4546 = vmax.f32 %v4544, %v4537
    %v4547 = vmax.f32 %v4545, %v4539
    %v4548 = vsel %vm1947, %v4541, -inf
    %v4549 = vmax.f32 %v4546, %v4548
    %v4550 = vmax.f32 %v4547, %v4549
    %v4551 = vrot.slane %v4550, 4
    %v4552 = vmax.f32 %v4550, %v4551
    %v4553 = vrot.slane %v4552, 2
    %v4554 = vmax.f32 %v4552, %v4553
    %v4555 = vrot.slane %v4554, 1
    %v4556 = vmax.f32 %v4554, %v4555
    %v4557 = vmax.f32 %v4528, %v4532
    %v4558 = vmax.f32 %v4530, %v4534
    %v4559 = vmax.f32 %v4557, %v4536
    %v4560 = vmax.f32 %v4558, %v4538
    %v4561 = vmax.f32 %v4559, %v4540
    %v4562 = vsel %vm1947, %v4542, -inf
    %v4563 = vmax.f32 %v4560, %v4562
    %v4564 = vmax.f32 %v4561, %v4563
    %v4565 = vrot.slane %v4564, 4
    %v4566 = vmax.f32 %v4564, %v4565
    %v4567 = vrot.slane %v4566, 2
    %v4568 = vmax.f32 %v4566, %v4567
    %v4569 = vrot.slane %v4568, 1
    %v4570 = vmax.f32 %v4568, %v4569
    %v4571 = vld [vmem:[#allocation2 + $0x900] sm:$0xff]
    %v4572 = vld [vmem:[#allocation2 + $0x908] sm:$0xff]
    %v4573 = vld [vmem:[#allocation2 + $0x910] sm:$0xff]
    %v4574 = vld [vmem:[#allocation2 + $0x918] sm:$0xff]
    %v4575 = vld [vmem:[#allocation2 + $0x920] sm:$0xff]
    %v4576 = vld [vmem:[#allocation2 + $0x928] sm:$0xff]
    %v4577 = vld [vmem:[#allocation2 + $0x930] sm:$0xff]
    %v4578 = vld [vmem:[#allocation2 + $0x938] sm:$0xff]
    %v4579 = vld [vmem:[#allocation2 + $0x940] sm:$0xff]
    %v4580 = vld [vmem:[#allocation2 + $0x948] sm:$0xff]
    %v4581 = vld [vmem:[#allocation2 + $0x950] sm:$0xff]
    %v4582 = vld [vmem:[#allocation2 + $0x958] sm:$0xff]
    %v4583 = vld [vmem:[#allocation2 + $0x960] sm:$0xff]
    %v4584 = vld [vmem:[#allocation2 + $0x968] sm:$0xff]
    %v4585 = vld [vmem:[#allocation2 + $0x970] sm:$0x3]
    %v4586 = vld [vmem:[#allocation2 + $0x978] sm:$0x3]
    %v4587 = vmax.f32 %v4571, %v4575
    %v4588 = vmax.f32 %v4573, %v4577
    %v4589 = vmax.f32 %v4587, %v4579
    %v4590 = vmax.f32 %v4588, %v4581
    %v4591 = vmax.f32 %v4589, %v4583
    %v4592 = vsel %vm1947, %v4585, -inf
    %v4593 = vmax.f32 %v4590, %v4592
    %v4594 = vmax.f32 %v4591, %v4593
    %v4595 = vrot.slane %v4594, 4
    %v4596 = vmax.f32 %v4594, %v4595
    %v4597 = vrot.slane %v4596, 2
    %v4598 = vmax.f32 %v4596, %v4597
    %v4599 = vrot.slane %v4598, 1
    %v4600 = vmax.f32 %v4598, %v4599
    %v4601 = vmax.f32 %v4572, %v4576
    %v4602 = vmax.f32 %v4574, %v4578
    %v4603 = vmax.f32 %v4601, %v4580
    %v4604 = vmax.f32 %v4602, %v4582
    %v4605 = vmax.f32 %v4603, %v4584
    %v4606 = vsel %vm1947, %v4586, -inf
    %v4607 = vmax.f32 %v4604, %v4606
    %v4608 = vmax.f32 %v4605, %v4607
    %v4609 = vrot.slane %v4608, 4
    %v4610 = vmax.f32 %v4608, %v4609
    %v4611 = vrot.slane %v4610, 2
    %v4612 = vmax.f32 %v4610, %v4611
    %v4613 = vrot.slane %v4612, 1
    %v4614 = vmax.f32 %v4612, %v4613
    %v4615 = vld [vmem:[#allocation2 + $0x980] sm:$0xff]
    %v4616 = vld [vmem:[#allocation2 + $0x988] sm:$0xff]
    %v4617 = vld [vmem:[#allocation2 + $0x990] sm:$0xff]
    %v4618 = vld [vmem:[#allocation2 + $0x998] sm:$0xff]
    %v4619 = vld [vmem:[#allocation2 + $0x9a0] sm:$0xff]
    %v4620 = vld [vmem:[#allocation2 + $0x9a8] sm:$0xff]
    %v4621 = vld [vmem:[#allocation2 + $0x9b0] sm:$0xff]
    %v4622 = vld [vmem:[#allocation2 + $0x9b8] sm:$0xff]
    %v4623 = vld [vmem:[#allocation2 + $0x9c0] sm:$0xff]
    %v4624 = vld [vmem:[#allocation2 + $0x9c8] sm:$0xff]
    %v4625 = vld [vmem:[#allocation2 + $0x9d0] sm:$0xff]
    %v4626 = vld [vmem:[#allocation2 + $0x9d8] sm:$0xff]
    %v4627 = vld [vmem:[#allocation2 + $0x9e0] sm:$0xff]
    %v4628 = vld [vmem:[#allocation2 + $0x9e8] sm:$0xff]
    %v4629 = vld [vmem:[#allocation2 + $0x9f0] sm:$0x3]
    %v4630 = vld [vmem:[#allocation2 + $0x9f8] sm:$0x3]
    %v4631 = vmax.f32 %v4615, %v4619
    %v4632 = vmax.f32 %v4617, %v4621
    %v4633 = vmax.f32 %v4631, %v4623
    %v4634 = vmax.f32 %v4632, %v4625
    %v4635 = vmax.f32 %v4633, %v4627
    %v4636 = vsel %vm1947, %v4629, -inf
    %v4637 = vmax.f32 %v4634, %v4636
    %v4638 = vmax.f32 %v4635, %v4637
    %v4639 = vrot.slane %v4638, 4
    %v4640 = vmax.f32 %v4638, %v4639
    %v4641 = vrot.slane %v4640, 2
    %v4642 = vmax.f32 %v4640, %v4641
    %v4643 = vrot.slane %v4642, 1
    %v4644 = vmax.f32 %v4642, %v4643
    %v4645 = vmax.f32 %v4616, %v4620
    %v4646 = vmax.f32 %v4618, %v4622
    %v4647 = vmax.f32 %v4645, %v4624
    %v4648 = vmax.f32 %v4646, %v4626
    %v4649 = vmax.f32 %v4647, %v4628
    %v4650 = vsel %vm1947, %v4630, -inf
    %v4651 = vmax.f32 %v4648, %v4650
    %v4652 = vmax.f32 %v4649, %v4651
    %v4653 = vrot.slane %v4652, 4
    %v4654 = vmax.f32 %v4652, %v4653
    %v4655 = vrot.slane %v4654, 2
    %v4656 = vmax.f32 %v4654, %v4655
    %v4657 = vrot.slane %v4656, 1
    %v4658 = vmax.f32 %v4656, %v4657
    %v4659 = vld [vmem:[#allocation2 + $0xa00] sm:$0xff]
    %v4660 = vld [vmem:[#allocation2 + $0xa08] sm:$0xff]
    %v4661 = vld [vmem:[#allocation2 + $0xa10] sm:$0xff]
    %v4662 = vld [vmem:[#allocation2 + $0xa18] sm:$0xff]
    %v4663 = vld [vmem:[#allocation2 + $0xa20] sm:$0xff]
    %v4664 = vld [vmem:[#allocation2 + $0xa28] sm:$0xff]
    %v4665 = vld [vmem:[#allocation2 + $0xa30] sm:$0xff]
    %v4666 = vld [vmem:[#allocation2 + $0xa38] sm:$0xff]
    %v4667 = vld [vmem:[#allocation2 + $0xa40] sm:$0xff]
    %v4668 = vld [vmem:[#allocation2 + $0xa48] sm:$0xff]
    %v4669 = vld [vmem:[#allocation2 + $0xa50] sm:$0xff]
    %v4670 = vld [vmem:[#allocation2 + $0xa58] sm:$0xff]
    %v4671 = vld [vmem:[#allocation2 + $0xa60] sm:$0xff]
    %v4672 = vld [vmem:[#allocation2 + $0xa68] sm:$0xff]
    %v4673 = vld [vmem:[#allocation2 + $0xa70] sm:$0x3]
    %v4674 = vld [vmem:[#allocation2 + $0xa78] sm:$0x3]
    %v4675 = vmax.f32 %v4659, %v4663
    %v4676 = vmax.f32 %v4661, %v4665
    %v4677 = vmax.f32 %v4675, %v4667
    %v4678 = vmax.f32 %v4676, %v4669
    %v4679 = vmax.f32 %v4677, %v4671
    %v4680 = vsel %vm1947, %v4673, -inf
    %v4681 = vmax.f32 %v4678, %v4680
    %v4682 = vmax.f32 %v4679, %v4681
    %v4683 = vrot.slane %v4682, 4
    %v4684 = vmax.f32 %v4682, %v4683
    %v4685 = vrot.slane %v4684, 2
    %v4686 = vmax.f32 %v4684, %v4685
    %v4687 = vrot.slane %v4686, 1
    %v4688 = vmax.f32 %v4686, %v4687
    %v4689 = vmax.f32 %v4660, %v4664
    %v4690 = vmax.f32 %v4662, %v4666
    %v4691 = vmax.f32 %v4689, %v4668
    %v4692 = vmax.f32 %v4690, %v4670
    %v4693 = vmax.f32 %v4691, %v4672
    %v4694 = vsel %vm1947, %v4674, -inf
    %v4695 = vmax.f32 %v4692, %v4694
    %v4696 = vmax.f32 %v4693, %v4695
    %v4697 = vrot.slane %v4696, 4
    %v4698 = vmax.f32 %v4696, %v4697
    %v4699 = vrot.slane %v4698, 2
    %v4700 = vmax.f32 %v4698, %v4699
    %v4701 = vrot.slane %v4700, 1
    %v4702 = vmax.f32 %v4700, %v4701
    %v4703 = vld [vmem:[#allocation2 + $0xa80] sm:$0xff]
    %v4704 = vld [vmem:[#allocation2 + $0xa88] sm:$0xff]
    %v4705 = vld [vmem:[#allocation2 + $0xa90] sm:$0xff]
    %v4706 = vld [vmem:[#allocation2 + $0xa98] sm:$0xff]
    %v4707 = vld [vmem:[#allocation2 + $0xaa0] sm:$0xff]
    %v4708 = vld [vmem:[#allocation2 + $0xaa8] sm:$0xff]
    %v4709 = vld [vmem:[#allocation2 + $0xab0] sm:$0xff]
    %v4710 = vld [vmem:[#allocation2 + $0xab8] sm:$0xff]
    %v4711 = vld [vmem:[#allocation2 + $0xac0] sm:$0xff]
    %v4712 = vld [vmem:[#allocation2 + $0xac8] sm:$0xff]
    %v4713 = vld [vmem:[#allocation2 + $0xad0] sm:$0xff]
    %v4714 = vld [vmem:[#allocation2 + $0xad8] sm:$0xff]
    %v4715 = vld [vmem:[#allocation2 + $0xae0] sm:$0xff]
    %v4716 = vld [vmem:[#allocation2 + $0xae8] sm:$0xff]
    %v4717 = vld [vmem:[#allocation2 + $0xaf0] sm:$0x3]
    %v4718 = vld [vmem:[#allocation2 + $0xaf8] sm:$0x3]
    %v4719 = vmax.f32 %v4703, %v4707
    %v4720 = vmax.f32 %v4705, %v4709
    %v4721 = vmax.f32 %v4719, %v4711
    %v4722 = vmax.f32 %v4720, %v4713
    %v4723 = vmax.f32 %v4721, %v4715
    %v4724 = vsel %vm1947, %v4717, -inf
    %v4725 = vmax.f32 %v4722, %v4724
    %v4726 = vmax.f32 %v4723, %v4725
    %v4727 = vrot.slane %v4726, 4
    %v4728 = vmax.f32 %v4726, %v4727
    %v4729 = vrot.slane %v4728, 2
    %v4730 = vmax.f32 %v4728, %v4729
    %v4731 = vrot.slane %v4730, 1
    %v4732 = vmax.f32 %v4730, %v4731
    %v4733 = vmax.f32 %v4704, %v4708
    %v4734 = vmax.f32 %v4706, %v4710
    %v4735 = vmax.f32 %v4733, %v4712
    %v4736 = vmax.f32 %v4734, %v4714
    %v4737 = vmax.f32 %v4735, %v4716
    %v4738 = vsel %vm1947, %v4718, -inf
    %v4739 = vmax.f32 %v4736, %v4738
    %v4740 = vmax.f32 %v4737, %v4739
    %v4741 = vrot.slane %v4740, 4
    %v4742 = vmax.f32 %v4740, %v4741
    %v4743 = vrot.slane %v4742, 2
    %v4744 = vmax.f32 %v4742, %v4743
    %v4745 = vrot.slane %v4744, 1
    %v4746 = vmax.f32 %v4744, %v4745
    %v4747 = vld [vmem:[#allocation2 + $0xb00] sm:$0xff]
    %v4748 = vld [vmem:[#allocation2 + $0xb08] sm:$0xff]
    %v4749 = vld [vmem:[#allocation2 + $0xb10] sm:$0xff]
    %v4750 = vld [vmem:[#allocation2 + $0xb18] sm:$0xff]
    %v4751 = vld [vmem:[#allocation2 + $0xb20] sm:$0xff]
    %v4752 = vld [vmem:[#allocation2 + $0xb28] sm:$0xff]
    %v4753 = vld [vmem:[#allocation2 + $0xb30] sm:$0xff]
    %v4754 = vld [vmem:[#allocation2 + $0xb38] sm:$0xff]
    %v4755 = vld [vmem:[#allocation2 + $0xb40] sm:$0xff]
    %v4756 = vld [vmem:[#allocation2 + $0xb48] sm:$0xff]
    %v4757 = vld [vmem:[#allocation2 + $0xb50] sm:$0xff]
    %v4758 = vld [vmem:[#allocation2 + $0xb58] sm:$0xff]
    %v4759 = vld [vmem:[#allocation2 + $0xb60] sm:$0xff]
    %v4760 = vld [vmem:[#allocation2 + $0xb68] sm:$0xff]
    %v4761 = vld [vmem:[#allocation2 + $0xb70] sm:$0x3]
    %v4762 = vld [vmem:[#allocation2 + $0xb78] sm:$0x3]
    %v4763 = vmax.f32 %v4747, %v4751
    %v4764 = vmax.f32 %v4749, %v4753
    %v4765 = vmax.f32 %v4763, %v4755
    %v4766 = vmax.f32 %v4764, %v4757
    %v4767 = vmax.f32 %v4765, %v4759
    %v4768 = vsel %vm1947, %v4761, -inf
    %v4769 = vmax.f32 %v4766, %v4768
    %v4770 = vmax.f32 %v4767, %v4769
    %v4771 = vrot.slane %v4770, 4
    %v4772 = vmax.f32 %v4770, %v4771
    %v4773 = vrot.slane %v4772, 2
    %v4774 = vmax.f32 %v4772, %v4773
    %v4775 = vrot.slane %v4774, 1
    %v4776 = vmax.f32 %v4774, %v4775
    %v4777 = vmax.f32 %v4748, %v4752
    %v4778 = vmax.f32 %v4750, %v4754
    %v4779 = vmax.f32 %v4777, %v4756
    %v4780 = vmax.f32 %v4778, %v4758
    %v4781 = vmax.f32 %v4779, %v4760
    %v4782 = vsel %vm1947, %v4762, -inf
    %v4783 = vmax.f32 %v4780, %v4782
    %v4784 = vmax.f32 %v4781, %v4783
    %v4785 = vrot.slane %v4784, 4
    %v4786 = vmax.f32 %v4784, %v4785
    %v4787 = vrot.slane %v4786, 2
    %v4788 = vmax.f32 %v4786, %v4787
    %v4789 = vrot.slane %v4788, 1
    %v4790 = vmax.f32 %v4788, %v4789
    %v4791 = vld [vmem:[#allocation2 + $0xb80] sm:$0xff]
    %v4792 = vld [vmem:[#allocation2 + $0xb88] sm:$0xff]
    %v4793 = vld [vmem:[#allocation2 + $0xb90] sm:$0xff]
    %v4794 = vld [vmem:[#allocation2 + $0xb98] sm:$0xff]
    %v4795 = vld [vmem:[#allocation2 + $0xba0] sm:$0xff]
    %v4796 = vld [vmem:[#allocation2 + $0xba8] sm:$0xff]
    %v4797 = vld [vmem:[#allocation2 + $0xbb0] sm:$0xff]
    %v4798 = vld [vmem:[#allocation2 + $0xbb8] sm:$0xff]
    %v4799 = vld [vmem:[#allocation2 + $0xbc0] sm:$0xff]
    %v4800 = vld [vmem:[#allocation2 + $0xbc8] sm:$0xff]
    %v4801 = vld [vmem:[#allocation2 + $0xbd0] sm:$0xff]
    %v4802 = vld [vmem:[#allocation2 + $0xbd8] sm:$0xff]
    %v4803 = vld [vmem:[#allocation2 + $0xbe0] sm:$0xff]
    %v4804 = vld [vmem:[#allocation2 + $0xbe8] sm:$0xff]
    %v4805 = vld [vmem:[#allocation2 + $0xbf0] sm:$0x3]
    %v4806 = vld [vmem:[#allocation2 + $0xbf8] sm:$0x3]
    %v4807 = vmax.f32 %v4791, %v4795
    %v4808 = vmax.f32 %v4793, %v4797
    %v4809 = vmax.f32 %v4807, %v4799
    %v4810 = vmax.f32 %v4808, %v4801
    %v4811 = vmax.f32 %v4809, %v4803
    %v4812 = vsel %vm1947, %v4805, -inf
    %v4813 = vmax.f32 %v4810, %v4812
    %v4814 = vmax.f32 %v4811, %v4813
    %v4815 = vrot.slane %v4814, 4
    %v4816 = vmax.f32 %v4814, %v4815
    %v4817 = vrot.slane %v4816, 2
    %v4818 = vmax.f32 %v4816, %v4817
    %v4819 = vrot.slane %v4818, 1
    %v4820 = vmax.f32 %v4818, %v4819
    %v4821 = vmax.f32 %v4792, %v4796
    %v4822 = vmax.f32 %v4794, %v4798
    %v4823 = vmax.f32 %v4821, %v4800
    %v4824 = vmax.f32 %v4822, %v4802
    %v4825 = vmax.f32 %v4823, %v4804
    %v4826 = vsel %vm1947, %v4806, -inf
    %v4827 = vmax.f32 %v4824, %v4826
    %v4828 = vmax.f32 %v4825, %v4827
    %v4829 = vrot.slane %v4828, 4
    %v4830 = vmax.f32 %v4828, %v4829
    %v4831 = vrot.slane %v4830, 2
    %v4832 = vmax.f32 %v4830, %v4831
    %v4833 = vrot.slane %v4832, 1
    %v4834 = vmax.f32 %v4832, %v4833
    %v4835 = vld [vmem:[#allocation2 + $0xc00] sm:$0xff]
    %v4836 = vld [vmem:[#allocation2 + $0xc08] sm:$0xff]
    %v4837 = vld [vmem:[#allocation2 + $0xc10] sm:$0xff]
    %v4838 = vld [vmem:[#allocation2 + $0xc18] sm:$0xff]
    %v4839 = vld [vmem:[#allocation2 + $0xc20] sm:$0xff]
    %v4840 = vld [vmem:[#allocation2 + $0xc28] sm:$0xff]
    %v4841 = vld [vmem:[#allocation2 + $0xc30] sm:$0xff]
    %v4842 = vld [vmem:[#allocation2 + $0xc38] sm:$0xff]
    %v4843 = vld [vmem:[#allocation2 + $0xc40] sm:$0xff]
    %v4844 = vld [vmem:[#allocation2 + $0xc48] sm:$0xff]
    %v4845 = vld [vmem:[#allocation2 + $0xc50] sm:$0xff]
    %v4846 = vld [vmem:[#allocation2 + $0xc58] sm:$0xff]
    %v4847 = vld [vmem:[#allocation2 + $0xc60] sm:$0xff]
    %v4848 = vld [vmem:[#allocation2 + $0xc68] sm:$0xff]
    %v4849 = vld [vmem:[#allocation2 + $0xc70] sm:$0x3]
    %v4850 = vld [vmem:[#allocation2 + $0xc78] sm:$0x3]
    %v4851 = vmax.f32 %v4835, %v4839
    %v4852 = vmax.f32 %v4837, %v4841
    %v4853 = vmax.f32 %v4851, %v4843
    %v4854 = vmax.f32 %v4852, %v4845
    %v4855 = vmax.f32 %v4853, %v4847
    %v4856 = vsel %vm1947, %v4849, -inf
    %v4857 = vmax.f32 %v4854, %v4856
    %v4858 = vmax.f32 %v4855, %v4857
    %v4859 = vrot.slane %v4858, 4
    %v4860 = vmax.f32 %v4858, %v4859
    %v4861 = vrot.slane %v4860, 2
    %v4862 = vmax.f32 %v4860, %v4861
    %v4863 = vrot.slane %v4862, 1
    %v4864 = vmax.f32 %v4862, %v4863
    %v4865 = vmax.f32 %v4836, %v4840
    %v4866 = vmax.f32 %v4838, %v4842
    %v4867 = vmax.f32 %v4865, %v4844
    %v4868 = vmax.f32 %v4866, %v4846
    %v4869 = vmax.f32 %v4867, %v4848
    %v4870 = vsel %vm1947, %v4850, -inf
    %v4871 = vmax.f32 %v4868, %v4870
    %v4872 = vmax.f32 %v4869, %v4871
    %v4873 = vrot.slane %v4872, 4
    %v4874 = vmax.f32 %v4872, %v4873
    %v4875 = vrot.slane %v4874, 2
    %v4876 = vmax.f32 %v4874, %v4875
    %v4877 = vrot.slane %v4876, 1
    %v4878 = vmax.f32 %v4876, %v4877
    %v4879 = vld [vmem:[#allocation2 + $0xc80] sm:$0xff]
    %v4880 = vld [vmem:[#allocation2 + $0xc88] sm:$0xff]
    %v4881 = vld [vmem:[#allocation2 + $0xc90] sm:$0xff]
    %v4882 = vld [vmem:[#allocation2 + $0xc98] sm:$0xff]
    %v4883 = vld [vmem:[#allocation2 + $0xca0] sm:$0xff]
    %v4884 = vld [vmem:[#allocation2 + $0xca8] sm:$0xff]
    %v4885 = vld [vmem:[#allocation2 + $0xcb0] sm:$0xff]
    %v4886 = vld [vmem:[#allocation2 + $0xcb8] sm:$0xff]
    %v4887 = vld [vmem:[#allocation2 + $0xcc0] sm:$0xff]
    %v4888 = vld [vmem:[#allocation2 + $0xcc8] sm:$0xff]
    %v4889 = vld [vmem:[#allocation2 + $0xcd0] sm:$0xff]
    %v4890 = vld [vmem:[#allocation2 + $0xcd8] sm:$0xff]
    %v4891 = vld [vmem:[#allocation2 + $0xce0] sm:$0xff]
    %v4892 = vld [vmem:[#allocation2 + $0xce8] sm:$0xff]
    %v4893 = vld [vmem:[#allocation2 + $0xcf0] sm:$0x3]
    %v4894 = vld [vmem:[#allocation2 + $0xcf8] sm:$0x3]
    %v4895 = vmax.f32 %v4879, %v4883
    %v4896 = vmax.f32 %v4881, %v4885
    %v4897 = vmax.f32 %v4895, %v4887
    %v4898 = vmax.f32 %v4896, %v4889
    %v4899 = vmax.f32 %v4897, %v4891
    %v4900 = vsel %vm1947, %v4893, -inf
    %v4901 = vmax.f32 %v4898, %v4900
    %v4902 = vmax.f32 %v4899, %v4901
    %v4903 = vrot.slane %v4902, 4
    %v4904 = vmax.f32 %v4902, %v4903
    %v4905 = vrot.slane %v4904, 2
    %v4906 = vmax.f32 %v4904, %v4905
    %v4907 = vrot.slane %v4906, 1
    %v4908 = vmax.f32 %v4906, %v4907
    %v4909 = vmax.f32 %v4880, %v4884
    %v4910 = vmax.f32 %v4882, %v4886
    %v4911 = vmax.f32 %v4909, %v4888
    %v4912 = vmax.f32 %v4910, %v4890
    %v4913 = vmax.f32 %v4911, %v4892
    %v4914 = vsel %vm1947, %v4894, -inf
    %v4915 = vmax.f32 %v4912, %v4914
    %v4916 = vmax.f32 %v4913, %v4915
    %v4917 = vrot.slane %v4916, 4
    %v4918 = vmax.f32 %v4916, %v4917
    %v4919 = vrot.slane %v4918, 2
    %v4920 = vmax.f32 %v4918, %v4919
    %v4921 = vrot.slane %v4920, 1
    %v4922 = vmax.f32 %v4920, %v4921
    %v4923 = vld [vmem:[#allocation2 + $0xd00] sm:$0xff]
    %v4924 = vld [vmem:[#allocation2 + $0xd08] sm:$0xff]
    %v4925 = vld [vmem:[#allocation2 + $0xd10] sm:$0xff]
    %v4926 = vld [vmem:[#allocation2 + $0xd18] sm:$0xff]
    %v4927 = vld [vmem:[#allocation2 + $0xd20] sm:$0xff]
    %v4928 = vld [vmem:[#allocation2 + $0xd28] sm:$0xff]
    %v4929 = vld [vmem:[#allocation2 + $0xd30] sm:$0xff]
    %v4930 = vld [vmem:[#allocation2 + $0xd38] sm:$0xff]
    %v4931 = vld [vmem:[#allocation2 + $0xd40] sm:$0xff]
    %v4932 = vld [vmem:[#allocation2 + $0xd48] sm:$0xff]
    %v4933 = vld [vmem:[#allocation2 + $0xd50] sm:$0xff]
    %v4934 = vld [vmem:[#allocation2 + $0xd58] sm:$0xff]
    %v4935 = vld [vmem:[#allocation2 + $0xd60] sm:$0xff]
    %v4936 = vld [vmem:[#allocation2 + $0xd68] sm:$0xff]
    %v4937 = vld [vmem:[#allocation2 + $0xd70] sm:$0x3]
    %v4938 = vld [vmem:[#allocation2 + $0xd78] sm:$0x3]
    %v4939 = vmax.f32 %v4923, %v4927
    %v4940 = vmax.f32 %v4925, %v4929
    %v4941 = vmax.f32 %v4939, %v4931
    %v4942 = vmax.f32 %v4940, %v4933
    %v4943 = vmax.f32 %v4941, %v4935
    %v4944 = vsel %vm1947, %v4937, -inf
    %v4945 = vmax.f32 %v4942, %v4944
    %v4946 = vmax.f32 %v4943, %v4945
    %v4947 = vrot.slane %v4946, 4
    %v4948 = vmax.f32 %v4946, %v4947
    %v4949 = vrot.slane %v4948, 2
    %v4950 = vmax.f32 %v4948, %v4949
    %v4951 = vrot.slane %v4950, 1
    %v4952 = vmax.f32 %v4950, %v4951
    %v4953 = vmax.f32 %v4924, %v4928
    %v4954 = vmax.f32 %v4926, %v4930
    %v4955 = vmax.f32 %v4953, %v4932
    %v4956 = vmax.f32 %v4954, %v4934
    %v4957 = vmax.f32 %v4955, %v4936
    %v4958 = vsel %vm1947, %v4938, -inf
    %v4959 = vmax.f32 %v4956, %v4958
    %v4960 = vmax.f32 %v4957, %v4959
    %v4961 = vrot.slane %v4960, 4
    %v4962 = vmax.f32 %v4960, %v4961
    %v4963 = vrot.slane %v4962, 2
    %v4964 = vmax.f32 %v4962, %v4963
    %v4965 = vrot.slane %v4964, 1
    %v4966 = vmax.f32 %v4964, %v4965
    %v4967 = vld [vmem:[#allocation2 + $0xd80] sm:$0xff]
    %v4968 = vld [vmem:[#allocation2 + $0xd88] sm:$0xff]
    %v4969 = vld [vmem:[#allocation2 + $0xd90] sm:$0xff]
    %v4970 = vld [vmem:[#allocation2 + $0xd98] sm:$0xff]
    %v4971 = vld [vmem:[#allocation2 + $0xda0] sm:$0xff]
    %v4972 = vld [vmem:[#allocation2 + $0xda8] sm:$0xff]
    %v4973 = vld [vmem:[#allocation2 + $0xdb0] sm:$0xff]
    %v4974 = vld [vmem:[#allocation2 + $0xdb8] sm:$0xff]
    %v4975 = vld [vmem:[#allocation2 + $0xdc0] sm:$0xff]
    %v4976 = vld [vmem:[#allocation2 + $0xdc8] sm:$0xff]
    %v4977 = vld [vmem:[#allocation2 + $0xdd0] sm:$0xff]
    %v4978 = vld [vmem:[#allocation2 + $0xdd8] sm:$0xff]
    %v4979 = vld [vmem:[#allocation2 + $0xde0] sm:$0xff]
    %v4980 = vld [vmem:[#allocation2 + $0xde8] sm:$0xff]
    %v4981 = vld [vmem:[#allocation2 + $0xdf0] sm:$0x3]
    %v4982 = vld [vmem:[#allocation2 + $0xdf8] sm:$0x3]
    %v4983 = vmax.f32 %v4967, %v4971
    %v4984 = vmax.f32 %v4969, %v4973
    %v4985 = vmax.f32 %v4983, %v4975
    %v4986 = vmax.f32 %v4984, %v4977
    %v4987 = vmax.f32 %v4985, %v4979
    %v4988 = vsel %vm1947, %v4981, -inf
    %v4989 = vmax.f32 %v4986, %v4988
    %v4990 = vmax.f32 %v4987, %v4989
    %v4991 = vrot.slane %v4990, 4
    %v4992 = vmax.f32 %v4990, %v4991
    %v4993 = vrot.slane %v4992, 2
    %v4994 = vmax.f32 %v4992, %v4993
    %v4995 = vrot.slane %v4994, 1
    %v4996 = vmax.f32 %v4994, %v4995
    %v4997 = vmax.f32 %v4968, %v4972
    %v4998 = vmax.f32 %v4970, %v4974
    %v4999 = vmax.f32 %v4997, %v4976
    %v5000 = vmax.f32 %v4998, %v4978
    %v5001 = vmax.f32 %v4999, %v4980
    %v5002 = vsel %vm1947, %v4982, -inf
    %v5003 = vmax.f32 %v5000, %v5002
    %v5004 = vmax.f32 %v5001, %v5003
    %v5005 = vrot.slane %v5004, 4
    %v5006 = vmax.f32 %v5004, %v5005
    %v5007 = vrot.slane %v5006, 2
    %v5008 = vmax.f32 %v5006, %v5007
    %v5009 = vrot.slane %v5008, 1
    %v5010 = vmax.f32 %v5008, %v5009
    %v5011 = vld [vmem:[#allocation2 + $0xe00] sm:$0xff]
    %v5012 = vld [vmem:[#allocation2 + $0xe08] sm:$0xff]
    %v5013 = vld [vmem:[#allocation2 + $0xe10] sm:$0xff]
    %v5014 = vld [vmem:[#allocation2 + $0xe18] sm:$0xff]
    %v5015 = vld [vmem:[#allocation2 + $0xe20] sm:$0xff]
    %v5016 = vld [vmem:[#allocation2 + $0xe28] sm:$0xff]
    %v5017 = vld [vmem:[#allocation2 + $0xe30] sm:$0xff]
    %v5018 = vld [vmem:[#allocation2 + $0xe38] sm:$0xff]
    %v5019 = vld [vmem:[#allocation2 + $0xe40] sm:$0xff]
    %v5020 = vld [vmem:[#allocation2 + $0xe48] sm:$0xff]
    %v5021 = vld [vmem:[#allocation2 + $0xe50] sm:$0xff]
    %v5022 = vld [vmem:[#allocation2 + $0xe58] sm:$0xff]
    %v5023 = vld [vmem:[#allocation2 + $0xe60] sm:$0xff]
    %v5024 = vld [vmem:[#allocation2 + $0xe68] sm:$0xff]
    %v5025 = vld [vmem:[#allocation2 + $0xe70] sm:$0x3]
    %v5026 = vld [vmem:[#allocation2 + $0xe78] sm:$0x3]
    %v5027 = vmax.f32 %v5011, %v5015
    %v5028 = vmax.f32 %v5013, %v5017
    %v5029 = vmax.f32 %v5027, %v5019
    %v5030 = vmax.f32 %v5028, %v5021
    %v5031 = vmax.f32 %v5029, %v5023
    %v5032 = vsel %vm1947, %v5025, -inf
    %v5033 = vmax.f32 %v5030, %v5032
    %v5034 = vmax.f32 %v5031, %v5033
    %v5035 = vrot.slane %v5034, 4
    %v5036 = vmax.f32 %v5034, %v5035
    %v5037 = vrot.slane %v5036, 2
    %v5038 = vmax.f32 %v5036, %v5037
    %v5039 = vrot.slane %v5038, 1
    %v5040 = vmax.f32 %v5038, %v5039
    %v5041 = vmax.f32 %v5012, %v5016
    %v5042 = vmax.f32 %v5014, %v5018
    %v5043 = vmax.f32 %v5041, %v5020
    %v5044 = vmax.f32 %v5042, %v5022
    %v5045 = vmax.f32 %v5043, %v5024
    %v5046 = vsel %vm1947, %v5026, -inf
    %v5047 = vmax.f32 %v5044, %v5046
    %v5048 = vmax.f32 %v5045, %v5047
    %v5049 = vrot.slane %v5048, 4
    %v5050 = vmax.f32 %v5048, %v5049
    %v5051 = vrot.slane %v5050, 2
    %v5052 = vmax.f32 %v5050, %v5051
    %v5053 = vrot.slane %v5052, 1
    %v5054 = vmax.f32 %v5052, %v5053
    %v5055 = vld [vmem:[#allocation2 + $0xe80] sm:$0xff]
    %v5056 = vld [vmem:[#allocation2 + $0xe88] sm:$0xff]
    %v5057 = vld [vmem:[#allocation2 + $0xe90] sm:$0xff]
    %v5058 = vld [vmem:[#allocation2 + $0xe98] sm:$0xff]
    %v5059 = vld [vmem:[#allocation2 + $0xea0] sm:$0xff]
    %v5060 = vld [vmem:[#allocation2 + $0xea8] sm:$0xff]
    %v5061 = vld [vmem:[#allocation2 + $0xeb0] sm:$0xff]
    %v5062 = vld [vmem:[#allocation2 + $0xeb8] sm:$0xff]
    %v5063 = vld [vmem:[#allocation2 + $0xec0] sm:$0xff]
    %v5064 = vld [vmem:[#allocation2 + $0xec8] sm:$0xff]
    %v5065 = vld [vmem:[#allocation2 + $0xed0] sm:$0xff]
    %v5066 = vld [vmem:[#allocation2 + $0xed8] sm:$0xff]
    %v5067 = vld [vmem:[#allocation2 + $0xee0] sm:$0xff]
    %v5068 = vld [vmem:[#allocation2 + $0xee8] sm:$0xff]
    %v5069 = vld [vmem:[#allocation2 + $0xef0] sm:$0x3]
    %v5070 = vld [vmem:[#allocation2 + $0xef8] sm:$0x3]
    %v5071 = vmax.f32 %v5055, %v5059
    %v5072 = vmax.f32 %v5057, %v5061
    %v5073 = vmax.f32 %v5071, %v5063
    %v5074 = vmax.f32 %v5072, %v5065
    %v5075 = vmax.f32 %v5073, %v5067
    %v5076 = vsel %vm1947, %v5069, -inf
    %v5077 = vmax.f32 %v5074, %v5076
    %v5078 = vmax.f32 %v5075, %v5077
    %v5079 = vrot.slane %v5078, 4
    %v5080 = vmax.f32 %v5078, %v5079
    %v5081 = vrot.slane %v5080, 2
    %v5082 = vmax.f32 %v5080, %v5081
    %v5083 = vrot.slane %v5082, 1
    %v5084 = vmax.f32 %v5082, %v5083
    %v5085 = vmax.f32 %v5056, %v5060
    %v5086 = vmax.f32 %v5058, %v5062
    %v5087 = vmax.f32 %v5085, %v5064
    %v5088 = vmax.f32 %v5086, %v5066
    %v5089 = vmax.f32 %v5087, %v5068
    %v5090 = vsel %vm1947, %v5070, -inf
    %v5091 = vmax.f32 %v5088, %v5090
    %v5092 = vmax.f32 %v5089, %v5091
    %v5093 = vrot.slane %v5092, 4
    %v5094 = vmax.f32 %v5092, %v5093
    %v5095 = vrot.slane %v5094, 2
    %v5096 = vmax.f32 %v5094, %v5095
    %v5097 = vrot.slane %v5096, 1
    %v5098 = vmax.f32 %v5096, %v5097
    %v5099 = vld [vmem:[#allocation2 + $0xf00] sm:$0xff]
    %v5100 = vld [vmem:[#allocation2 + $0xf08] sm:$0xff]
    %v5101 = vld [vmem:[#allocation2 + $0xf10] sm:$0xff]
    %v5102 = vld [vmem:[#allocation2 + $0xf18] sm:$0xff]
    %v5103 = vld [vmem:[#allocation2 + $0xf20] sm:$0xff]
    %v5104 = vld [vmem:[#allocation2 + $0xf28] sm:$0xff]
    %v5105 = vld [vmem:[#allocation2 + $0xf30] sm:$0xff]
    %v5106 = vld [vmem:[#allocation2 + $0xf38] sm:$0xff]
    %v5107 = vld [vmem:[#allocation2 + $0xf40] sm:$0xff]
    %v5108 = vld [vmem:[#allocation2 + $0xf48] sm:$0xff]
    %v5109 = vld [vmem:[#allocation2 + $0xf50] sm:$0xff]
    %v5110 = vld [vmem:[#allocation2 + $0xf58] sm:$0xff]
    %v5111 = vld [vmem:[#allocation2 + $0xf60] sm:$0xff]
    %v5112 = vld [vmem:[#allocation2 + $0xf68] sm:$0xff]
    %v5113 = vld [vmem:[#allocation2 + $0xf70] sm:$0x3]
    %v5114 = vld [vmem:[#allocation2 + $0xf78] sm:$0x3]
    %v5115 = vmax.f32 %v5099, %v5103
    %v5116 = vmax.f32 %v5101, %v5105
    %v5117 = vmax.f32 %v5115, %v5107
    %v5118 = vmax.f32 %v5116, %v5109
    %v5119 = vmax.f32 %v5117, %v5111
    %v5120 = vsel %vm1947, %v5113, -inf
    %v5121 = vmax.f32 %v5118, %v5120
    %v5122 = vmax.f32 %v5119, %v5121
    %v5123 = vrot.slane %v5122, 4
    %v5124 = vmax.f32 %v5122, %v5123
    %v5125 = vrot.slane %v5124, 2
    %v5126 = vmax.f32 %v5124, %v5125
    %v5127 = vrot.slane %v5126, 1
    %v5128 = vmax.f32 %v5126, %v5127
    %v5129 = vmax.f32 %v5100, %v5104
    %v5130 = vmax.f32 %v5102, %v5106
    %v5131 = vmax.f32 %v5129, %v5108
    %v5132 = vmax.f32 %v5130, %v5110
    %v5133 = vmax.f32 %v5131, %v5112
    %v5134 = vsel %vm1947, %v5114, -inf
    %v5135 = vmax.f32 %v5132, %v5134
    %v5136 = vmax.f32 %v5133, %v5135
    %v5137 = vrot.slane %v5136, 4
    %v5138 = vmax.f32 %v5136, %v5137
    %v5139 = vrot.slane %v5138, 2
    %v5140 = vmax.f32 %v5138, %v5139
    %v5141 = vrot.slane %v5140, 1
    %v5142 = vmax.f32 %v5140, %v5141
    %v5143 = vld [vmem:[#allocation2 + $0xf80] sm:$0xff]
    %v5144 = vld [vmem:[#allocation2 + $0xf88] sm:$0xff]
    %v5145 = vld [vmem:[#allocation2 + $0xf90] sm:$0xff]
    %v5146 = vld [vmem:[#allocation2 + $0xf98] sm:$0xff]
    %v5147 = vld [vmem:[#allocation2 + $0xfa0] sm:$0xff]
    %v5148 = vld [vmem:[#allocation2 + $0xfa8] sm:$0xff]
    %v5149 = vld [vmem:[#allocation2 + $0xfb0] sm:$0xff]
    %v5150 = vld [vmem:[#allocation2 + $0xfb8] sm:$0xff]
    %v5151 = vld [vmem:[#allocation2 + $0xfc0] sm:$0xff]
    %v5152 = vld [vmem:[#allocation2 + $0xfc8] sm:$0xff]
    %v5153 = vld [vmem:[#allocation2 + $0xfd0] sm:$0xff]
    %v5154 = vld [vmem:[#allocation2 + $0xfd8] sm:$0xff]
    %v5155 = vld [vmem:[#allocation2 + $0xfe0] sm:$0xff]
    %v5156 = vld [vmem:[#allocation2 + $0xfe8] sm:$0xff]
    %v5157 = vld [vmem:[#allocation2 + $0xff0] sm:$0x3]
    %v5158 = vld [vmem:[#allocation2 + $0xff8] sm:$0x3]
    %v5159 = vmax.f32 %v5143, %v5147
    %v5160 = vmax.f32 %v5145, %v5149
    %v5161 = vmax.f32 %v5159, %v5151
    %v5162 = vmax.f32 %v5160, %v5153
    %v5163 = vmax.f32 %v5161, %v5155
    %v5164 = vsel %vm1947, %v5157, -inf
    %v5165 = vmax.f32 %v5162, %v5164
    %v5166 = vmax.f32 %v5163, %v5165
    %v5167 = vrot.slane %v5166, 4
    %v5168 = vmax.f32 %v5166, %v5167
    %v5169 = vrot.slane %v5168, 2
    %v5170 = vmax.f32 %v5168, %v5169
    %v5171 = vrot.slane %v5170, 1
    %v5172 = vmax.f32 %v5170, %v5171
    %v5173 = vmax.f32 %v5144, %v5148
    %v5174 = vmax.f32 %v5146, %v5150
    %v5175 = vmax.f32 %v5173, %v5152
    %v5176 = vmax.f32 %v5174, %v5154
    %v5177 = vmax.f32 %v5175, %v5156
    %v5178 = vsel %vm1947, %v5158, -inf
    %v5179 = vmax.f32 %v5176, %v5178
    %v5180 = vmax.f32 %v5177, %v5179
    %v5181 = vrot.slane %v5180, 4
    %v5182 = vmax.f32 %v5180, %v5181
    %v5183 = vrot.slane %v5182, 2
    %v5184 = vmax.f32 %v5182, %v5183
    %v5185 = vrot.slane %v5184, 1
    %v5186 = vmax.f32 %v5184, %v5185
    %vm5187 = vcmask 1040384
    %v5188 = vsel %vm5187, %v3808, %v3852
    %v5189 = vsel %vm5187, %v3822, %v3866
    %v5190 = vsel %vm1947, %v5188, %v3896
    %v5191 = vsel %vm1947, %v5189, %v3910
    %vm5192 = vcmask 1042432
    %v5193 = vsel %vm5192, %v5190, %v3940
    %v5194 = vsel %vm5192, %v5191, %v3954
    %vm5195 = vcmask 1043456
    %v5196 = vsel %vm5195, %v5193, %v3984
    %v5197 = vsel %vm5195, %v5194, %v3998
    %vm5198 = vcmask 1044480
    %v5199 = vsel %vm5198, %v5196, %v4028
    %v5200 = vsel %vm5198, %v5197, %v4042
    %vm5201 = vcmask 1045504
    %v5202 = vsel %vm5201, %v5199, %v4072
    %v5203 = vsel %vm5201, %v5200, %v4086
    %vm5204 = vcmask 1046528
    %v5205 = vsel %vm5204, %v5202, %v4116
    %v5206 = vsel %vm5204, %v5203, %v4130
    %v5207 = vsel %vm5187, %v4160, %v4204
    %v5208 = vsel %vm5187, %v4174, %v4218
    %v5209 = vsel %vm1947, %v5207, %v4248
    %v5210 = vsel %vm1947, %v5208, %v4262
    %v5211 = vsel %vm5192, %v5209, %v4292
    %v5212 = vsel %vm5192, %v5210, %v4306
    %v5213 = vsel %vm5195, %v5211, %v4336
    %v5214 = vsel %vm5195, %v5212, %v4350
    %v5215 = vsel %vm5198, %v5213, %v4380
    %v5216 = vsel %vm5198, %v5214, %v4394
    %v5217 = vsel %vm5201, %v5215, %v4424
    %v5218 = vsel %vm5201, %v5216, %v4438
    %v5219 = vsel %vm5204, %v5217, %v4468
    %v5220 = vsel %vm5204, %v5218, %v4482
    %v5221 = vsel %vm5187, %v4512, %v4556
    %v5222 = vsel %vm5187, %v4526, %v4570
    %v5223 = vsel %vm1947, %v5221, %v4600
    %v5224 = vsel %vm1947, %v5222, %v4614
    %v5225 = vsel %vm5192, %v5223, %v4644
    %v5226 = vsel %vm5192, %v5224, %v4658
    %v5227 = vsel %vm5195, %v5225, %v4688
    %v5228 = vsel %vm5195, %v5226, %v4702
    %v5229 = vsel %vm5198, %v5227, %v4732
    %v5230 = vsel %vm5198, %v5228, %v4746
    %v5231 = vsel %vm5201, %v5229, %v4776
    %v5232 = vsel %vm5201, %v5230, %v4790
    %v5233 = vsel %vm5204, %v5231, %v4820
    %v5234 = vsel %vm5204, %v5232, %v4834
    %v5235 = vsel %vm5187, %v4864, %v4908
    %v5236 = vsel %vm5187, %v4878, %v4922
    %v5237 = vsel %vm1947, %v5235, %v4952
    %v5238 = vsel %vm1947, %v5236, %v4966
    %v5239 = vsel %vm5192, %v5237, %v4996
    %v5240 = vsel %vm5192, %v5238, %v5010
    %v5241 = vsel %vm5195, %v5239, %v5040
    %v5242 = vsel %vm5195, %v5240, %v5054
    %v5243 = vsel %vm5198, %v5241, %v5084
    %v5244 = vsel %vm5198, %v5242, %v5098
    %v5245 = vsel %vm5201, %v5243, %v5128
    %v5246 = vsel %vm5201, %v5244, %v5142
    %v5247 = vsel %vm5204, %v5245, %v5172
    %v5248 = vsel %vm5204, %v5246, %v5186
    %v5249 = vld [vmem:[%s2] sm:$0x3]
    %v5251 = vlaneseq
    %v5252 = vshrl.u32 %v5251, 7
    %v5253 = vsub.s32 0, %v5252
    %v5254 = vrot.slane %v5249, %v5253
    %v5255 = vlaneseq
    %v5256 = vshrl.u32 %v5255, 7
    %v5257 = vsub.s32 1, %v5256
    %v5258 = vrot.slane %v5249, %v5257
    %v5261 = vadd.f32 %v5205, %v5254
    %v5262 = vadd.f32 %v5206, %v5258
    %v5263 = vadd.f32 %v5219, %v5254
    %v5264 = vadd.f32 %v5220, %v5258
    %v5265 = vadd.f32 %v5233, %v5254
    %v5266 = vadd.f32 %v5234, %v5258
    %v5267 = vadd.f32 %v5247, %v5254
    %v5268 = vadd.f32 %v5248, %v5258
    %v5269 = vmax.f32 %v5261, 0.0
    %v5270 = vmax.f32 %v5262, 0.0
    %v5271 = vmax.f32 %v5263, 0.0
    %v5272 = vmax.f32 %v5264, 0.0
    %v5273 = vmax.f32 %v5265, 0.0
    %v5274 = vmax.f32 %v5266, 0.0
    %v5275 = vmax.f32 %v5267, 0.0
    %v5276 = vmax.f32 %v5268, 0.0
    %5277 = vst [vmem:[#allocation3] sm:$0xff] %v5269
    %5278 = vst [vmem:[#allocation3 + $0x8] sm:$0xff] %v5270
    %5279 = vst [vmem:[#allocation3 + $0x10] sm:$0xff] %v5271
    %5280 = vst [vmem:[#allocation3 + $0x18] sm:$0xff] %v5272
    %5281 = vst [vmem:[#allocation3 + $0x20] sm:$0xff] %v5273
    %5282 = vst [vmem:[#allocation3 + $0x28] sm:$0xff] %v5274
    %5283 = vst [vmem:[#allocation3 + $0x30] sm:$0xff] %v5275
    %5284 = vst [vmem:[#allocation3 + $0x38] sm:$0xff] %v5276
    // Predicated region
    $region14: #{featurize_and_pool.1} parent=1 // pred_check
      _
    $region15: #{featurize_and_pool.1} parent=1 // pred_check_branch
      %5286 = sbr.rel (0) target = $region17
    $region16: #{featurize_and_pool.1} parent=1 // pred_region
      %s5288 = ssub.s32 1024, 1024
      %5289 = vsyncadd [#allocation4], %s5288
      %s5290 = sshll.u32 [#allocation3], 4
      %s5291 = int_to_ptr.vmem [resolvable:$true] %s5290
      %5296 = dma.vmem_to_hbm [thread:$0]  %s5291, 1024, %s3, [#allocation4], 256, 256, 16
    $region17: #{featurize_and_pool.1} parent=1 // pred_fallthru
      _
    // Predicated region
    $region18: #{featurize_and_pool.1} parent=1 // pred_check
      _
    $region19: #{featurize_and_pool.1} parent=1 // pred_check_branch
      %5298 = sbr.rel (0) target = $region21
    $region20: #{featurize_and_pool.1} parent=1 // pred_region
      %5299 = dma.done [#allocation4], 1024
    $region21: #{featurize_and_pool.1} parent=1 // pred_fallthru
      _
    %5300 = vsyncpa [#allocation4], 1

</llo_original>
